<compile_context>
chip_gen: v7x
topology: tpu7x:2x2x1
jax: 0.10.0
libtpu: 0.0.40
codegen_flags: <defaults>
</compile_context>

<pallas_src>
import math

import jax
import jax.numpy as jnp
from jax import lax
from jax.experimental import pallas as pl
from jax.experimental.pallas import tpu as pltpu

# ----------------------------- small config ---------------------------------
B = 2            # batch
S = 8            # sequence length (vitals time steps)
EMR = 5          # emr_size
VITALS = 6       # vitals_size
HIDDEN = 64      # hidden_size == d_model (4096 in the original, scaled down)
NHEAD = 4        # 16 in the original, scaled down
DFF = 64         # dim_feedforward (4096 in the original)
NUM_ENC_LAYERS = 2
NUM_LSTM_LAYERS = 3
NUM_CLASSES = 1
LN_EPS = 1e-5

HEAD_DIM = HIDDEN // NHEAD     # 16
LSTM_HID = HIDDEN // 2         # 32 per direction
HP2 = 2 * LSTM_HID             # 64  = [fw | bw] hidden
GATES = 8 * LSTM_HID           # 256 = 4 gates x 2 dirs x 32
SIGW = 6 * LSTM_HID            # 192 = the 3 sigmoid gates (i, f, o)
XPAD = 16                      # padded feature width for vitals / emr rows


# -------------------------- slab layouts (static) ----------------------------
def _build_layout(entries):
    off, r = {}, 0
    for name, rows in entries:
        off[name] = r
        r += rows
    return off, r


_w_entries = [("emb", XPAD)]
for _l in range(NUM_ENC_LAYERS):
    _w_entries += [(f"enc{_l}_ipw", HIDDEN), (f"enc{_l}_opw", HIDDEN),
                   (f"enc{_l}_w1", HIDDEN), (f"enc{_l}_w2", DFF)]
for _l in range(NUM_LSTM_LAYERS):
    _w_entries += [(f"lstm{_l}_wih", HIDDEN), (f"lstm{_l}_whh", HP2)]
_w_entries += [("fc1_emr", XPAD), ("fc1_h", HIDDEN)]
W_OFF, W_ROWS = _build_layout(_w_entries)          # all offsets multiples of 16
W_COLS = GATES                                     # 256

_p_entries = [("pe", B * S)]
for _l in range(NUM_ENC_LAYERS):
    _p_entries += [(f"enc{_l}_ipb", 1), (f"enc{_l}_opb", 1),
                   (f"enc{_l}_b1", 1), (f"enc{_l}_b2", 1),
                   (f"enc{_l}_ln1w", 1), (f"enc{_l}_ln1b", 1),
                   (f"enc{_l}_ln2w", 1), (f"enc{_l}_ln2b", 1)]
for _l in range(NUM_LSTM_LAYERS):
    _p_entries += [(f"lstm{_l}_b", 1)]
_p_entries += [("gate_mask", 1), ("fc1_b", 1), ("fc2_w", 1), ("fc2_b", 1),
               ("seg", HIDDEN), ("ptm", B * S), ("prev", B * S)]
P_OFF, P_ROWS = _build_layout(_p_entries)
P_COLS = GATES                                     # 256


# ------------------------------ shared math ----------------------------------
def _bdot(a, b):
    """bf16-input, f32-accumulate matmul (native MXU fast path)."""
    return jnp.dot(a.astype(jnp.bfloat16), b.astype(jnp.bfloat16),
                   preferred_element_type=jnp.float32)


def _layernorm(x, g, b):
    mu = jnp.mean(x, axis=-1, keepdims=True)
    xc = x - mu
    var = jnp.mean(xc * xc, axis=-1, keepdims=True)
    return xc * lax.rsqrt(var + LN_EPS) * g + b


def positional_encoding(d_model, max_len=512):
    position = jnp.arange(max_len, dtype=jnp.float32)[:, None]
    div_term = jnp.exp(jnp.arange(0, d_model, 2, dtype=jnp.float32)
                       * (-jnp.log(1000.0) / d_model))
    pe = jnp.zeros((max_len, d_model), jnp.float32)
    pe = pe.at[:, 0::2].set(jnp.sin(position * div_term))
    pe = pe.at[:, 1::2].set(jnp.cos(position * div_term))
    return pe[None]  # (1, max_len, d_model)


# ------------------------------ fused kernel ---------------------------------
def _fused_forward_kernel(xin_ref, w_ref, p_ref, o_ref):
    def W(name, rows, cols):
        r0 = W_OFF[name]
        return w_ref[r0:r0 + rows, 0:cols]

    def P(name, rows, cols):
        r0 = P_OFF[name]
        return p_ref[r0:r0 + rows, 0:cols]

    BS = B * S

    # ---- embedding + positional encoding (emb bias folded into PE rows) -----
    # Row layout: row = b*S + s (batch-major).
    xv = xin_ref[0:BS, :]                       # (16, 16) padded vitals
    emr = xin_ref[BS:BS + B, :]                 # (2, 16)  padded emr
    x = _bdot(xv, W("emb", XPAD, HIDDEN)) + P("pe", BS, HIDDEN)        # (16, 64)

    # ---- transformer encoder (batch_first=False: attends over the B axis) ---
    seg = P("seg", HIDDEN, HIDDEN)              # block-diag per-head ones * 1/sqrt(Dh)
    for l in range(NUM_ENC_LAYERS):
        qkv = (_bdot(x, W(f"enc{l}_ipw", HIDDEN, 3 * HIDDEN))
               + P(f"enc{l}_ipb", 1, 3 * HIDDEN))                      # (16, 192)
        q = qkv[:, 0:HIDDEN]
        k = qkv[:, HIDDEN:2 * HIDDEN]
        v = qkv[:, 2 * HIDDEN:3 * HIDDEN]
        # the "other" batch element's k/v (B == 2): swap the two batch halves
        k_o = pltpu.roll(k, shift=S, axis=0)
        v_o = pltpu.roll(v, shift=S, axis=0)
        # per-head scores for ALL heads at once: elementwise q*k, then one
        # segment-sum matmul broadcasts each head's score over its 16 lanes
        s_s = jnp.dot(q * k, seg, preferred_element_type=jnp.float32)
        s_o = jnp.dot(q * k_o, seg, preferred_element_type=jnp.float32)
        m = jnp.maximum(s_s, s_o)
        e_s = jnp.exp(s_s - m)
        e_o = jnp.exp(s_o - m)
        inv = pl.reciprocal(e_s + e_o, approx=True)
        attn = (e_s * v + e_o * v_o) * inv                             # (16, 64)

        attn = (_bdot(attn, W(f"enc{l}_opw", HIDDEN, HIDDEN))
                + P(f"enc{l}_opb", 1, HIDDEN))
        y = x + attn                      # dropout == identity (inference)
        y = _layernorm(y, P(f"enc{l}_ln1w", 1, HIDDEN), P(f"enc{l}_ln1b", 1, HIDDEN))
        ff = jnp.maximum(_bdot(y, W(f"enc{l}_w1", HIDDEN, DFF))
                         + P(f"enc{l}_b1", 1, DFF), 0.0)
        ff = _bdot(ff, W(f"enc{l}_w2", DFF, HIDDEN)) + P(f"enc{l}_b2", 1, HIDDEN)
        x = _layernorm(y + ff, P(f"enc{l}_ln2w", 1, HIDDEN), P(f"enc{l}_ln2b", 1, HIDDEN))

    # ---- bidirectional 3-layer LSTM (fw/bw fused, time loop in-kernel) ------
    # Switch to time-major rows (row = t*B + b) with one permutation matmul.
    ptm = P("ptm", BS, BS)                      # batch-major -> time-major
    prev = P("prev", BS, BS)                    # time reversal (time-major)
    seq = jnp.dot(ptm, x, preferred_element_type=jnp.float32)          # (16, 64)

    gmask = P("gate_mask", 1, GATES)            # 1 on forward-direction columns
    hmask = gmask[:, 0:HP2]                     # 1 on forward half of hidden
    for l in range(NUM_LSTM_LAYERS):
        wih = W(f"lstm{l}_wih", HIDDEN, GATES)
        whh = W(f"lstm{l}_whh", HP2, GATES)
        # input-gate contribution for all steps / both directions at once
        gx = _bdot(seq, wih) + P(f"lstm{l}_b", 1, GATES)               # (16, 256)
        gxr = jnp.dot(prev, gx, preferred_element_type=jnp.float32)    # time-reversed
        gsel = gmask * gx + (1.0 - gmask) * gxr                        # hoisted selection

        h = jnp.zeros((B, HP2), jnp.float32)    # [h_fw | h_bw]
        c = jnp.zeros((B, HP2), jnp.float32)
        h_steps = []
        for t in range(S):                      # statically unrolled (S = 8)
            g = gsel[t * B:(t + 1) * B, :] + _bdot(h, whh)             # (2, 256)
            sg = jax.nn.sigmoid(g[:, 0:SIGW])   # i, f, o gates in one call
            gg = jnp.tanh(g[:, SIGW:GATES])     # g gate
            i_g = sg[:, 0:HP2]
            f_g = sg[:, HP2:2 * HP2]
            o_g = sg[:, 2 * HP2:SIGW]
            c = f_g * c + i_g * gg
            h = o_g * jnp.tanh(c)
            h_steps.append(h)                   # stays in registers
        hcat = jnp.concatenate(h_steps, axis=0)                        # (16, 64)
        # fw half is already time-aligned; bw half must be time-reversed
        seq = hmask * hcat + (1.0 - hmask) * jnp.dot(
            prev, hcat, preferred_element_type=jnp.float32)

    hs = seq[(S - 1) * B:S * B, :]              # (2, 64) == lstm_out[:, -1, :]

    # ---- head: fc1(cat(emr, hs)) -> (dropout = id) -> fc2 -------------------
    h1 = (_bdot(emr, W("fc1_emr", XPAD, HIDDEN))
          + _bdot(hs, W("fc1_h", HIDDEN, HIDDEN))
          + P("fc1_b", 1, HIDDEN))                                     # (2, 64)
    # fc2 has a single output column -> VPU multiply + lane reduction
    out = jnp.sum(h1 * P("fc2_w", 1, HIDDEN), axis=-1, keepdims=True) \
        + P("fc2_b", 1, 1)
    o_ref[...] = out


_fused_call = pl.pallas_call(
    _fused_forward_kernel,
    out_shape=jax.ShapeDtypeStruct((B, NUM_CLASSES), jnp.float32),
)


def forward_pallas(prep, x_emr, x_vitals):
    xv = x_vitals.astype(jnp.float32).reshape(B * S, VITALS)
    xin = jnp.zeros((B * S + B, XPAD), jnp.float32)
    xin = xin.at[:B * S, :VITALS].set(xv)
    xin = xin.at[B * S:, :EMR].set(x_emr.astype(jnp.float32))
    out = _fused_call(xin, prep["wslab"], prep["pslab"])
    return jnp.squeeze(out)


# -------------------- parameter prep (done ONCE, outside jit) ----------------
def prepare_params(p):
    f32 = jnp.float32
    Hp = LSTM_HID
    order = [0, 1, 3, 2]                        # PyTorch [i,f,g,o] -> [i,f,o,g]

    # ---------------- bf16 weight slab ----------------
    wbuf = jnp.zeros((W_ROWS, W_COLS), f32)

    def put_w(buf, name, mat):
        r0 = W_OFF[name]
        return buf.at[r0:r0 + mat.shape[0], 0:mat.shape[1]].set(mat)

    embT = jnp.zeros((XPAD, HIDDEN), f32).at[:VITALS].set(p["emb_w"].T)
    wbuf = put_w(wbuf, "emb", embT)
    for l, lp in enumerate(p["enc"]):
        wbuf = put_w(wbuf, f"enc{l}_ipw", lp["in_proj_w"].T)
        wbuf = put_w(wbuf, f"enc{l}_opw", lp["out_proj_w"].T)
        wbuf = put_w(wbuf, f"enc{l}_w1", lp["lin1_w"].T)
        wbuf = put_w(wbuf, f"enc{l}_w2", lp["lin2_w"].T)
    for l, lp in enumerate(p["lstm"]):
        w_ih_f, w_hh_f, _, _ = lp["fw"]
        w_ih_b, w_hh_b, _, _ = lp["bw"]
        In = w_ih_f.shape[1]
        # column layout: col = gate*64 + dir*32 + unit, gate order [i,f,o,g]
        wfT = w_ih_f.T.reshape(In, 4, Hp)[:, order, :]
        wbT = w_ih_b.T.reshape(In, 4, Hp)[:, order, :]
        wih = jnp.stack([wfT, wbT], axis=2).reshape(In, GATES)
        hfT = w_hh_f.T.reshape(Hp, 4, Hp)[:, order, :]
        hbT = w_hh_b.T.reshape(Hp, 4, Hp)[:, order, :]
        top = jnp.stack([hfT, jnp.zeros_like(hfT)], axis=2)   # h_fw -> fw cols
        bot = jnp.stack([jnp.zeros_like(hbT), hbT], axis=2)   # h_bw -> bw cols
        whh = jnp.concatenate([top, bot], axis=0).reshape(HP2, GATES)
        wbuf = put_w(wbuf, f"lstm{l}_wih", wih)
        wbuf = put_w(wbuf, f"lstm{l}_whh", whh)
    fc1T = p["fc1_w"].T                                        # (EMR+H, H)
    w_e = jnp.zeros((XPAD, HIDDEN), f32).at[:EMR].set(fc1T[:EMR])
    wbuf = put_w(wbuf, "fc1_emr", w_e)
    wbuf = put_w(wbuf, "fc1_h", fc1T[EMR:])

    # ---------------- f32 param slab ----------------
    pbuf = jnp.zeros((P_ROWS, P_COLS), f32)

    def put_p(buf, name, mat):
        r0 = P_OFF[name]
        return buf.at[r0:r0 + mat.shape[0], 0:mat.shape[1]].set(mat)

    pe = positional_encoding(HIDDEN)[0, :S]                    # (S, H)
    pbuf = put_p(pbuf, "pe", jnp.tile(pe, (B, 1)) + p["emb_b"][None, :])
    for l, lp in enumerate(p["enc"]):
        pbuf = put_p(pbuf, f"enc{l}_ipb", lp["in_proj_b"][None, :])
        pbuf = put_p(pbuf, f"enc{l}_opb", lp["out_proj_b"][None, :])
        pbuf = put_p(pbuf, f"enc{l}_b1", lp["lin1_b"][None, :])
        pbuf = put_p(pbuf, f"enc{l}_b2", lp["lin2_b"][None, :])
        pbuf = put_p(pbuf, f"enc{l}_ln1w", lp["ln1_w"][None, :])
        pbuf = put_p(pbuf, f"enc{l}_ln1b", lp["ln1_b"][None, :])
        pbuf = put_p(pbuf, f"enc{l}_ln2w", lp["ln2_w"][None, :])
        pbuf = put_p(pbuf, f"enc{l}_ln2b", lp["ln2_b"][None, :])
    for l, lp in enumerate(p["lstm"]):
        _, _, b_ih_f, b_hh_f = lp["fw"]
        _, _, b_ih_b, b_hh_b = lp["bw"]
        bf_ = (b_ih_f + b_hh_f).reshape(4, Hp)[order, :]
        bb_ = (b_ih_b + b_hh_b).reshape(4, Hp)[order, :]
        pbuf = put_p(pbuf, f"lstm{l}_b",
                     jnp.stack([bf_, bb_], axis=1).reshape(1, GATES))
    gate_mask = jnp.tile(jnp.concatenate(
        [jnp.ones((1, Hp), f32), jnp.zeros((1, Hp), f32)], axis=1), (1, 4))
    pbuf = put_p(pbuf, "gate_mask", gate_mask)
    pbuf = put_p(pbuf, "fc1_b", p["fc1_b"][None, :])
    pbuf = put_p(pbuf, "fc2_w", p["fc2_w"].reshape(1, HIDDEN))  # NUM_CLASSES == 1
    pbuf = put_p(pbuf, "fc2_b", p["fc2_b"].reshape(1, 1))

    lane = jnp.arange(HIDDEN)
    seg = (lane[:, None] // HEAD_DIM == lane[None, :] // HEAD_DIM).astype(f32)
    pbuf = put_p(pbuf, "seg", seg * (1.0 / math.sqrt(HEAD_DIM)))

    BS = B * S
    eye = jnp.eye(BS, dtype=f32)
    tm_src = [(r % B) * S + (r // B) for r in range(BS)]       # row t*B+b <- b*S+t
    rev_src = [(S - 1 - r // B) * B + (r % B) for r in range(BS)]
    pbuf = put_p(pbuf, "ptm", eye[jnp.array(tm_src)])
    pbuf = put_p(pbuf, "prev", eye[jnp.array(rev_src)])

    return {"wslab": wbuf.astype(jnp.bfloat16), "pslab": pbuf}


# ------------------------- pure-JAX reference (raw params) -------------------
def _ln_ref(x, g, b):
    mu = jnp.mean(x, -1, keepdims=True)
    var = jnp.mean((x - mu) ** 2, -1, keepdims=True)
    return (x - mu) * lax.rsqrt(var + LN_EPS) * g + b


def _encoder_layer_ref(x, lp):
    L, N, E = x.shape
    Dh = E // NHEAD
    x2 = x.reshape(L * N, E)
    qkv = _bdot(x2, lp["in_proj_w"].T) + lp["in_proj_b"]
    q, k, v = jnp.split(qkv, 3, axis=-1)

    def heads(t):
        return t.reshape(L, N, NHEAD, Dh).transpose(1, 2, 0, 3).reshape(
            N * NHEAD, L, Dh)

    qh, kh, vh = heads(q), heads(k), heads(v)
    s = jnp.einsum("nld,nmd->nlm", qh, kh,
                   precision=lax.Precision.HIGHEST) / math.sqrt(Dh)
    p_ = jax.nn.softmax(s, axis=-1)
    oh = jnp.einsum("nlm,nmd->nld", p_, vh, precision=lax.Precision.HIGHEST)
    attn = oh.reshape(N, NHEAD, L, Dh).transpose(2, 0, 1, 3).reshape(L * N, E)
    attn = _bdot(attn, lp["out_proj_w"].T) + lp["out_proj_b"]
    y = x2 + attn
    y = _ln_ref(y, lp["ln1_w"], lp["ln1_b"])
    ff = jnp.maximum(_bdot(y, lp["lin1_w"].T) + lp["lin1_b"], 0.0)
    ff = _bdot(ff, lp["lin2_w"].T) + lp["lin2_b"]
    y = y + ff
    y = _ln_ref(y, lp["ln2_w"], lp["ln2_b"])
    return y.reshape(L, N, E)


def _lstm_dir_ref(x_seq, w_ih, w_hh, b_ih, b_hh):
    Ss, Bb, In = x_seq.shape
    H4 = w_ih.shape[0]
    Hp = H4 // 4
    gx = (_bdot(x_seq.reshape(Ss * Bb, In), w_ih.T)
          + (b_ih + b_hh)).reshape(Ss, Bb, H4)

    def step(carry, g_t):
        h, c = carry
        g = g_t + _bdot(h, w_hh.T)
        i = jax.nn.sigmoid(g[:, :Hp])
        f = jax.nn.sigmoid(g[:, Hp:2 * Hp])
        gg = jnp.tanh(g[:, 2 * Hp:3 * Hp])
        o = jax.nn.sigmoid(g[:, 3 * Hp:])
        c = f * c + i * gg
        h = o * jnp.tanh(c)
        return (h, c), h

    init = (jnp.zeros((Bb, Hp), jnp.float32), jnp.zeros((Bb, Hp), jnp.float32))
    _, hs = lax.scan(step, init, gx)
    return hs


def forward_reference(p, x_emr, x_vitals):
    x_emr = x_emr.astype(jnp.float32)
    x_vitals = x_vitals.astype(jnp.float32)
    Bb, Ss, V = x_vitals.shape
    x = (_bdot(x_vitals.reshape(Bb * Ss, V), p["emb_w"].T)
         + p["emb_b"]).reshape(Bb, Ss, HIDDEN)
    x = x + positional_encoding(HIDDEN)[:, :Ss]
    for lp in p["enc"]:
        x = _encoder_layer_ref(x, lp)
    seq = x.transpose(1, 0, 2)                 # (S, B, H) time-major
    for lp in p["lstm"]:
        fw = _lstm_dir_ref(seq, *lp["fw"])
        bw = _lstm_dir_ref(seq[::-1], *lp["bw"])[::-1]
        seq = jnp.concatenate([fw, bw], axis=-1)
    hs = seq[-1]                               # lstm_out[:, -1, :]
    h = jnp.concatenate([x_emr, hs], axis=-1)
    h = _bdot(h, p["fc1_w"].T) + p["fc1_b"]
    out = _bdot(h, p["fc2_w"].T) + p["fc2_b"]
    return jnp.squeeze(out)


# ------------------------------ parameters -----------------------------------
def init_params(key):
    keys = iter(jax.random.split(key, 64))

    def u(shape, scale=0.1):
        return jax.random.uniform(next(keys), shape, jnp.float32, -scale, scale)

    p = {"emb_w": u((HIDDEN, VITALS)), "emb_b": u((HIDDEN,)),
         "enc": [], "lstm": []}
    for _ in range(NUM_ENC_LAYERS):
        p["enc"].append(dict(
            in_proj_w=u((3 * HIDDEN, HIDDEN)), in_proj_b=u((3 * HIDDEN,)),
            out_proj_w=u((HIDDEN, HIDDEN)), out_proj_b=u((HIDDEN,)),
            lin1_w=u((DFF, HIDDEN)), lin1_b=u((DFF,)),
            lin2_w=u((HIDDEN, DFF)), lin2_b=u((HIDDEN,)),
            ln1_w=jnp.ones((HIDDEN,), jnp.float32),
            ln1_b=jnp.zeros((HIDDEN,), jnp.float32),
            ln2_w=jnp.ones((HIDDEN,), jnp.float32),
            ln2_b=jnp.zeros((HIDDEN,), jnp.float32),
        ))
    Hp = LSTM_HID
    for l in range(NUM_LSTM_LAYERS):
        in_size = HIDDEN if l == 0 else 2 * Hp
        layer = {}
        for d in ("fw", "bw"):
            layer[d] = (u((4 * Hp, in_size)), u((4 * Hp, Hp)),
                        u((4 * Hp,)), u((4 * Hp,)))
        p["lstm"].append(layer)
    p["fc1_w"] = u((HIDDEN, EMR + HIDDEN))
    p["fc1_b"] = u((HIDDEN,))
    p["fc2_w"] = u((NUM_CLASSES, HIDDEN))
    p["fc2_b"] = u((NUM_CLASSES,))
    return p


# --------------------------------- main ---------------------------------------
if __name__ == "__main__":
    key = jax.random.PRNGKey(0)
    kp, ke, kv = jax.random.split(key, 3)
    raw_params = init_params(kp)
    prep_params = prepare_params(raw_params)      # one-time weight packing
    x_emr = jax.random.normal(ke, (B, EMR), jnp.float32)
    x_vitals = jax.random.normal(kv, (B, S, VITALS), jnp.float32)

    run = jax.jit(forward_pallas)
    out = jax.block_until_ready(run(prep_params, x_emr, x_vitals))

    ref = jax.block_until_ready(
        jax.jit(forward_reference)(raw_params, x_emr, x_vitals))

    assert out.shape == (B,), out.shape
    if not jnp.allclose(out, ref, atol=1e-2, rtol=1e-2):
        raise AssertionError(f"mismatch: pallas={out} ref={ref}")
    print("KERNEL_OK")
</pallas_src>

<mosaic_0001>
module attributes {stable_mosaic.version = 11 : i64} {
  func.func @_fused_forward_kernel(%arg0: memref<18x16xf32, #tpu.memory_space<vmem>>, %arg1: memref<992x256xbf16, #tpu.memory_space<vmem>>, %arg2: memref<135x256xf32, #tpu.memory_space<vmem>>, %arg3: memref<2x1xf32, #tpu.memory_space<vmem>>) attributes {dimension_semantics = [], scalar_prefetch = 0 : i64, scratch_operands = 0 : i64, tpu.core_type = #tpu.core_type<tc>} {
    %c0 = arith.constant 0 : index
    %c0_0 = arith.constant 0 : index
    %0 = vector.load %arg0[%c0, %c0_0] : memref<18x16xf32, #tpu.memory_space<vmem>>, vector<16x16xf32>
    %c16 = arith.constant 16 : index
    %c0_1 = arith.constant 0 : index
    %1 = vector.load %arg0[%c16, %c0_1] : memref<18x16xf32, #tpu.memory_space<vmem>>, vector<2x16xf32>
    %c0_2 = arith.constant 0 : index
    %c0_3 = arith.constant 0 : index
    %2 = vector.load %arg1[%c0_2, %c0_3] : memref<992x256xbf16, #tpu.memory_space<vmem>>, vector<16x64xbf16>
    %3 = arith.truncf %0 : vector<16x16xf32> to vector<16x16xbf16>
    %cst = arith.constant dense<0.000000e+00> : vector<16x64xf32>
    %4 = tpu.matmul %3, %2, %cst {dimension_numbers = #tpu.dot_dimension_numbers<[1], [0], [0], [1], [0, 0, 1, 1], [], []>} : vector<16x16xbf16>, vector<16x64xbf16>, vector<16x64xf32> -> vector<16x64xf32>
    %c0_4 = arith.constant 0 : index
    %c0_5 = arith.constant 0 : index
    %5 = vector.load %arg2[%c0_4, %c0_5] : memref<135x256xf32, #tpu.memory_space<vmem>>, vector<16x64xf32>
    %6 = arith.addf %4, %5 : vector<16x64xf32>
    %c39 = arith.constant 39 : index
    %c0_6 = arith.constant 0 : index
    %7 = vector.load %arg2[%c39, %c0_6] : memref<135x256xf32, #tpu.memory_space<vmem>>, vector<64x64xf32>
    %c16_7 = arith.constant 16 : index
    %c0_8 = arith.constant 0 : index
    %8 = vector.load %arg1[%c16_7, %c0_8] : memref<992x256xbf16, #tpu.memory_space<vmem>>, vector<64x192xbf16>
    %9 = arith.truncf %6 : vector<16x64xf32> to vector<16x64xbf16>
    %cst_9 = arith.constant dense<0.000000e+00> : vector<16x192xf32>
    %10 = tpu.matmul %9, %8, %cst_9 {dimension_numbers = #tpu.dot_dimension_numbers<[1], [0], [0], [1], [0, 0, 1, 1], [], []>} : vector<16x64xbf16>, vector<64x192xbf16>, vector<16x192xf32> -> vector<16x192xf32>
    %c16_10 = arith.constant 16 : index
    %c0_11 = arith.constant 0 : index
    %11 = vector.load %arg2[%c16_10, %c0_11] : memref<135x256xf32, #tpu.memory_space<vmem>>, vector<1x192xf32>
    %12 = vector.broadcast %11 : vector<1x192xf32> to vector<16x192xf32>
    %13 = arith.addf %10, %12 : vector<16x192xf32>
    %14 = vector.extract_strided_slice %13 {offsets = [0, 0], sizes = [16, 64], strides = [1, 1]} : vector<16x192xf32> to vector<16x64xf32>
    %15 = vector.extract_strided_slice %13 {offsets = [0, 64], sizes = [16, 64], strides = [1, 1]} : vector<16x192xf32> to vector<16x64xf32>
    %16 = vector.extract_strided_slice %13 {offsets = [0, 128], sizes = [16, 64], strides = [1, 1]} : vector<16x192xf32> to vector<16x64xf32>
    %c8_i32 = arith.constant 8 : i32
    %17 = tpu.dynamic_rotate %15 by %c8_i32 dim 0 : vector<16x64xf32>, i32 -> vector<16x64xf32>
    %c8_i32_12 = arith.constant 8 : i32
    %18 = tpu.dynamic_rotate %16 by %c8_i32_12 dim 0 : vector<16x64xf32>, i32 -> vector<16x64xf32>
    %19 = arith.mulf %14, %15 : vector<16x64xf32>
    %cst_13 = arith.constant dense<0.000000e+00> : vector<16x64xf32>
    %20 = tpu.matmul %19, %7, %cst_13 {dimension_numbers = #tpu.dot_dimension_numbers<[1], [0], [0], [1], [0, 0, 1, 1], [], []>} : vector<16x64xf32>, vector<64x64xf32>, vector<16x64xf32> -> vector<16x64xf32>
    %21 = arith.mulf %14, %17 : vector<16x64xf32>
    %cst_14 = arith.constant dense<0.000000e+00> : vector<16x64xf32>
    %22 = tpu.matmul %21, %7, %cst_14 {dimension_numbers = #tpu.dot_dimension_numbers<[1], [0], [0], [1], [0, 0, 1, 1], [], []>} : vector<16x64xf32>, vector<64x64xf32>, vector<16x64xf32> -> vector<16x64xf32>
    %23 = arith.maximumf %20, %22 : vector<16x64xf32>
    %24 = arith.subf %20, %23 : vector<16x64xf32>
    %25 = math.exp %24 : vector<16x64xf32>
    %26 = arith.subf %22, %23 : vector<16x64xf32>
    %27 = math.exp %26 : vector<16x64xf32>
    %28 = arith.addf %25, %27 : vector<16x64xf32>
    %29 = tpu.reciprocal %28 {approx = true} : vector<16x64xf32> -> vector<16x64xf32>
    %30 = arith.mulf %25, %16 : vector<16x64xf32>
    %31 = arith.mulf %27, %18 : vector<16x64xf32>
    %32 = arith.addf %30, %31 : vector<16x64xf32>
    %33 = arith.mulf %32, %29 : vector<16x64xf32>
    %c80 = arith.constant 80 : index
    %c0_15 = arith.constant 0 : index
    %34 = vector.load %arg1[%c80, %c0_15] : memref<992x256xbf16, #tpu.memory_space<vmem>>, vector<64x64xbf16>
    %35 = arith.truncf %33 : vector<16x64xf32> to vector<16x64xbf16>
    %cst_16 = arith.constant dense<0.000000e+00> : vector<16x64xf32>
    %36 = tpu.matmul %35, %34, %cst_16 {dimension_numbers = #tpu.dot_dimension_numbers<[1], [0], [0], [1], [0, 0, 1, 1], [], []>} : vector<16x64xbf16>, vector<64x64xbf16>, vector<16x64xf32> -> vector<16x64xf32>
    %c17 = arith.constant 17 : index
    %c0_17 = arith.constant 0 : index
    %37 = vector.load %arg2[%c17, %c0_17] : memref<135x256xf32, #tpu.memory_space<vmem>>, vector<1x64xf32>
    %38 = vector.broadcast %37 : vector<1x64xf32> to vector<16x64xf32>
    %39 = arith.addf %36, %38 : vector<16x64xf32>
    %40 = arith.addf %6, %39 : vector<16x64xf32>
    %c20 = arith.constant 20 : index
    %c0_18 = arith.constant 0 : index
    %41 = vector.load %arg2[%c20, %c0_18] : memref<135x256xf32, #tpu.memory_space<vmem>>, vector<1x64xf32>
    %c21 = arith.constant 21 : index
    %c0_19 = arith.constant 0 : index
    %42 = vector.load %arg2[%c21, %c0_19] : memref<135x256xf32, #tpu.memory_space<vmem>>, vector<1x64xf32>
    %cst_20 = arith.constant dense<0.000000e+00> : vector<16xf32>
    %43 = vector.multi_reduction <add>, %40, %cst_20 [1] : vector<16x64xf32> to vector<16xf32>
    %44 = vector.shape_cast %43 : vector<16xf32> to vector<16x1xf32>
    %cst_21 = arith.constant 6.400000e+01 : f32
    %45 = vector.broadcast %cst_21 : f32 to vector<16x1xf32>
    %46 = arith.divf %44, %45 : vector<16x1xf32>
    %47 = vector.broadcast %46 : vector<16x1xf32> to vector<16x64xf32>
    %48 = arith.subf %40, %47 : vector<16x64xf32>
    %49 = arith.mulf %48, %48 : vector<16x64xf32>
    %cst_22 = arith.constant dense<0.000000e+00> : vector<16xf32>
    %50 = vector.multi_reduction <add>, %49, %cst_22 [1] : vector<16x64xf32> to vector<16xf32>
    %51 = vector.shape_cast %50 : vector<16xf32> to vector<16x1xf32>
    %cst_23 = arith.constant 6.400000e+01 : f32
    %52 = vector.broadcast %cst_23 : f32 to vector<16x1xf32>
    %53 = arith.divf %51, %52 : vector<16x1xf32>
    %cst_24 = arith.constant 9.99999974E-6 : f32
    %54 = vector.broadcast %cst_24 : f32 to vector<16x1xf32>
    %55 = arith.addf %53, %54 : vector<16x1xf32>
    %56 = math.rsqrt %55 : vector<16x1xf32>
    %57 = vector.broadcast %56 : vector<16x1xf32> to vector<16x64xf32>
    %58 = arith.mulf %48, %57 : vector<16x64xf32>
    %59 = vector.broadcast %41 : vector<1x64xf32> to vector<16x64xf32>
    %60 = arith.mulf %58, %59 : vector<16x64xf32>
    %61 = vector.broadcast %42 : vector<1x64xf32> to vector<16x64xf32>
    %62 = arith.addf %60, %61 : vector<16x64xf32>
    %c144 = arith.constant 144 : index
    %c0_25 = arith.constant 0 : index
    %63 = vector.load %arg1[%c144, %c0_25] : memref<992x256xbf16, #tpu.memory_space<vmem>>, vector<64x64xbf16>
    %64 = arith.truncf %62 : vector<16x64xf32> to vector<16x64xbf16>
    %cst_26 = arith.constant dense<0.000000e+00> : vector<16x64xf32>
    %65 = tpu.matmul %64, %63, %cst_26 {dimension_numbers = #tpu.dot_dimension_numbers<[1], [0], [0], [1], [0, 0, 1, 1], [], []>} : vector<16x64xbf16>, vector<64x64xbf16>, vector<16x64xf32> -> vector<16x64xf32>
    %c18 = arith.constant 18 : index
    %c0_27 = arith.constant 0 : index
    %66 = vector.load %arg2[%c18, %c0_27] : memref<135x256xf32, #tpu.memory_space<vmem>>, vector<1x64xf32>
    %67 = vector.broadcast %66 : vector<1x64xf32> to vector<16x64xf32>
    %68 = arith.addf %65, %67 : vector<16x64xf32>
    %cst_28 = arith.constant 0.000000e+00 : f32
    %69 = vector.broadcast %cst_28 : f32 to vector<16x64xf32>
    %70 = arith.maximumf %68, %69 : vector<16x64xf32>
    %c208 = arith.constant 208 : index
    %c0_29 = arith.constant 0 : index
    %71 = vector.load %arg1[%c208, %c0_29] : memref<992x256xbf16, #tpu.memory_space<vmem>>, vector<64x64xbf16>
    %72 = arith.truncf %70 : vector<16x64xf32> to vector<16x64xbf16>
    %cst_30 = arith.constant dense<0.000000e+00> : vector<16x64xf32>
    %73 = tpu.matmul %72, %71, %cst_30 {dimension_numbers = #tpu.dot_dimension_numbers<[1], [0], [0], [1], [0, 0, 1, 1], [], []>} : vector<16x64xbf16>, vector<64x64xbf16>, vector<16x64xf32> -> vector<16x64xf32>
    %c19 = arith.constant 19 : index
    %c0_31 = arith.constant 0 : index
    %74 = vector.load %arg2[%c19, %c0_31] : memref<135x256xf32, #tpu.memory_space<vmem>>, vector<1x64xf32>
    %75 = vector.broadcast %74 : vector<1x64xf32> to vector<16x64xf32>
    %76 = arith.addf %73, %75 : vector<16x64xf32>
    %77 = arith.addf %62, %76 : vector<16x64xf32>
    %c22 = arith.constant 22 : index
    %c0_32 = arith.constant 0 : index
    %78 = vector.load %arg2[%c22, %c0_32] : memref<135x256xf32, #tpu.memory_space<vmem>>, vector<1x64xf32>
    %c23 = arith.constant 23 : index
    %c0_33 = arith.constant 0 : index
    %79 = vector.load %arg2[%c23, %c0_33] : memref<135x256xf32, #tpu.memory_space<vmem>>, vector<1x64xf32>
    %cst_34 = arith.constant dense<0.000000e+00> : vector<16xf32>
    %80 = vector.multi_reduction <add>, %77, %cst_34 [1] : vector<16x64xf32> to vector<16xf32>
    %81 = vector.shape_cast %80 : vector<16xf32> to vector<16x1xf32>
    %cst_35 = arith.constant 6.400000e+01 : f32
    %82 = vector.broadcast %cst_35 : f32 to vector<16x1xf32>
    %83 = arith.divf %81, %82 : vector<16x1xf32>
    %84 = vector.broadcast %83 : vector<16x1xf32> to vector<16x64xf32>
    %85 = arith.subf %77, %84 : vector<16x64xf32>
    %86 = arith.mulf %85, %85 : vector<16x64xf32>
    %cst_36 = arith.constant dense<0.000000e+00> : vector<16xf32>
    %87 = vector.multi_reduction <add>, %86, %cst_36 [1] : vector<16x64xf32> to vector<16xf32>
    %88 = vector.shape_cast %87 : vector<16xf32> to vector<16x1xf32>
    %cst_37 = arith.constant 6.400000e+01 : f32
    %89 = vector.broadcast %cst_37 : f32 to vector<16x1xf32>
    %90 = arith.divf %88, %89 : vector<16x1xf32>
    %cst_38 = arith.constant 9.99999974E-6 : f32
    %91 = vector.broadcast %cst_38 : f32 to vector<16x1xf32>
    %92 = arith.addf %90, %91 : vector<16x1xf32>
    %93 = math.rsqrt %92 : vector<16x1xf32>
    %94 = vector.broadcast %93 : vector<16x1xf32> to vector<16x64xf32>
    %95 = arith.mulf %85, %94 : vector<16x64xf32>
    %96 = vector.broadcast %78 : vector<1x64xf32> to vector<16x64xf32>
    %97 = arith.mulf %95, %96 : vector<16x64xf32>
    %98 = vector.broadcast %79 : vector<1x64xf32> to vector<16x64xf32>
    %99 = arith.addf %97, %98 : vector<16x64xf32>
    %c272 = arith.constant 272 : index
    %c0_39 = arith.constant 0 : index
    %100 = vector.load %arg1[%c272, %c0_39] : memref<992x256xbf16, #tpu.memory_space<vmem>>, vector<64x192xbf16>
    %101 = arith.truncf %99 : vector<16x64xf32> to vector<16x64xbf16>
    %cst_40 = arith.constant dense<0.000000e+00> : vector<16x192xf32>
    %102 = tpu.matmul %101, %100, %cst_40 {dimension_numbers = #tpu.dot_dimension_numbers<[1], [0], [0], [1], [0, 0, 1, 1], [], []>} : vector<16x64xbf16>, vector<64x192xbf16>, vector<16x192xf32> -> vector<16x192xf32>
    %c24 = arith.constant 24 : index
    %c0_41 = arith.constant 0 : index
    %103 = vector.load %arg2[%c24, %c0_41] : memref<135x256xf32, #tpu.memory_space<vmem>>, vector<1x192xf32>
    %104 = vector.broadcast %103 : vector<1x192xf32> to vector<16x192xf32>
    %105 = arith.addf %102, %104 : vector<16x192xf32>
    %106 = vector.extract_strided_slice %105 {offsets = [0, 0], sizes = [16, 64], strides = [1, 1]} : vector<16x192xf32> to vector<16x64xf32>
    %107 = vector.extract_strided_slice %105 {offsets = [0, 64], sizes = [16, 64], strides = [1, 1]} : vector<16x192xf32> to vector<16x64xf32>
    %108 = vector.extract_strided_slice %105 {offsets = [0, 128], sizes = [16, 64], strides = [1, 1]} : vector<16x192xf32> to vector<16x64xf32>
    %c8_i32_42 = arith.constant 8 : i32
    %109 = tpu.dynamic_rotate %107 by %c8_i32_42 dim 0 : vector<16x64xf32>, i32 -> vector<16x64xf32>
    %c8_i32_43 = arith.constant 8 : i32
    %110 = tpu.dynamic_rotate %108 by %c8_i32_43 dim 0 : vector<16x64xf32>, i32 -> vector<16x64xf32>
    %111 = arith.mulf %106, %107 : vector<16x64xf32>
    %cst_44 = arith.constant dense<0.000000e+00> : vector<16x64xf32>
    %112 = tpu.matmul %111, %7, %cst_44 {dimension_numbers = #tpu.dot_dimension_numbers<[1], [0], [0], [1], [0, 0, 1, 1], [], []>} : vector<16x64xf32>, vector<64x64xf32>, vector<16x64xf32> -> vector<16x64xf32>
    %113 = arith.mulf %106, %109 : vector<16x64xf32>
    %cst_45 = arith.constant dense<0.000000e+00> : vector<16x64xf32>
    %114 = tpu.matmul %113, %7, %cst_45 {dimension_numbers = #tpu.dot_dimension_numbers<[1], [0], [0], [1], [0, 0, 1, 1], [], []>} : vector<16x64xf32>, vector<64x64xf32>, vector<16x64xf32> -> vector<16x64xf32>
    %115 = arith.maximumf %112, %114 : vector<16x64xf32>
    %116 = arith.subf %112, %115 : vector<16x64xf32>
    %117 = math.exp %116 : vector<16x64xf32>
    %118 = arith.subf %114, %115 : vector<16x64xf32>
    %119 = math.exp %118 : vector<16x64xf32>
    %120 = arith.addf %117, %119 : vector<16x64xf32>
    %121 = tpu.reciprocal %120 {approx = true} : vector<16x64xf32> -> vector<16x64xf32>
    %122 = arith.mulf %117, %108 : vector<16x64xf32>
    %123 = arith.mulf %119, %110 : vector<16x64xf32>
    %124 = arith.addf %122, %123 : vector<16x64xf32>
    %125 = arith.mulf %124, %121 : vector<16x64xf32>
    %c336 = arith.constant 336 : index
    %c0_46 = arith.constant 0 : index
    %126 = vector.load %arg1[%c336, %c0_46] : memref<992x256xbf16, #tpu.memory_space<vmem>>, vector<64x64xbf16>
    %127 = arith.truncf %125 : vector<16x64xf32> to vector<16x64xbf16>
    %cst_47 = arith.constant dense<0.000000e+00> : vector<16x64xf32>
    %128 = tpu.matmul %127, %126, %cst_47 {dimension_numbers = #tpu.dot_dimension_numbers<[1], [0], [0], [1], [0, 0, 1, 1], [], []>} : vector<16x64xbf16>, vector<64x64xbf16>, vector<16x64xf32> -> vector<16x64xf32>
    %c25 = arith.constant 25 : index
    %c0_48 = arith.constant 0 : index
    %129 = vector.load %arg2[%c25, %c0_48] : memref<135x256xf32, #tpu.memory_space<vmem>>, vector<1x64xf32>
    %130 = vector.broadcast %129 : vector<1x64xf32> to vector<16x64xf32>
    %131 = arith.addf %128, %130 : vector<16x64xf32>
    %132 = arith.addf %99, %131 : vector<16x64xf32>
    %c28 = arith.constant 28 : index
    %c0_49 = arith.constant 0 : index
    %133 = vector.load %arg2[%c28, %c0_49] : memref<135x256xf32, #tpu.memory_space<vmem>>, vector<1x64xf32>
    %c29 = arith.constant 29 : index
    %c0_50 = arith.constant 0 : index
    %134 = vector.load %arg2[%c29, %c0_50] : memref<135x256xf32, #tpu.memory_space<vmem>>, vector<1x64xf32>
    %cst_51 = arith.constant dense<0.000000e+00> : vector<16xf32>
    %135 = vector.multi_reduction <add>, %132, %cst_51 [1] : vector<16x64xf32> to vector<16xf32>
    %136 = vector.shape_cast %135 : vector<16xf32> to vector<16x1xf32>
    %cst_52 = arith.constant 6.400000e+01 : f32
    %137 = vector.broadcast %cst_52 : f32 to vector<16x1xf32>
    %138 = arith.divf %136, %137 : vector<16x1xf32>
    %139 = vector.broadcast %138 : vector<16x1xf32> to vector<16x64xf32>
    %140 = arith.subf %132, %139 : vector<16x64xf32>
    %141 = arith.mulf %140, %140 : vector<16x64xf32>
    %cst_53 = arith.constant dense<0.000000e+00> : vector<16xf32>
    %142 = vector.multi_reduction <add>, %141, %cst_53 [1] : vector<16x64xf32> to vector<16xf32>
    %143 = vector.shape_cast %142 : vector<16xf32> to vector<16x1xf32>
    %cst_54 = arith.constant 6.400000e+01 : f32
    %144 = vector.broadcast %cst_54 : f32 to vector<16x1xf32>
    %145 = arith.divf %143, %144 : vector<16x1xf32>
    %cst_55 = arith.constant 9.99999974E-6 : f32
    %146 = vector.broadcast %cst_55 : f32 to vector<16x1xf32>
    %147 = arith.addf %145, %146 : vector<16x1xf32>
    %148 = math.rsqrt %147 : vector<16x1xf32>
    %149 = vector.broadcast %148 : vector<16x1xf32> to vector<16x64xf32>
    %150 = arith.mulf %140, %149 : vector<16x64xf32>
    %151 = vector.broadcast %133 : vector<1x64xf32> to vector<16x64xf32>
    %152 = arith.mulf %150, %151 : vector<16x64xf32>
    %153 = vector.broadcast %134 : vector<1x64xf32> to vector<16x64xf32>
    %154 = arith.addf %152, %153 : vector<16x64xf32>
    %c400 = arith.constant 400 : index
    %c0_56 = arith.constant 0 : index
    %155 = vector.load %arg1[%c400, %c0_56] : memref<992x256xbf16, #tpu.memory_space<vmem>>, vector<64x64xbf16>
    %156 = arith.truncf %154 : vector<16x64xf32> to vector<16x64xbf16>
    %cst_57 = arith.constant dense<0.000000e+00> : vector<16x64xf32>
    %157 = tpu.matmul %156, %155, %cst_57 {dimension_numbers = #tpu.dot_dimension_numbers<[1], [0], [0], [1], [0, 0, 1, 1], [], []>} : vector<16x64xbf16>, vector<64x64xbf16>, vector<16x64xf32> -> vector<16x64xf32>
    %c26 = arith.constant 26 : index
    %c0_58 = arith.constant 0 : index
    %158 = vector.load %arg2[%c26, %c0_58] : memref<135x256xf32, #tpu.memory_space<vmem>>, vector<1x64xf32>
    %159 = vector.broadcast %158 : vector<1x64xf32> to vector<16x64xf32>
    %160 = arith.addf %157, %159 : vector<16x64xf32>
    %cst_59 = arith.constant 0.000000e+00 : f32
    %161 = vector.broadcast %cst_59 : f32 to vector<16x64xf32>
    %162 = arith.maximumf %160, %161 : vector<16x64xf32>
    %c464 = arith.constant 464 : index
    %c0_60 = arith.constant 0 : index
    %163 = vector.load %arg1[%c464, %c0_60] : memref<992x256xbf16, #tpu.memory_space<vmem>>, vector<64x64xbf16>
    %164 = arith.truncf %162 : vector<16x64xf32> to vector<16x64xbf16>
    %cst_61 = arith.constant dense<0.000000e+00> : vector<16x64xf32>
    %165 = tpu.matmul %164, %163, %cst_61 {dimension_numbers = #tpu.dot_dimension_numbers<[1], [0], [0], [1], [0, 0, 1, 1], [], []>} : vector<16x64xbf16>, vector<64x64xbf16>, vector<16x64xf32> -> vector<16x64xf32>
    %c27 = arith.constant 27 : index
    %c0_62 = arith.constant 0 : index
    %166 = vector.load %arg2[%c27, %c0_62] : memref<135x256xf32, #tpu.memory_space<vmem>>, vector<1x64xf32>
    %167 = vector.broadcast %166 : vector<1x64xf32> to vector<16x64xf32>
    %168 = arith.addf %165, %167 : vector<16x64xf32>
    %169 = arith.addf %154, %168 : vector<16x64xf32>
    %c30 = arith.constant 30 : index
    %c0_63 = arith.constant 0 : index
    %170 = vector.load %arg2[%c30, %c0_63] : memref<135x256xf32, #tpu.memory_space<vmem>>, vector<1x64xf32>
    %c31 = arith.constant 31 : index
    %c0_64 = arith.constant 0 : index
    %171 = vector.load %arg2[%c31, %c0_64] : memref<135x256xf32, #tpu.memory_space<vmem>>, vector<1x64xf32>
    %cst_65 = arith.constant dense<0.000000e+00> : vector<16xf32>
    %172 = vector.multi_reduction <add>, %169, %cst_65 [1] : vector<16x64xf32> to vector<16xf32>
    %173 = vector.shape_cast %172 : vector<16xf32> to vector<16x1xf32>
    %cst_66 = arith.constant 6.400000e+01 : f32
    %174 = vector.broadcast %cst_66 : f32 to vector<16x1xf32>
    %175 = arith.divf %173, %174 : vector<16x1xf32>
    %176 = vector.broadcast %175 : vector<16x1xf32> to vector<16x64xf32>
    %177 = arith.subf %169, %176 : vector<16x64xf32>
    %178 = arith.mulf %177, %177 : vector<16x64xf32>
    %cst_67 = arith.constant dense<0.000000e+00> : vector<16xf32>
    %179 = vector.multi_reduction <add>, %178, %cst_67 [1] : vector<16x64xf32> to vector<16xf32>
    %180 = vector.shape_cast %179 : vector<16xf32> to vector<16x1xf32>
    %cst_68 = arith.constant 6.400000e+01 : f32
    %181 = vector.broadcast %cst_68 : f32 to vector<16x1xf32>
    %182 = arith.divf %180, %181 : vector<16x1xf32>
    %cst_69 = arith.constant 9.99999974E-6 : f32
    %183 = vector.broadcast %cst_69 : f32 to vector<16x1xf32>
    %184 = arith.addf %182, %183 : vector<16x1xf32>
    %185 = math.rsqrt %184 : vector<16x1xf32>
    %186 = vector.broadcast %185 : vector<16x1xf32> to vector<16x64xf32>
    %187 = arith.mulf %177, %186 : vector<16x64xf32>
    %188 = vector.broadcast %170 : vector<1x64xf32> to vector<16x64xf32>
    %189 = arith.mulf %187, %188 : vector<16x64xf32>
    %190 = vector.broadcast %171 : vector<1x64xf32> to vector<16x64xf32>
    %191 = arith.addf %189, %190 : vector<16x64xf32>
    %c103 = arith.constant 103 : index
    %c0_70 = arith.constant 0 : index
    %192 = vector.load %arg2[%c103, %c0_70] : memref<135x256xf32, #tpu.memory_space<vmem>>, vector<16x16xf32>
    %c119 = arith.constant 119 : index
    %c0_71 = arith.constant 0 : index
    %193 = vector.load %arg2[%c119, %c0_71] : memref<135x256xf32, #tpu.memory_space<vmem>>, vector<16x16xf32>
    %cst_72 = arith.constant dense<0.000000e+00> : vector<16x64xf32>
    %194 = tpu.matmul %192, %191, %cst_72 {dimension_numbers = #tpu.dot_dimension_numbers<[1], [0], [0], [1], [0, 0, 1, 1], [], []>} : vector<16x16xf32>, vector<16x64xf32>, vector<16x64xf32> -> vector<16x64xf32>
    %c35 = arith.constant 35 : index
    %c0_73 = arith.constant 0 : index
    %195 = vector.load %arg2[%c35, %c0_73] : memref<135x256xf32, #tpu.memory_space<vmem>>, vector<1x256xf32>
    %196 = vector.extract_strided_slice %195 {offsets = [0, 0], sizes = [1, 64], strides = [1, 1]} : vector<1x256xf32> to vector<1x64xf32>
    %c528 = arith.constant 528 : index
    %c0_74 = arith.constant 0 : index
    %197 = vector.load %arg1[%c528, %c0_74] : memref<992x256xbf16, #tpu.memory_space<vmem>>, vector<64x256xbf16>
    %c592 = arith.constant 592 : index
    %c0_75 = arith.constant 0 : index
    %198 = vector.load %arg1[%c592, %c0_75] : memref<992x256xbf16, #tpu.memory_space<vmem>>, vector<64x256xbf16>
    %199 = arith.truncf %194 : vector<16x64xf32> to vector<16x64xbf16>
    %cst_76 = arith.constant dense<0.000000e+00> : vector<16x256xf32>
    %200 = tpu.matmul %199, %197, %cst_76 {dimension_numbers = #tpu.dot_dimension_numbers<[1], [0], [0], [1], [0, 0, 1, 1], [], []>} : vector<16x64xbf16>, vector<64x256xbf16>, vector<16x256xf32> -> vector<16x256xf32>
    %c32 = arith.constant 32 : index
    %c0_77 = arith.constant 0 : index
    %201 = vector.load %arg2[%c32, %c0_77] : memref<135x256xf32, #tpu.memory_space<vmem>>, vector<1x256xf32>
    %202 = vector.broadcast %201 : vector<1x256xf32> to vector<16x256xf32>
    %203 = arith.addf %200, %202 : vector<16x256xf32>
    %cst_78 = arith.constant dense<0.000000e+00> : vector<16x256xf32>
    %204 = tpu.matmul %193, %203, %cst_78 {dimension_numbers = #tpu.dot_dimension_numbers<[1], [0], [0], [1], [0, 0, 1, 1], [], []>} : vector<16x16xf32>, vector<16x256xf32>, vector<16x256xf32> -> vector<16x256xf32>
    %205 = vector.broadcast %195 : vector<1x256xf32> to vector<16x256xf32>
    %206 = arith.mulf %205, %203 : vector<16x256xf32>
    %cst_79 = arith.constant 1.000000e+00 : f32
    %207 = vector.broadcast %cst_79 : f32 to vector<1x256xf32>
    %208 = arith.subf %207, %195 : vector<1x256xf32>
    %209 = vector.broadcast %208 : vector<1x256xf32> to vector<16x256xf32>
    %210 = arith.mulf %209, %204 : vector<16x256xf32>
    %211 = arith.addf %206, %210 : vector<16x256xf32>
    %cst_80 = arith.constant 0.000000e+00 : f32
    %212 = vector.broadcast %cst_80 : f32 to vector<2x64xf32>
    %cst_81 = arith.constant 0.000000e+00 : f32
    %213 = vector.broadcast %cst_81 : f32 to vector<2x64xf32>
    %214 = vector.extract_strided_slice %211 {offsets = [0, 0], sizes = [2, 256], strides = [1, 1]} : vector<16x256xf32> to vector<2x256xf32>
    %215 = arith.truncf %212 : vector<2x64xf32> to vector<2x64xbf16>
    %cst_82 = arith.constant dense<0.000000e+00> : vector<2x256xf32>
    %216 = tpu.matmul %215, %198, %cst_82 {dimension_numbers = #tpu.dot_dimension_numbers<[1], [0], [0], [1], [0, 0, 1, 1], [], []>} : vector<2x64xbf16>, vector<64x256xbf16>, vector<2x256xf32> -> vector<2x256xf32>
    %217 = arith.addf %214, %216 : vector<2x256xf32>
    %218 = vector.extract_strided_slice %217 {offsets = [0, 0], sizes = [2, 192], strides = [1, 1]} : vector<2x256xf32> to vector<2x192xf32>
    %219 = arith.negf %218 : vector<2x192xf32>
    %220 = math.exp %219 : vector<2x192xf32>
    %cst_83 = arith.constant 1.000000e+00 : f32
    %221 = vector.broadcast %cst_83 : f32 to vector<2x192xf32>
    %222 = arith.addf %221, %220 : vector<2x192xf32>
    %223 = arith.divf %221, %222 : vector<2x192xf32>
    %224 = vector.extract_strided_slice %217 {offsets = [0, 192], sizes = [2, 64], strides = [1, 1]} : vector<2x256xf32> to vector<2x64xf32>
    %225 = math.tanh %224 : vector<2x64xf32>
    %226 = vector.extract_strided_slice %223 {offsets = [0, 0], sizes = [2, 64], strides = [1, 1]} : vector<2x192xf32> to vector<2x64xf32>
    %227 = vector.extract_strided_slice %223 {offsets = [0, 64], sizes = [2, 64], strides = [1, 1]} : vector<2x192xf32> to vector<2x64xf32>
    %228 = vector.extract_strided_slice %223 {offsets = [0, 128], sizes = [2, 64], strides = [1, 1]} : vector<2x192xf32> to vector<2x64xf32>
    %229 = arith.mulf %227, %213 : vector<2x64xf32>
    %230 = arith.mulf %226, %225 : vector<2x64xf32>
    %231 = arith.addf %229, %230 : vector<2x64xf32>
    %232 = math.tanh %231 : vector<2x64xf32>
    %233 = arith.mulf %228, %232 : vector<2x64xf32>
    %234 = vector.extract_strided_slice %211 {offsets = [2, 0], sizes = [2, 256], strides = [1, 1]} : vector<16x256xf32> to vector<2x256xf32>
    %235 = arith.truncf %233 : vector<2x64xf32> to vector<2x64xbf16>
    %cst_84 = arith.constant dense<0.000000e+00> : vector<2x256xf32>
    %236 = tpu.matmul %235, %198, %cst_84 {dimension_numbers = #tpu.dot_dimension_numbers<[1], [0], [0], [1], [0, 0, 1, 1], [], []>} : vector<2x64xbf16>, vector<64x256xbf16>, vector<2x256xf32> -> vector<2x256xf32>
    %237 = arith.addf %234, %236 : vector<2x256xf32>
    %238 = vector.extract_strided_slice %237 {offsets = [0, 0], sizes = [2, 192], strides = [1, 1]} : vector<2x256xf32> to vector<2x192xf32>
    %239 = arith.negf %238 : vector<2x192xf32>
    %240 = math.exp %239 : vector<2x192xf32>
    %cst_85 = arith.constant 1.000000e+00 : f32
    %241 = vector.broadcast %cst_85 : f32 to vector<2x192xf32>
    %242 = arith.addf %241, %240 : vector<2x192xf32>
    %243 = arith.divf %241, %242 : vector<2x192xf32>
    %244 = vector.extract_strided_slice %237 {offsets = [0, 192], sizes = [2, 64], strides = [1, 1]} : vector<2x256xf32> to vector<2x64xf32>
    %245 = math.tanh %244 : vector<2x64xf32>
    %246 = vector.extract_strided_slice %243 {offsets = [0, 0], sizes = [2, 64], strides = [1, 1]} : vector<2x192xf32> to vector<2x64xf32>
    %247 = vector.extract_strided_slice %243 {offsets = [0, 64], sizes = [2, 64], strides = [1, 1]} : vector<2x192xf32> to vector<2x64xf32>
    %248 = vector.extract_strided_slice %243 {offsets = [0, 128], sizes = [2, 64], strides = [1, 1]} : vector<2x192xf32> to vector<2x64xf32>
    %249 = arith.mulf %247, %231 : vector<2x64xf32>
    %250 = arith.mulf %246, %245 : vector<2x64xf32>
    %251 = arith.addf %249, %250 : vector<2x64xf32>
    %252 = math.tanh %251 : vector<2x64xf32>
    %253 = arith.mulf %248, %252 : vector<2x64xf32>
    %254 = vector.extract_strided_slice %211 {offsets = [4, 0], sizes = [2, 256], strides = [1, 1]} : vector<16x256xf32> to vector<2x256xf32>
    %255 = arith.truncf %253 : vector<2x64xf32> to vector<2x64xbf16>
    %cst_86 = arith.constant dense<0.000000e+00> : vector<2x256xf32>
    %256 = tpu.matmul %255, %198, %cst_86 {dimension_numbers = #tpu.dot_dimension_numbers<[1], [0], [0], [1], [0, 0, 1, 1], [], []>} : vector<2x64xbf16>, vector<64x256xbf16>, vector<2x256xf32> -> vector<2x256xf32>
    %257 = arith.addf %254, %256 : vector<2x256xf32>
    %258 = vector.extract_strided_slice %257 {offsets = [0, 0], sizes = [2, 192], strides = [1, 1]} : vector<2x256xf32> to vector<2x192xf32>
    %259 = arith.negf %258 : vector<2x192xf32>
    %260 = math.exp %259 : vector<2x192xf32>
    %cst_87 = arith.constant 1.000000e+00 : f32
    %261 = vector.broadcast %cst_87 : f32 to vector<2x192xf32>
    %262 = arith.addf %261, %260 : vector<2x192xf32>
    %263 = arith.divf %261, %262 : vector<2x192xf32>
    %264 = vector.extract_strided_slice %257 {offsets = [0, 192], sizes = [2, 64], strides = [1, 1]} : vector<2x256xf32> to vector<2x64xf32>
    %265 = math.tanh %264 : vector<2x64xf32>
    %266 = vector.extract_strided_slice %263 {offsets = [0, 0], sizes = [2, 64], strides = [1, 1]} : vector<2x192xf32> to vector<2x64xf32>
    %267 = vector.extract_strided_slice %263 {offsets = [0, 64], sizes = [2, 64], strides = [1, 1]} : vector<2x192xf32> to vector<2x64xf32>
    %268 = vector.extract_strided_slice %263 {offsets = [0, 128], sizes = [2, 64], strides = [1, 1]} : vector<2x192xf32> to vector<2x64xf32>
    %269 = arith.mulf %267, %251 : vector<2x64xf32>
    %270 = arith.mulf %266, %265 : vector<2x64xf32>
    %271 = arith.addf %269, %270 : vector<2x64xf32>
    %272 = math.tanh %271 : vector<2x64xf32>
    %273 = arith.mulf %268, %272 : vector<2x64xf32>
    %274 = vector.extract_strided_slice %211 {offsets = [6, 0], sizes = [2, 256], strides = [1, 1]} : vector<16x256xf32> to vector<2x256xf32>
    %275 = arith.truncf %273 : vector<2x64xf32> to vector<2x64xbf16>
    %cst_88 = arith.constant dense<0.000000e+00> : vector<2x256xf32>
    %276 = tpu.matmul %275, %198, %cst_88 {dimension_numbers = #tpu.dot_dimension_numbers<[1], [0], [0], [1], [0, 0, 1, 1], [], []>} : vector<2x64xbf16>, vector<64x256xbf16>, vector<2x256xf32> -> vector<2x256xf32>
    %277 = arith.addf %274, %276 : vector<2x256xf32>
    %278 = vector.extract_strided_slice %277 {offsets = [0, 0], sizes = [2, 192], strides = [1, 1]} : vector<2x256xf32> to vector<2x192xf32>
    %279 = arith.negf %278 : vector<2x192xf32>
    %280 = math.exp %279 : vector<2x192xf32>
    %cst_89 = arith.constant 1.000000e+00 : f32
    %281 = vector.broadcast %cst_89 : f32 to vector<2x192xf32>
    %282 = arith.addf %281, %280 : vector<2x192xf32>
    %283 = arith.divf %281, %282 : vector<2x192xf32>
    %284 = vector.extract_strided_slice %277 {offsets = [0, 192], sizes = [2, 64], strides = [1, 1]} : vector<2x256xf32> to vector<2x64xf32>
    %285 = math.tanh %284 : vector<2x64xf32>
    %286 = vector.extract_strided_slice %283 {offsets = [0, 0], sizes = [2, 64], strides = [1, 1]} : vector<2x192xf32> to vector<2x64xf32>
    %287 = vector.extract_strided_slice %283 {offsets = [0, 64], sizes = [2, 64], strides = [1, 1]} : vector<2x192xf32> to vector<2x64xf32>
    %288 = vector.extract_strided_slice %283 {offsets = [0, 128], sizes = [2, 64], strides = [1, 1]} : vector<2x192xf32> to vector<2x64xf32>
    %289 = arith.mulf %287, %271 : vector<2x64xf32>
    %290 = arith.mulf %286, %285 : vector<2x64xf32>
    %291 = arith.addf %289, %290 : vector<2x64xf32>
    %292 = math.tanh %291 : vector<2x64xf32>
    %293 = arith.mulf %288, %292 : vector<2x64xf32>
    %294 = vector.extract_strided_slice %211 {offsets = [8, 0], sizes = [2, 256], strides = [1, 1]} : vector<16x256xf32> to vector<2x256xf32>
    %295 = arith.truncf %293 : vector<2x64xf32> to vector<2x64xbf16>
    %cst_90 = arith.constant dense<0.000000e+00> : vector<2x256xf32>
    %296 = tpu.matmul %295, %198, %cst_90 {dimension_numbers = #tpu.dot_dimension_numbers<[1], [0], [0], [1], [0, 0, 1, 1], [], []>} : vector<2x64xbf16>, vector<64x256xbf16>, vector<2x256xf32> -> vector<2x256xf32>
    %297 = arith.addf %294, %296 : vector<2x256xf32>
    %298 = vector.extract_strided_slice %297 {offsets = [0, 0], sizes = [2, 192], strides = [1, 1]} : vector<2x256xf32> to vector<2x192xf32>
    %299 = arith.negf %298 : vector<2x192xf32>
    %300 = math.exp %299 : vector<2x192xf32>
    %cst_91 = arith.constant 1.000000e+00 : f32
    %301 = vector.broadcast %cst_91 : f32 to vector<2x192xf32>
    %302 = arith.addf %301, %300 : vector<2x192xf32>
    %303 = arith.divf %301, %302 : vector<2x192xf32>
    %304 = vector.extract_strided_slice %297 {offsets = [0, 192], sizes = [2, 64], strides = [1, 1]} : vector<2x256xf32> to vector<2x64xf32>
    %305 = math.tanh %304 : vector<2x64xf32>
    %306 = vector.extract_strided_slice %303 {offsets = [0, 0], sizes = [2, 64], strides = [1, 1]} : vector<2x192xf32> to vector<2x64xf32>
    %307 = vector.extract_strided_slice %303 {offsets = [0, 64], sizes = [2, 64], strides = [1, 1]} : vector<2x192xf32> to vector<2x64xf32>
    %308 = vector.extract_strided_slice %303 {offsets = [0, 128], sizes = [2, 64], strides = [1, 1]} : vector<2x192xf32> to vector<2x64xf32>
    %309 = arith.mulf %307, %291 : vector<2x64xf32>
    %310 = arith.mulf %306, %305 : vector<2x64xf32>
    %311 = arith.addf %309, %310 : vector<2x64xf32>
    %312 = math.tanh %311 : vector<2x64xf32>
    %313 = arith.mulf %308, %312 : vector<2x64xf32>
    %314 = vector.extract_strided_slice %211 {offsets = [10, 0], sizes = [2, 256], strides = [1, 1]} : vector<16x256xf32> to vector<2x256xf32>
    %315 = arith.truncf %313 : vector<2x64xf32> to vector<2x64xbf16>
    %cst_92 = arith.constant dense<0.000000e+00> : vector<2x256xf32>
    %316 = tpu.matmul %315, %198, %cst_92 {dimension_numbers = #tpu.dot_dimension_numbers<[1], [0], [0], [1], [0, 0, 1, 1], [], []>} : vector<2x64xbf16>, vector<64x256xbf16>, vector<2x256xf32> -> vector<2x256xf32>
    %317 = arith.addf %314, %316 : vector<2x256xf32>
    %318 = vector.extract_strided_slice %317 {offsets = [0, 0], sizes = [2, 192], strides = [1, 1]} : vector<2x256xf32> to vector<2x192xf32>
    %319 = arith.negf %318 : vector<2x192xf32>
    %320 = math.exp %319 : vector<2x192xf32>
    %cst_93 = arith.constant 1.000000e+00 : f32
    %321 = vector.broadcast %cst_93 : f32 to vector<2x192xf32>
    %322 = arith.addf %321, %320 : vector<2x192xf32>
    %323 = arith.divf %321, %322 : vector<2x192xf32>
    %324 = vector.extract_strided_slice %317 {offsets = [0, 192], sizes = [2, 64], strides = [1, 1]} : vector<2x256xf32> to vector<2x64xf32>
    %325 = math.tanh %324 : vector<2x64xf32>
    %326 = vector.extract_strided_slice %323 {offsets = [0, 0], sizes = [2, 64], strides = [1, 1]} : vector<2x192xf32> to vector<2x64xf32>
    %327 = vector.extract_strided_slice %323 {offsets = [0, 64], sizes = [2, 64], strides = [1, 1]} : vector<2x192xf32> to vector<2x64xf32>
    %328 = vector.extract_strided_slice %323 {offsets = [0, 128], sizes = [2, 64], strides = [1, 1]} : vector<2x192xf32> to vector<2x64xf32>
    %329 = arith.mulf %327, %311 : vector<2x64xf32>
    %330 = arith.mulf %326, %325 : vector<2x64xf32>
    %331 = arith.addf %329, %330 : vector<2x64xf32>
    %332 = math.tanh %331 : vector<2x64xf32>
    %333 = arith.mulf %328, %332 : vector<2x64xf32>
    %334 = vector.extract_strided_slice %211 {offsets = [12, 0], sizes = [2, 256], strides = [1, 1]} : vector<16x256xf32> to vector<2x256xf32>
    %335 = arith.truncf %333 : vector<2x64xf32> to vector<2x64xbf16>
    %cst_94 = arith.constant dense<0.000000e+00> : vector<2x256xf32>
    %336 = tpu.matmul %335, %198, %cst_94 {dimension_numbers = #tpu.dot_dimension_numbers<[1], [0], [0], [1], [0, 0, 1, 1], [], []>} : vector<2x64xbf16>, vector<64x256xbf16>, vector<2x256xf32> -> vector<2x256xf32>
    %337 = arith.addf %334, %336 : vector<2x256xf32>
    %338 = vector.extract_strided_slice %337 {offsets = [0, 0], sizes = [2, 192], strides = [1, 1]} : vector<2x256xf32> to vector<2x192xf32>
    %339 = arith.negf %338 : vector<2x192xf32>
    %340 = math.exp %339 : vector<2x192xf32>
    %cst_95 = arith.constant 1.000000e+00 : f32
    %341 = vector.broadcast %cst_95 : f32 to vector<2x192xf32>
    %342 = arith.addf %341, %340 : vector<2x192xf32>
    %343 = arith.divf %341, %342 : vector<2x192xf32>
    %344 = vector.extract_strided_slice %337 {offsets = [0, 192], sizes = [2, 64], strides = [1, 1]} : vector<2x256xf32> to vector<2x64xf32>
    %345 = math.tanh %344 : vector<2x64xf32>
    %346 = vector.extract_strided_slice %343 {offsets = [0, 0], sizes = [2, 64], strides = [1, 1]} : vector<2x192xf32> to vector<2x64xf32>
    %347 = vector.extract_strided_slice %343 {offsets = [0, 64], sizes = [2, 64], strides = [1, 1]} : vector<2x192xf32> to vector<2x64xf32>
    %348 = vector.extract_strided_slice %343 {offsets = [0, 128], sizes = [2, 64], strides = [1, 1]} : vector<2x192xf32> to vector<2x64xf32>
    %349 = arith.mulf %347, %331 : vector<2x64xf32>
    %350 = arith.mulf %346, %345 : vector<2x64xf32>
    %351 = arith.addf %349, %350 : vector<2x64xf32>
    %352 = math.tanh %351 : vector<2x64xf32>
    %353 = arith.mulf %348, %352 : vector<2x64xf32>
    %354 = vector.extract_strided_slice %211 {offsets = [14, 0], sizes = [2, 256], strides = [1, 1]} : vector<16x256xf32> to vector<2x256xf32>
    %355 = arith.truncf %353 : vector<2x64xf32> to vector<2x64xbf16>
    %cst_96 = arith.constant dense<0.000000e+00> : vector<2x256xf32>
    %356 = tpu.matmul %355, %198, %cst_96 {dimension_numbers = #tpu.dot_dimension_numbers<[1], [0], [0], [1], [0, 0, 1, 1], [], []>} : vector<2x64xbf16>, vector<64x256xbf16>, vector<2x256xf32> -> vector<2x256xf32>
    %357 = arith.addf %354, %356 : vector<2x256xf32>
    %358 = vector.extract_strided_slice %357 {offsets = [0, 0], sizes = [2, 192], strides = [1, 1]} : vector<2x256xf32> to vector<2x192xf32>
    %359 = arith.negf %358 : vector<2x192xf32>
    %360 = math.exp %359 : vector<2x192xf32>
    %cst_97 = arith.constant 1.000000e+00 : f32
    %361 = vector.broadcast %cst_97 : f32 to vector<2x192xf32>
    %362 = arith.addf %361, %360 : vector<2x192xf32>
    %363 = arith.divf %361, %362 : vector<2x192xf32>
    %364 = vector.extract_strided_slice %357 {offsets = [0, 192], sizes = [2, 64], strides = [1, 1]} : vector<2x256xf32> to vector<2x64xf32>
    %365 = math.tanh %364 : vector<2x64xf32>
    %366 = vector.extract_strided_slice %363 {offsets = [0, 0], sizes = [2, 64], strides = [1, 1]} : vector<2x192xf32> to vector<2x64xf32>
    %367 = vector.extract_strided_slice %363 {offsets = [0, 64], sizes = [2, 64], strides = [1, 1]} : vector<2x192xf32> to vector<2x64xf32>
    %368 = vector.extract_strided_slice %363 {offsets = [0, 128], sizes = [2, 64], strides = [1, 1]} : vector<2x192xf32> to vector<2x64xf32>
    %369 = arith.mulf %367, %351 : vector<2x64xf32>
    %370 = arith.mulf %366, %365 : vector<2x64xf32>
    %371 = arith.addf %369, %370 : vector<2x64xf32>
    %372 = math.tanh %371 : vector<2x64xf32>
    %373 = arith.mulf %368, %372 : vector<2x64xf32>
    %374 = tpu.concatenate %233, %253, %273, %293, %313, %333, %353, %373 in 0 : vector<2x64xf32>, vector<2x64xf32>, vector<2x64xf32>, vector<2x64xf32>, vector<2x64xf32>, vector<2x64xf32>, vector<2x64xf32>, vector<2x64xf32> -> vector<16x64xf32>
    %375 = vector.broadcast %196 : vector<1x64xf32> to vector<16x64xf32>
    %376 = arith.mulf %375, %374 : vector<16x64xf32>
    %cst_98 = arith.constant 1.000000e+00 : f32
    %377 = vector.broadcast %cst_98 : f32 to vector<1x64xf32>
    %378 = arith.subf %377, %196 : vector<1x64xf32>
    %cst_99 = arith.constant dense<0.000000e+00> : vector<16x64xf32>
    %379 = tpu.matmul %193, %374, %cst_99 {dimension_numbers = #tpu.dot_dimension_numbers<[1], [0], [0], [1], [0, 0, 1, 1], [], []>} : vector<16x16xf32>, vector<16x64xf32>, vector<16x64xf32> -> vector<16x64xf32>
    %380 = vector.broadcast %378 : vector<1x64xf32> to vector<16x64xf32>
    %381 = arith.mulf %380, %379 : vector<16x64xf32>
    %382 = arith.addf %376, %381 : vector<16x64xf32>
    %c656 = arith.constant 656 : index
    %c0_100 = arith.constant 0 : index
    %383 = vector.load %arg1[%c656, %c0_100] : memref<992x256xbf16, #tpu.memory_space<vmem>>, vector<64x256xbf16>
    %c720 = arith.constant 720 : index
    %c0_101 = arith.constant 0 : index
    %384 = vector.load %arg1[%c720, %c0_101] : memref<992x256xbf16, #tpu.memory_space<vmem>>, vector<64x256xbf16>
    %385 = arith.truncf %382 : vector<16x64xf32> to vector<16x64xbf16>
    %cst_102 = arith.constant dense<0.000000e+00> : vector<16x256xf32>
    %386 = tpu.matmul %385, %383, %cst_102 {dimension_numbers = #tpu.dot_dimension_numbers<[1], [0], [0], [1], [0, 0, 1, 1], [], []>} : vector<16x64xbf16>, vector<64x256xbf16>, vector<16x256xf32> -> vector<16x256xf32>
    %c33 = arith.constant 33 : index
    %c0_103 = arith.constant 0 : index
    %387 = vector.load %arg2[%c33, %c0_103] : memref<135x256xf32, #tpu.memory_space<vmem>>, vector<1x256xf32>
    %388 = vector.broadcast %387 : vector<1x256xf32> to vector<16x256xf32>
    %389 = arith.addf %386, %388 : vector<16x256xf32>
    %cst_104 = arith.constant dense<0.000000e+00> : vector<16x256xf32>
    %390 = tpu.matmul %193, %389, %cst_104 {dimension_numbers = #tpu.dot_dimension_numbers<[1], [0], [0], [1], [0, 0, 1, 1], [], []>} : vector<16x16xf32>, vector<16x256xf32>, vector<16x256xf32> -> vector<16x256xf32>
    %391 = vector.broadcast %195 : vector<1x256xf32> to vector<16x256xf32>
    %392 = arith.mulf %391, %389 : vector<16x256xf32>
    %cst_105 = arith.constant 1.000000e+00 : f32
    %393 = vector.broadcast %cst_105 : f32 to vector<1x256xf32>
    %394 = arith.subf %393, %195 : vector<1x256xf32>
    %395 = vector.broadcast %394 : vector<1x256xf32> to vector<16x256xf32>
    %396 = arith.mulf %395, %390 : vector<16x256xf32>
    %397 = arith.addf %392, %396 : vector<16x256xf32>
    %cst_106 = arith.constant 0.000000e+00 : f32
    %398 = vector.broadcast %cst_106 : f32 to vector<2x64xf32>
    %cst_107 = arith.constant 0.000000e+00 : f32
    %399 = vector.broadcast %cst_107 : f32 to vector<2x64xf32>
    %400 = vector.extract_strided_slice %397 {offsets = [0, 0], sizes = [2, 256], strides = [1, 1]} : vector<16x256xf32> to vector<2x256xf32>
    %401 = arith.truncf %398 : vector<2x64xf32> to vector<2x64xbf16>
    %cst_108 = arith.constant dense<0.000000e+00> : vector<2x256xf32>
    %402 = tpu.matmul %401, %384, %cst_108 {dimension_numbers = #tpu.dot_dimension_numbers<[1], [0], [0], [1], [0, 0, 1, 1], [], []>} : vector<2x64xbf16>, vector<64x256xbf16>, vector<2x256xf32> -> vector<2x256xf32>
    %403 = arith.addf %400, %402 : vector<2x256xf32>
    %404 = vector.extract_strided_slice %403 {offsets = [0, 0], sizes = [2, 192], strides = [1, 1]} : vector<2x256xf32> to vector<2x192xf32>
    %405 = arith.negf %404 : vector<2x192xf32>
    %406 = math.exp %405 : vector<2x192xf32>
    %cst_109 = arith.constant 1.000000e+00 : f32
    %407 = vector.broadcast %cst_109 : f32 to vector<2x192xf32>
    %408 = arith.addf %407, %406 : vector<2x192xf32>
    %409 = arith.divf %407, %408 : vector<2x192xf32>
    %410 = vector.extract_strided_slice %403 {offsets = [0, 192], sizes = [2, 64], strides = [1, 1]} : vector<2x256xf32> to vector<2x64xf32>
    %411 = math.tanh %410 : vector<2x64xf32>
    %412 = vector.extract_strided_slice %409 {offsets = [0, 0], sizes = [2, 64], strides = [1, 1]} : vector<2x192xf32> to vector<2x64xf32>
    %413 = vector.extract_strided_slice %409 {offsets = [0, 64], sizes = [2, 64], strides = [1, 1]} : vector<2x192xf32> to vector<2x64xf32>
    %414 = vector.extract_strided_slice %409 {offsets = [0, 128], sizes = [2, 64], strides = [1, 1]} : vector<2x192xf32> to vector<2x64xf32>
    %415 = arith.mulf %413, %399 : vector<2x64xf32>
    %416 = arith.mulf %412, %411 : vector<2x64xf32>
    %417 = arith.addf %415, %416 : vector<2x64xf32>
    %418 = math.tanh %417 : vector<2x64xf32>
    %419 = arith.mulf %414, %418 : vector<2x64xf32>
    %420 = vector.extract_strided_slice %397 {offsets = [2, 0], sizes = [2, 256], strides = [1, 1]} : vector<16x256xf32> to vector<2x256xf32>
    %421 = arith.truncf %419 : vector<2x64xf32> to vector<2x64xbf16>
    %cst_110 = arith.constant dense<0.000000e+00> : vector<2x256xf32>
    %422 = tpu.matmul %421, %384, %cst_110 {dimension_numbers = #tpu.dot_dimension_numbers<[1], [0], [0], [1], [0, 0, 1, 1], [], []>} : vector<2x64xbf16>, vector<64x256xbf16>, vector<2x256xf32> -> vector<2x256xf32>
    %423 = arith.addf %420, %422 : vector<2x256xf32>
    %424 = vector.extract_strided_slice %423 {offsets = [0, 0], sizes = [2, 192], strides = [1, 1]} : vector<2x256xf32> to vector<2x192xf32>
    %425 = arith.negf %424 : vector<2x192xf32>
    %426 = math.exp %425 : vector<2x192xf32>
    %cst_111 = arith.constant 1.000000e+00 : f32
    %427 = vector.broadcast %cst_111 : f32 to vector<2x192xf32>
    %428 = arith.addf %427, %426 : vector<2x192xf32>
    %429 = arith.divf %427, %428 : vector<2x192xf32>
    %430 = vector.extract_strided_slice %423 {offsets = [0, 192], sizes = [2, 64], strides = [1, 1]} : vector<2x256xf32> to vector<2x64xf32>
    %431 = math.tanh %430 : vector<2x64xf32>
    %432 = vector.extract_strided_slice %429 {offsets = [0, 0], sizes = [2, 64], strides = [1, 1]} : vector<2x192xf32> to vector<2x64xf32>
    %433 = vector.extract_strided_slice %429 {offsets = [0, 64], sizes = [2, 64], strides = [1, 1]} : vector<2x192xf32> to vector<2x64xf32>
    %434 = vector.extract_strided_slice %429 {offsets = [0, 128], sizes = [2, 64], strides = [1, 1]} : vector<2x192xf32> to vector<2x64xf32>
    %435 = arith.mulf %433, %417 : vector<2x64xf32>
    %436 = arith.mulf %432, %431 : vector<2x64xf32>
    %437 = arith.addf %435, %436 : vector<2x64xf32>
    %438 = math.tanh %437 : vector<2x64xf32>
    %439 = arith.mulf %434, %438 : vector<2x64xf32>
    %440 = vector.extract_strided_slice %397 {offsets = [4, 0], sizes = [2, 256], strides = [1, 1]} : vector<16x256xf32> to vector<2x256xf32>
    %441 = arith.truncf %439 : vector<2x64xf32> to vector<2x64xbf16>
    %cst_112 = arith.constant dense<0.000000e+00> : vector<2x256xf32>
    %442 = tpu.matmul %441, %384, %cst_112 {dimension_numbers = #tpu.dot_dimension_numbers<[1], [0], [0], [1], [0, 0, 1, 1], [], []>} : vector<2x64xbf16>, vector<64x256xbf16>, vector<2x256xf32> -> vector<2x256xf32>
    %443 = arith.addf %440, %442 : vector<2x256xf32>
    %444 = vector.extract_strided_slice %443 {offsets = [0, 0], sizes = [2, 192], strides = [1, 1]} : vector<2x256xf32> to vector<2x192xf32>
    %445 = arith.negf %444 : vector<2x192xf32>
    %446 = math.exp %445 : vector<2x192xf32>
    %cst_113 = arith.constant 1.000000e+00 : f32
    %447 = vector.broadcast %cst_113 : f32 to vector<2x192xf32>
    %448 = arith.addf %447, %446 : vector<2x192xf32>
    %449 = arith.divf %447, %448 : vector<2x192xf32>
    %450 = vector.extract_strided_slice %443 {offsets = [0, 192], sizes = [2, 64], strides = [1, 1]} : vector<2x256xf32> to vector<2x64xf32>
    %451 = math.tanh %450 : vector<2x64xf32>
    %452 = vector.extract_strided_slice %449 {offsets = [0, 0], sizes = [2, 64], strides = [1, 1]} : vector<2x192xf32> to vector<2x64xf32>
    %453 = vector.extract_strided_slice %449 {offsets = [0, 64], sizes = [2, 64], strides = [1, 1]} : vector<2x192xf32> to vector<2x64xf32>
    %454 = vector.extract_strided_slice %449 {offsets = [0, 128], sizes = [2, 64], strides = [1, 1]} : vector<2x192xf32> to vector<2x64xf32>
    %455 = arith.mulf %453, %437 : vector<2x64xf32>
    %456 = arith.mulf %452, %451 : vector<2x64xf32>
    %457 = arith.addf %455, %456 : vector<2x64xf32>
    %458 = math.tanh %457 : vector<2x64xf32>
    %459 = arith.mulf %454, %458 : vector<2x64xf32>
    %460 = vector.extract_strided_slice %397 {offsets = [6, 0], sizes = [2, 256], strides = [1, 1]} : vector<16x256xf32> to vector<2x256xf32>
    %461 = arith.truncf %459 : vector<2x64xf32> to vector<2x64xbf16>
    %cst_114 = arith.constant dense<0.000000e+00> : vector<2x256xf32>
    %462 = tpu.matmul %461, %384, %cst_114 {dimension_numbers = #tpu.dot_dimension_numbers<[1], [0], [0], [1], [0, 0, 1, 1], [], []>} : vector<2x64xbf16>, vector<64x256xbf16>, vector<2x256xf32> -> vector<2x256xf32>
    %463 = arith.addf %460, %462 : vector<2x256xf32>
    %464 = vector.extract_strided_slice %463 {offsets = [0, 0], sizes = [2, 192], strides = [1, 1]} : vector<2x256xf32> to vector<2x192xf32>
    %465 = arith.negf %464 : vector<2x192xf32>
    %466 = math.exp %465 : vector<2x192xf32>
    %cst_115 = arith.constant 1.000000e+00 : f32
    %467 = vector.broadcast %cst_115 : f32 to vector<2x192xf32>
    %468 = arith.addf %467, %466 : vector<2x192xf32>
    %469 = arith.divf %467, %468 : vector<2x192xf32>
    %470 = vector.extract_strided_slice %463 {offsets = [0, 192], sizes = [2, 64], strides = [1, 1]} : vector<2x256xf32> to vector<2x64xf32>
    %471 = math.tanh %470 : vector<2x64xf32>
    %472 = vector.extract_strided_slice %469 {offsets = [0, 0], sizes = [2, 64], strides = [1, 1]} : vector<2x192xf32> to vector<2x64xf32>
    %473 = vector.extract_strided_slice %469 {offsets = [0, 64], sizes = [2, 64], strides = [1, 1]} : vector<2x192xf32> to vector<2x64xf32>
    %474 = vector.extract_strided_slice %469 {offsets = [0, 128], sizes = [2, 64], strides = [1, 1]} : vector<2x192xf32> to vector<2x64xf32>
    %475 = arith.mulf %473, %457 : vector<2x64xf32>
    %476 = arith.mulf %472, %471 : vector<2x64xf32>
    %477 = arith.addf %475, %476 : vector<2x64xf32>
    %478 = math.tanh %477 : vector<2x64xf32>
    %479 = arith.mulf %474, %478 : vector<2x64xf32>
    %480 = vector.extract_strided_slice %397 {offsets = [8, 0], sizes = [2, 256], strides = [1, 1]} : vector<16x256xf32> to vector<2x256xf32>
    %481 = arith.truncf %479 : vector<2x64xf32> to vector<2x64xbf16>
    %cst_116 = arith.constant dense<0.000000e+00> : vector<2x256xf32>
    %482 = tpu.matmul %481, %384, %cst_116 {dimension_numbers = #tpu.dot_dimension_numbers<[1], [0], [0], [1], [0, 0, 1, 1], [], []>} : vector<2x64xbf16>, vector<64x256xbf16>, vector<2x256xf32> -> vector<2x256xf32>
    %483 = arith.addf %480, %482 : vector<2x256xf32>
    %484 = vector.extract_strided_slice %483 {offsets = [0, 0], sizes = [2, 192], strides = [1, 1]} : vector<2x256xf32> to vector<2x192xf32>
    %485 = arith.negf %484 : vector<2x192xf32>
    %486 = math.exp %485 : vector<2x192xf32>
    %cst_117 = arith.constant 1.000000e+00 : f32
    %487 = vector.broadcast %cst_117 : f32 to vector<2x192xf32>
    %488 = arith.addf %487, %486 : vector<2x192xf32>
    %489 = arith.divf %487, %488 : vector<2x192xf32>
    %490 = vector.extract_strided_slice %483 {offsets = [0, 192], sizes = [2, 64], strides = [1, 1]} : vector<2x256xf32> to vector<2x64xf32>
    %491 = math.tanh %490 : vector<2x64xf32>
    %492 = vector.extract_strided_slice %489 {offsets = [0, 0], sizes = [2, 64], strides = [1, 1]} : vector<2x192xf32> to vector<2x64xf32>
    %493 = vector.extract_strided_slice %489 {offsets = [0, 64], sizes = [2, 64], strides = [1, 1]} : vector<2x192xf32> to vector<2x64xf32>
    %494 = vector.extract_strided_slice %489 {offsets = [0, 128], sizes = [2, 64], strides = [1, 1]} : vector<2x192xf32> to vector<2x64xf32>
    %495 = arith.mulf %493, %477 : vector<2x64xf32>
    %496 = arith.mulf %492, %491 : vector<2x64xf32>
    %497 = arith.addf %495, %496 : vector<2x64xf32>
    %498 = math.tanh %497 : vector<2x64xf32>
    %499 = arith.mulf %494, %498 : vector<2x64xf32>
    %500 = vector.extract_strided_slice %397 {offsets = [10, 0], sizes = [2, 256], strides = [1, 1]} : vector<16x256xf32> to vector<2x256xf32>
    %501 = arith.truncf %499 : vector<2x64xf32> to vector<2x64xbf16>
    %cst_118 = arith.constant dense<0.000000e+00> : vector<2x256xf32>
    %502 = tpu.matmul %501, %384, %cst_118 {dimension_numbers = #tpu.dot_dimension_numbers<[1], [0], [0], [1], [0, 0, 1, 1], [], []>} : vector<2x64xbf16>, vector<64x256xbf16>, vector<2x256xf32> -> vector<2x256xf32>
    %503 = arith.addf %500, %502 : vector<2x256xf32>
    %504 = vector.extract_strided_slice %503 {offsets = [0, 0], sizes = [2, 192], strides = [1, 1]} : vector<2x256xf32> to vector<2x192xf32>
    %505 = arith.negf %504 : vector<2x192xf32>
    %506 = math.exp %505 : vector<2x192xf32>
    %cst_119 = arith.constant 1.000000e+00 : f32
    %507 = vector.broadcast %cst_119 : f32 to vector<2x192xf32>
    %508 = arith.addf %507, %506 : vector<2x192xf32>
    %509 = arith.divf %507, %508 : vector<2x192xf32>
    %510 = vector.extract_strided_slice %503 {offsets = [0, 192], sizes = [2, 64], strides = [1, 1]} : vector<2x256xf32> to vector<2x64xf32>
    %511 = math.tanh %510 : vector<2x64xf32>
    %512 = vector.extract_strided_slice %509 {offsets = [0, 0], sizes = [2, 64], strides = [1, 1]} : vector<2x192xf32> to vector<2x64xf32>
    %513 = vector.extract_strided_slice %509 {offsets = [0, 64], sizes = [2, 64], strides = [1, 1]} : vector<2x192xf32> to vector<2x64xf32>
    %514 = vector.extract_strided_slice %509 {offsets = [0, 128], sizes = [2, 64], strides = [1, 1]} : vector<2x192xf32> to vector<2x64xf32>
    %515 = arith.mulf %513, %497 : vector<2x64xf32>
    %516 = arith.mulf %512, %511 : vector<2x64xf32>
    %517 = arith.addf %515, %516 : vector<2x64xf32>
    %518 = math.tanh %517 : vector<2x64xf32>
    %519 = arith.mulf %514, %518 : vector<2x64xf32>
    %520 = vector.extract_strided_slice %397 {offsets = [12, 0], sizes = [2, 256], strides = [1, 1]} : vector<16x256xf32> to vector<2x256xf32>
    %521 = arith.truncf %519 : vector<2x64xf32> to vector<2x64xbf16>
    %cst_120 = arith.constant dense<0.000000e+00> : vector<2x256xf32>
    %522 = tpu.matmul %521, %384, %cst_120 {dimension_numbers = #tpu.dot_dimension_numbers<[1], [0], [0], [1], [0, 0, 1, 1], [], []>} : vector<2x64xbf16>, vector<64x256xbf16>, vector<2x256xf32> -> vector<2x256xf32>
    %523 = arith.addf %520, %522 : vector<2x256xf32>
    %524 = vector.extract_strided_slice %523 {offsets = [0, 0], sizes = [2, 192], strides = [1, 1]} : vector<2x256xf32> to vector<2x192xf32>
    %525 = arith.negf %524 : vector<2x192xf32>
    %526 = math.exp %525 : vector<2x192xf32>
    %cst_121 = arith.constant 1.000000e+00 : f32
    %527 = vector.broadcast %cst_121 : f32 to vector<2x192xf32>
    %528 = arith.addf %527, %526 : vector<2x192xf32>
    %529 = arith.divf %527, %528 : vector<2x192xf32>
    %530 = vector.extract_strided_slice %523 {offsets = [0, 192], sizes = [2, 64], strides = [1, 1]} : vector<2x256xf32> to vector<2x64xf32>
    %531 = math.tanh %530 : vector<2x64xf32>
    %532 = vector.extract_strided_slice %529 {offsets = [0, 0], sizes = [2, 64], strides = [1, 1]} : vector<2x192xf32> to vector<2x64xf32>
    %533 = vector.extract_strided_slice %529 {offsets = [0, 64], sizes = [2, 64], strides = [1, 1]} : vector<2x192xf32> to vector<2x64xf32>
    %534 = vector.extract_strided_slice %529 {offsets = [0, 128], sizes = [2, 64], strides = [1, 1]} : vector<2x192xf32> to vector<2x64xf32>
    %535 = arith.mulf %533, %517 : vector<2x64xf32>
    %536 = arith.mulf %532, %531 : vector<2x64xf32>
    %537 = arith.addf %535, %536 : vector<2x64xf32>
    %538 = math.tanh %537 : vector<2x64xf32>
    %539 = arith.mulf %534, %538 : vector<2x64xf32>
    %540 = vector.extract_strided_slice %397 {offsets = [14, 0], sizes = [2, 256], strides = [1, 1]} : vector<16x256xf32> to vector<2x256xf32>
    %541 = arith.truncf %539 : vector<2x64xf32> to vector<2x64xbf16>
    %cst_122 = arith.constant dense<0.000000e+00> : vector<2x256xf32>
    %542 = tpu.matmul %541, %384, %cst_122 {dimension_numbers = #tpu.dot_dimension_numbers<[1], [0], [0], [1], [0, 0, 1, 1], [], []>} : vector<2x64xbf16>, vector<64x256xbf16>, vector<2x256xf32> -> vector<2x256xf32>
    %543 = arith.addf %540, %542 : vector<2x256xf32>
    %544 = vector.extract_strided_slice %543 {offsets = [0, 0], sizes = [2, 192], strides = [1, 1]} : vector<2x256xf32> to vector<2x192xf32>
    %545 = arith.negf %544 : vector<2x192xf32>
    %546 = math.exp %545 : vector<2x192xf32>
    %cst_123 = arith.constant 1.000000e+00 : f32
    %547 = vector.broadcast %cst_123 : f32 to vector<2x192xf32>
    %548 = arith.addf %547, %546 : vector<2x192xf32>
    %549 = arith.divf %547, %548 : vector<2x192xf32>
    %550 = vector.extract_strided_slice %543 {offsets = [0, 192], sizes = [2, 64], strides = [1, 1]} : vector<2x256xf32> to vector<2x64xf32>
    %551 = math.tanh %550 : vector<2x64xf32>
    %552 = vector.extract_strided_slice %549 {offsets = [0, 0], sizes = [2, 64], strides = [1, 1]} : vector<2x192xf32> to vector<2x64xf32>
    %553 = vector.extract_strided_slice %549 {offsets = [0, 64], sizes = [2, 64], strides = [1, 1]} : vector<2x192xf32> to vector<2x64xf32>
    %554 = vector.extract_strided_slice %549 {offsets = [0, 128], sizes = [2, 64], strides = [1, 1]} : vector<2x192xf32> to vector<2x64xf32>
    %555 = arith.mulf %553, %537 : vector<2x64xf32>
    %556 = arith.mulf %552, %551 : vector<2x64xf32>
    %557 = arith.addf %555, %556 : vector<2x64xf32>
    %558 = math.tanh %557 : vector<2x64xf32>
    %559 = arith.mulf %554, %558 : vector<2x64xf32>
    %560 = tpu.concatenate %419, %439, %459, %479, %499, %519, %539, %559 in 0 : vector<2x64xf32>, vector<2x64xf32>, vector<2x64xf32>, vector<2x64xf32>, vector<2x64xf32>, vector<2x64xf32>, vector<2x64xf32>, vector<2x64xf32> -> vector<16x64xf32>
    %561 = vector.broadcast %196 : vector<1x64xf32> to vector<16x64xf32>
    %562 = arith.mulf %561, %560 : vector<16x64xf32>
    %cst_124 = arith.constant 1.000000e+00 : f32
    %563 = vector.broadcast %cst_124 : f32 to vector<1x64xf32>
    %564 = arith.subf %563, %196 : vector<1x64xf32>
    %cst_125 = arith.constant dense<0.000000e+00> : vector<16x64xf32>
    %565 = tpu.matmul %193, %560, %cst_125 {dimension_numbers = #tpu.dot_dimension_numbers<[1], [0], [0], [1], [0, 0, 1, 1], [], []>} : vector<16x16xf32>, vector<16x64xf32>, vector<16x64xf32> -> vector<16x64xf32>
    %566 = vector.broadcast %564 : vector<1x64xf32> to vector<16x64xf32>
    %567 = arith.mulf %566, %565 : vector<16x64xf32>
    %568 = arith.addf %562, %567 : vector<16x64xf32>
    %c784 = arith.constant 784 : index
    %c0_126 = arith.constant 0 : index
    %569 = vector.load %arg1[%c784, %c0_126] : memref<992x256xbf16, #tpu.memory_space<vmem>>, vector<64x256xbf16>
    %c848 = arith.constant 848 : index
    %c0_127 = arith.constant 0 : index
    %570 = vector.load %arg1[%c848, %c0_127] : memref<992x256xbf16, #tpu.memory_space<vmem>>, vector<64x256xbf16>
    %571 = arith.truncf %568 : vector<16x64xf32> to vector<16x64xbf16>
    %cst_128 = arith.constant dense<0.000000e+00> : vector<16x256xf32>
    %572 = tpu.matmul %571, %569, %cst_128 {dimension_numbers = #tpu.dot_dimension_numbers<[1], [0], [0], [1], [0, 0, 1, 1], [], []>} : vector<16x64xbf16>, vector<64x256xbf16>, vector<16x256xf32> -> vector<16x256xf32>
    %c34 = arith.constant 34 : index
    %c0_129 = arith.constant 0 : index
    %573 = vector.load %arg2[%c34, %c0_129] : memref<135x256xf32, #tpu.memory_space<vmem>>, vector<1x256xf32>
    %574 = vector.broadcast %573 : vector<1x256xf32> to vector<16x256xf32>
    %575 = arith.addf %572, %574 : vector<16x256xf32>
    %cst_130 = arith.constant dense<0.000000e+00> : vector<16x256xf32>
    %576 = tpu.matmul %193, %575, %cst_130 {dimension_numbers = #tpu.dot_dimension_numbers<[1], [0], [0], [1], [0, 0, 1, 1], [], []>} : vector<16x16xf32>, vector<16x256xf32>, vector<16x256xf32> -> vector<16x256xf32>
    %577 = vector.broadcast %195 : vector<1x256xf32> to vector<16x256xf32>
    %578 = arith.mulf %577, %575 : vector<16x256xf32>
    %cst_131 = arith.constant 1.000000e+00 : f32
    %579 = vector.broadcast %cst_131 : f32 to vector<1x256xf32>
    %580 = arith.subf %579, %195 : vector<1x256xf32>
    %581 = vector.broadcast %580 : vector<1x256xf32> to vector<16x256xf32>
    %582 = arith.mulf %581, %576 : vector<16x256xf32>
    %583 = arith.addf %578, %582 : vector<16x256xf32>
    %cst_132 = arith.constant 0.000000e+00 : f32
    %584 = vector.broadcast %cst_132 : f32 to vector<2x64xf32>
    %cst_133 = arith.constant 0.000000e+00 : f32
    %585 = vector.broadcast %cst_133 : f32 to vector<2x64xf32>
    %586 = vector.extract_strided_slice %583 {offsets = [0, 0], sizes = [2, 256], strides = [1, 1]} : vector<16x256xf32> to vector<2x256xf32>
    %587 = arith.truncf %584 : vector<2x64xf32> to vector<2x64xbf16>
    %cst_134 = arith.constant dense<0.000000e+00> : vector<2x256xf32>
    %588 = tpu.matmul %587, %570, %cst_134 {dimension_numbers = #tpu.dot_dimension_numbers<[1], [0], [0], [1], [0, 0, 1, 1], [], []>} : vector<2x64xbf16>, vector<64x256xbf16>, vector<2x256xf32> -> vector<2x256xf32>
    %589 = arith.addf %586, %588 : vector<2x256xf32>
    %590 = vector.extract_strided_slice %589 {offsets = [0, 0], sizes = [2, 192], strides = [1, 1]} : vector<2x256xf32> to vector<2x192xf32>
    %591 = arith.negf %590 : vector<2x192xf32>
    %592 = math.exp %591 : vector<2x192xf32>
    %cst_135 = arith.constant 1.000000e+00 : f32
    %593 = vector.broadcast %cst_135 : f32 to vector<2x192xf32>
    %594 = arith.addf %593, %592 : vector<2x192xf32>
    %595 = arith.divf %593, %594 : vector<2x192xf32>
    %596 = vector.extract_strided_slice %589 {offsets = [0, 192], sizes = [2, 64], strides = [1, 1]} : vector<2x256xf32> to vector<2x64xf32>
    %597 = math.tanh %596 : vector<2x64xf32>
    %598 = vector.extract_strided_slice %595 {offsets = [0, 0], sizes = [2, 64], strides = [1, 1]} : vector<2x192xf32> to vector<2x64xf32>
    %599 = vector.extract_strided_slice %595 {offsets = [0, 64], sizes = [2, 64], strides = [1, 1]} : vector<2x192xf32> to vector<2x64xf32>
    %600 = vector.extract_strided_slice %595 {offsets = [0, 128], sizes = [2, 64], strides = [1, 1]} : vector<2x192xf32> to vector<2x64xf32>
    %601 = arith.mulf %599, %585 : vector<2x64xf32>
    %602 = arith.mulf %598, %597 : vector<2x64xf32>
    %603 = arith.addf %601, %602 : vector<2x64xf32>
    %604 = math.tanh %603 : vector<2x64xf32>
    %605 = arith.mulf %600, %604 : vector<2x64xf32>
    %606 = vector.extract_strided_slice %583 {offsets = [2, 0], sizes = [2, 256], strides = [1, 1]} : vector<16x256xf32> to vector<2x256xf32>
    %607 = arith.truncf %605 : vector<2x64xf32> to vector<2x64xbf16>
    %cst_136 = arith.constant dense<0.000000e+00> : vector<2x256xf32>
    %608 = tpu.matmul %607, %570, %cst_136 {dimension_numbers = #tpu.dot_dimension_numbers<[1], [0], [0], [1], [0, 0, 1, 1], [], []>} : vector<2x64xbf16>, vector<64x256xbf16>, vector<2x256xf32> -> vector<2x256xf32>
    %609 = arith.addf %606, %608 : vector<2x256xf32>
    %610 = vector.extract_strided_slice %609 {offsets = [0, 0], sizes = [2, 192], strides = [1, 1]} : vector<2x256xf32> to vector<2x192xf32>
    %611 = arith.negf %610 : vector<2x192xf32>
    %612 = math.exp %611 : vector<2x192xf32>
    %cst_137 = arith.constant 1.000000e+00 : f32
    %613 = vector.broadcast %cst_137 : f32 to vector<2x192xf32>
    %614 = arith.addf %613, %612 : vector<2x192xf32>
    %615 = arith.divf %613, %614 : vector<2x192xf32>
    %616 = vector.extract_strided_slice %609 {offsets = [0, 192], sizes = [2, 64], strides = [1, 1]} : vector<2x256xf32> to vector<2x64xf32>
    %617 = math.tanh %616 : vector<2x64xf32>
    %618 = vector.extract_strided_slice %615 {offsets = [0, 0], sizes = [2, 64], strides = [1, 1]} : vector<2x192xf32> to vector<2x64xf32>
    %619 = vector.extract_strided_slice %615 {offsets = [0, 64], sizes = [2, 64], strides = [1, 1]} : vector<2x192xf32> to vector<2x64xf32>
    %620 = vector.extract_strided_slice %615 {offsets = [0, 128], sizes = [2, 64], strides = [1, 1]} : vector<2x192xf32> to vector<2x64xf32>
    %621 = arith.mulf %619, %603 : vector<2x64xf32>
    %622 = arith.mulf %618, %617 : vector<2x64xf32>
    %623 = arith.addf %621, %622 : vector<2x64xf32>
    %624 = math.tanh %623 : vector<2x64xf32>
    %625 = arith.mulf %620, %624 : vector<2x64xf32>
    %626 = vector.extract_strided_slice %583 {offsets = [4, 0], sizes = [2, 256], strides = [1, 1]} : vector<16x256xf32> to vector<2x256xf32>
    %627 = arith.truncf %625 : vector<2x64xf32> to vector<2x64xbf16>
    %cst_138 = arith.constant dense<0.000000e+00> : vector<2x256xf32>
    %628 = tpu.matmul %627, %570, %cst_138 {dimension_numbers = #tpu.dot_dimension_numbers<[1], [0], [0], [1], [0, 0, 1, 1], [], []>} : vector<2x64xbf16>, vector<64x256xbf16>, vector<2x256xf32> -> vector<2x256xf32>
    %629 = arith.addf %626, %628 : vector<2x256xf32>
    %630 = vector.extract_strided_slice %629 {offsets = [0, 0], sizes = [2, 192], strides = [1, 1]} : vector<2x256xf32> to vector<2x192xf32>
    %631 = arith.negf %630 : vector<2x192xf32>
    %632 = math.exp %631 : vector<2x192xf32>
    %cst_139 = arith.constant 1.000000e+00 : f32
    %633 = vector.broadcast %cst_139 : f32 to vector<2x192xf32>
    %634 = arith.addf %633, %632 : vector<2x192xf32>
    %635 = arith.divf %633, %634 : vector<2x192xf32>
    %636 = vector.extract_strided_slice %629 {offsets = [0, 192], sizes = [2, 64], strides = [1, 1]} : vector<2x256xf32> to vector<2x64xf32>
    %637 = math.tanh %636 : vector<2x64xf32>
    %638 = vector.extract_strided_slice %635 {offsets = [0, 0], sizes = [2, 64], strides = [1, 1]} : vector<2x192xf32> to vector<2x64xf32>
    %639 = vector.extract_strided_slice %635 {offsets = [0, 64], sizes = [2, 64], strides = [1, 1]} : vector<2x192xf32> to vector<2x64xf32>
    %640 = vector.extract_strided_slice %635 {offsets = [0, 128], sizes = [2, 64], strides = [1, 1]} : vector<2x192xf32> to vector<2x64xf32>
    %641 = arith.mulf %639, %623 : vector<2x64xf32>
    %642 = arith.mulf %638, %637 : vector<2x64xf32>
    %643 = arith.addf %641, %642 : vector<2x64xf32>
    %644 = math.tanh %643 : vector<2x64xf32>
    %645 = arith.mulf %640, %644 : vector<2x64xf32>
    %646 = vector.extract_strided_slice %583 {offsets = [6, 0], sizes = [2, 256], strides = [1, 1]} : vector<16x256xf32> to vector<2x256xf32>
    %647 = arith.truncf %645 : vector<2x64xf32> to vector<2x64xbf16>
    %cst_140 = arith.constant dense<0.000000e+00> : vector<2x256xf32>
    %648 = tpu.matmul %647, %570, %cst_140 {dimension_numbers = #tpu.dot_dimension_numbers<[1], [0], [0], [1], [0, 0, 1, 1], [], []>} : vector<2x64xbf16>, vector<64x256xbf16>, vector<2x256xf32> -> vector<2x256xf32>
    %649 = arith.addf %646, %648 : vector<2x256xf32>
    %650 = vector.extract_strided_slice %649 {offsets = [0, 0], sizes = [2, 192], strides = [1, 1]} : vector<2x256xf32> to vector<2x192xf32>
    %651 = arith.negf %650 : vector<2x192xf32>
    %652 = math.exp %651 : vector<2x192xf32>
    %cst_141 = arith.constant 1.000000e+00 : f32
    %653 = vector.broadcast %cst_141 : f32 to vector<2x192xf32>
    %654 = arith.addf %653, %652 : vector<2x192xf32>
    %655 = arith.divf %653, %654 : vector<2x192xf32>
    %656 = vector.extract_strided_slice %649 {offsets = [0, 192], sizes = [2, 64], strides = [1, 1]} : vector<2x256xf32> to vector<2x64xf32>
    %657 = math.tanh %656 : vector<2x64xf32>
    %658 = vector.extract_strided_slice %655 {offsets = [0, 0], sizes = [2, 64], strides = [1, 1]} : vector<2x192xf32> to vector<2x64xf32>
    %659 = vector.extract_strided_slice %655 {offsets = [0, 64], sizes = [2, 64], strides = [1, 1]} : vector<2x192xf32> to vector<2x64xf32>
    %660 = vector.extract_strided_slice %655 {offsets = [0, 128], sizes = [2, 64], strides = [1, 1]} : vector<2x192xf32> to vector<2x64xf32>
    %661 = arith.mulf %659, %643 : vector<2x64xf32>
    %662 = arith.mulf %658, %657 : vector<2x64xf32>
    %663 = arith.addf %661, %662 : vector<2x64xf32>
    %664 = math.tanh %663 : vector<2x64xf32>
    %665 = arith.mulf %660, %664 : vector<2x64xf32>
    %666 = vector.extract_strided_slice %583 {offsets = [8, 0], sizes = [2, 256], strides = [1, 1]} : vector<16x256xf32> to vector<2x256xf32>
    %667 = arith.truncf %665 : vector<2x64xf32> to vector<2x64xbf16>
    %cst_142 = arith.constant dense<0.000000e+00> : vector<2x256xf32>
    %668 = tpu.matmul %667, %570, %cst_142 {dimension_numbers = #tpu.dot_dimension_numbers<[1], [0], [0], [1], [0, 0, 1, 1], [], []>} : vector<2x64xbf16>, vector<64x256xbf16>, vector<2x256xf32> -> vector<2x256xf32>
    %669 = arith.addf %666, %668 : vector<2x256xf32>
    %670 = vector.extract_strided_slice %669 {offsets = [0, 0], sizes = [2, 192], strides = [1, 1]} : vector<2x256xf32> to vector<2x192xf32>
    %671 = arith.negf %670 : vector<2x192xf32>
    %672 = math.exp %671 : vector<2x192xf32>
    %cst_143 = arith.constant 1.000000e+00 : f32
    %673 = vector.broadcast %cst_143 : f32 to vector<2x192xf32>
    %674 = arith.addf %673, %672 : vector<2x192xf32>
    %675 = arith.divf %673, %674 : vector<2x192xf32>
    %676 = vector.extract_strided_slice %669 {offsets = [0, 192], sizes = [2, 64], strides = [1, 1]} : vector<2x256xf32> to vector<2x64xf32>
    %677 = math.tanh %676 : vector<2x64xf32>
    %678 = vector.extract_strided_slice %675 {offsets = [0, 0], sizes = [2, 64], strides = [1, 1]} : vector<2x192xf32> to vector<2x64xf32>
    %679 = vector.extract_strided_slice %675 {offsets = [0, 64], sizes = [2, 64], strides = [1, 1]} : vector<2x192xf32> to vector<2x64xf32>
    %680 = vector.extract_strided_slice %675 {offsets = [0, 128], sizes = [2, 64], strides = [1, 1]} : vector<2x192xf32> to vector<2x64xf32>
    %681 = arith.mulf %679, %663 : vector<2x64xf32>
    %682 = arith.mulf %678, %677 : vector<2x64xf32>
    %683 = arith.addf %681, %682 : vector<2x64xf32>
    %684 = math.tanh %683 : vector<2x64xf32>
    %685 = arith.mulf %680, %684 : vector<2x64xf32>
    %686 = vector.extract_strided_slice %583 {offsets = [10, 0], sizes = [2, 256], strides = [1, 1]} : vector<16x256xf32> to vector<2x256xf32>
    %687 = arith.truncf %685 : vector<2x64xf32> to vector<2x64xbf16>
    %cst_144 = arith.constant dense<0.000000e+00> : vector<2x256xf32>
    %688 = tpu.matmul %687, %570, %cst_144 {dimension_numbers = #tpu.dot_dimension_numbers<[1], [0], [0], [1], [0, 0, 1, 1], [], []>} : vector<2x64xbf16>, vector<64x256xbf16>, vector<2x256xf32> -> vector<2x256xf32>
    %689 = arith.addf %686, %688 : vector<2x256xf32>
    %690 = vector.extract_strided_slice %689 {offsets = [0, 0], sizes = [2, 192], strides = [1, 1]} : vector<2x256xf32> to vector<2x192xf32>
    %691 = arith.negf %690 : vector<2x192xf32>
    %692 = math.exp %691 : vector<2x192xf32>
    %cst_145 = arith.constant 1.000000e+00 : f32
    %693 = vector.broadcast %cst_145 : f32 to vector<2x192xf32>
    %694 = arith.addf %693, %692 : vector<2x192xf32>
    %695 = arith.divf %693, %694 : vector<2x192xf32>
    %696 = vector.extract_strided_slice %689 {offsets = [0, 192], sizes = [2, 64], strides = [1, 1]} : vector<2x256xf32> to vector<2x64xf32>
    %697 = math.tanh %696 : vector<2x64xf32>
    %698 = vector.extract_strided_slice %695 {offsets = [0, 0], sizes = [2, 64], strides = [1, 1]} : vector<2x192xf32> to vector<2x64xf32>
    %699 = vector.extract_strided_slice %695 {offsets = [0, 64], sizes = [2, 64], strides = [1, 1]} : vector<2x192xf32> to vector<2x64xf32>
    %700 = vector.extract_strided_slice %695 {offsets = [0, 128], sizes = [2, 64], strides = [1, 1]} : vector<2x192xf32> to vector<2x64xf32>
    %701 = arith.mulf %699, %683 : vector<2x64xf32>
    %702 = arith.mulf %698, %697 : vector<2x64xf32>
    %703 = arith.addf %701, %702 : vector<2x64xf32>
    %704 = math.tanh %703 : vector<2x64xf32>
    %705 = arith.mulf %700, %704 : vector<2x64xf32>
    %706 = vector.extract_strided_slice %583 {offsets = [12, 0], sizes = [2, 256], strides = [1, 1]} : vector<16x256xf32> to vector<2x256xf32>
    %707 = arith.truncf %705 : vector<2x64xf32> to vector<2x64xbf16>
    %cst_146 = arith.constant dense<0.000000e+00> : vector<2x256xf32>
    %708 = tpu.matmul %707, %570, %cst_146 {dimension_numbers = #tpu.dot_dimension_numbers<[1], [0], [0], [1], [0, 0, 1, 1], [], []>} : vector<2x64xbf16>, vector<64x256xbf16>, vector<2x256xf32> -> vector<2x256xf32>
    %709 = arith.addf %706, %708 : vector<2x256xf32>
    %710 = vector.extract_strided_slice %709 {offsets = [0, 0], sizes = [2, 192], strides = [1, 1]} : vector<2x256xf32> to vector<2x192xf32>
    %711 = arith.negf %710 : vector<2x192xf32>
    %712 = math.exp %711 : vector<2x192xf32>
    %cst_147 = arith.constant 1.000000e+00 : f32
    %713 = vector.broadcast %cst_147 : f32 to vector<2x192xf32>
    %714 = arith.addf %713, %712 : vector<2x192xf32>
    %715 = arith.divf %713, %714 : vector<2x192xf32>
    %716 = vector.extract_strided_slice %709 {offsets = [0, 192], sizes = [2, 64], strides = [1, 1]} : vector<2x256xf32> to vector<2x64xf32>
    %717 = math.tanh %716 : vector<2x64xf32>
    %718 = vector.extract_strided_slice %715 {offsets = [0, 0], sizes = [2, 64], strides = [1, 1]} : vector<2x192xf32> to vector<2x64xf32>
    %719 = vector.extract_strided_slice %715 {offsets = [0, 64], sizes = [2, 64], strides = [1, 1]} : vector<2x192xf32> to vector<2x64xf32>
    %720 = vector.extract_strided_slice %715 {offsets = [0, 128], sizes = [2, 64], strides = [1, 1]} : vector<2x192xf32> to vector<2x64xf32>
    %721 = arith.mulf %719, %703 : vector<2x64xf32>
    %722 = arith.mulf %718, %717 : vector<2x64xf32>
    %723 = arith.addf %721, %722 : vector<2x64xf32>
    %724 = math.tanh %723 : vector<2x64xf32>
    %725 = arith.mulf %720, %724 : vector<2x64xf32>
    %726 = vector.extract_strided_slice %583 {offsets = [14, 0], sizes = [2, 256], strides = [1, 1]} : vector<16x256xf32> to vector<2x256xf32>
    %727 = arith.truncf %725 : vector<2x64xf32> to vector<2x64xbf16>
    %cst_148 = arith.constant dense<0.000000e+00> : vector<2x256xf32>
    %728 = tpu.matmul %727, %570, %cst_148 {dimension_numbers = #tpu.dot_dimension_numbers<[1], [0], [0], [1], [0, 0, 1, 1], [], []>} : vector<2x64xbf16>, vector<64x256xbf16>, vector<2x256xf32> -> vector<2x256xf32>
    %729 = arith.addf %726, %728 : vector<2x256xf32>
    %730 = vector.extract_strided_slice %729 {offsets = [0, 0], sizes = [2, 192], strides = [1, 1]} : vector<2x256xf32> to vector<2x192xf32>
    %731 = arith.negf %730 : vector<2x192xf32>
    %732 = math.exp %731 : vector<2x192xf32>
    %cst_149 = arith.constant 1.000000e+00 : f32
    %733 = vector.broadcast %cst_149 : f32 to vector<2x192xf32>
    %734 = arith.addf %733, %732 : vector<2x192xf32>
    %735 = arith.divf %733, %734 : vector<2x192xf32>
    %736 = vector.extract_strided_slice %729 {offsets = [0, 192], sizes = [2, 64], strides = [1, 1]} : vector<2x256xf32> to vector<2x64xf32>
    %737 = math.tanh %736 : vector<2x64xf32>
    %738 = vector.extract_strided_slice %735 {offsets = [0, 0], sizes = [2, 64], strides = [1, 1]} : vector<2x192xf32> to vector<2x64xf32>
    %739 = vector.extract_strided_slice %735 {offsets = [0, 64], sizes = [2, 64], strides = [1, 1]} : vector<2x192xf32> to vector<2x64xf32>
    %740 = vector.extract_strided_slice %735 {offsets = [0, 128], sizes = [2, 64], strides = [1, 1]} : vector<2x192xf32> to vector<2x64xf32>
    %741 = arith.mulf %739, %723 : vector<2x64xf32>
    %742 = arith.mulf %738, %737 : vector<2x64xf32>
    %743 = arith.addf %741, %742 : vector<2x64xf32>
    %744 = math.tanh %743 : vector<2x64xf32>
    %745 = arith.mulf %740, %744 : vector<2x64xf32>
    %746 = tpu.concatenate %605, %625, %645, %665, %685, %705, %725, %745 in 0 : vector<2x64xf32>, vector<2x64xf32>, vector<2x64xf32>, vector<2x64xf32>, vector<2x64xf32>, vector<2x64xf32>, vector<2x64xf32>, vector<2x64xf32> -> vector<16x64xf32>
    %747 = vector.broadcast %196 : vector<1x64xf32> to vector<16x64xf32>
    %748 = arith.mulf %747, %746 : vector<16x64xf32>
    %cst_150 = arith.constant 1.000000e+00 : f32
    %749 = vector.broadcast %cst_150 : f32 to vector<1x64xf32>
    %750 = arith.subf %749, %196 : vector<1x64xf32>
    %cst_151 = arith.constant dense<0.000000e+00> : vector<16x64xf32>
    %751 = tpu.matmul %193, %746, %cst_151 {dimension_numbers = #tpu.dot_dimension_numbers<[1], [0], [0], [1], [0, 0, 1, 1], [], []>} : vector<16x16xf32>, vector<16x64xf32>, vector<16x64xf32> -> vector<16x64xf32>
    %752 = vector.broadcast %750 : vector<1x64xf32> to vector<16x64xf32>
    %753 = arith.mulf %752, %751 : vector<16x64xf32>
    %754 = arith.addf %748, %753 : vector<16x64xf32>
    %755 = vector.extract_strided_slice %754 {offsets = [14, 0], sizes = [2, 64], strides = [1, 1]} : vector<16x64xf32> to vector<2x64xf32>
    %c912 = arith.constant 912 : index
    %c0_152 = arith.constant 0 : index
    %756 = vector.load %arg1[%c912, %c0_152] : memref<992x256xbf16, #tpu.memory_space<vmem>>, vector<16x64xbf16>
    %757 = arith.truncf %1 : vector<2x16xf32> to vector<2x16xbf16>
    %cst_153 = arith.constant dense<0.000000e+00> : vector<2x64xf32>
    %758 = tpu.matmul %757, %756, %cst_153 {dimension_numbers = #tpu.dot_dimension_numbers<[1], [0], [0], [1], [0, 0, 1, 1], [], []>} : vector<2x16xbf16>, vector<16x64xbf16>, vector<2x64xf32> -> vector<2x64xf32>
    %c928 = arith.constant 928 : index
    %c0_154 = arith.constant 0 : index
    %759 = vector.load %arg1[%c928, %c0_154] : memref<992x256xbf16, #tpu.memory_space<vmem>>, vector<64x64xbf16>
    %760 = arith.truncf %755 : vector<2x64xf32> to vector<2x64xbf16>
    %cst_155 = arith.constant dense<0.000000e+00> : vector<2x64xf32>
    %761 = tpu.matmul %760, %759, %cst_155 {dimension_numbers = #tpu.dot_dimension_numbers<[1], [0], [0], [1], [0, 0, 1, 1], [], []>} : vector<2x64xbf16>, vector<64x64xbf16>, vector<2x64xf32> -> vector<2x64xf32>
    %762 = arith.addf %758, %761 : vector<2x64xf32>
    %c36 = arith.constant 36 : index
    %c0_156 = arith.constant 0 : index
    %763 = vector.load %arg2[%c36, %c0_156] : memref<135x256xf32, #tpu.memory_space<vmem>>, vector<1x64xf32>
    %764 = vector.broadcast %763 : vector<1x64xf32> to vector<2x64xf32>
    %765 = arith.addf %762, %764 : vector<2x64xf32>
    %c37 = arith.constant 37 : index
    %c0_157 = arith.constant 0 : index
    %766 = vector.load %arg2[%c37, %c0_157] : memref<135x256xf32, #tpu.memory_space<vmem>>, vector<1x64xf32>
    %767 = vector.broadcast %766 : vector<1x64xf32> to vector<2x64xf32>
    %768 = arith.mulf %765, %767 : vector<2x64xf32>
    %cst_158 = arith.constant dense<0.000000e+00> : vector<2xf32>
    %769 = vector.multi_reduction <add>, %768, %cst_158 [1] : vector<2x64xf32> to vector<2xf32>
    %770 = vector.shape_cast %769 : vector<2xf32> to vector<2x1xf32>
    %c38 = arith.constant 38 : index
    %c0_159 = arith.constant 0 : index
    %771 = vector.load %arg2[%c38, %c0_159] : memref<135x256xf32, #tpu.memory_space<vmem>>, vector<1x1xf32>
    %772 = vector.broadcast %771 : vector<1x1xf32> to vector<2x1xf32>
    %773 = arith.addf %770, %772 : vector<2x1xf32>
    %c0_160 = arith.constant 0 : index
    %c0_161 = arith.constant 0 : index
    %774 = vector.load %arg3[%c0_160, %c0_161] : memref<2x1xf32, #tpu.memory_space<vmem>>, vector<2x1xf32>
    tpu.vector_store %arg3[%c0_160, %c0_161], %773 {strides = array<i32>} : memref<2x1xf32, #tpu.memory_space<vmem>>, vector<2x1xf32>,
    return
  }
}

</mosaic_0001>

<llo_original>
// kernel: forward_pallas.1
$region0: #{forward_pallas.1}
  #allocation0 [shape = 'u32[]', space=smem, size = 0x4, offset = 0x4, fixed_abs, tag = 'smem constant byte address 0x4 - core index']
  #allocation1 [shape = 'u32[144,128]{1,0:T(1,128)}', space=vmem, size = 0x12000, scoped, tag = 'internal scratch']
  %s0 = inlined_call_operand.vmem [shape: f32[18,16], index: 0, kind: input, shape index: {}]
  %s1 = inlined_call_operand.hbm [shape: bf16[992,256], index: 1, kind: input, shape index: {}]
  %s2 = inlined_call_operand.hbm [shape: f32[135,256], index: 2, kind: input, shape index: {}]
  %s3 = inlined_call_operand.vmem [shape: f32[2,1], index: 3, kind: output, shape index: {}]
  %s4 = sld [smem:[#allocation0]]
  $region30: #{forward_pallas.1} parent=0
    _
  %s6 = ssub.s32 1, %s4
  %s7 = scalar_select 0, %s6, %s4
  $region1: #{forward_pallas.1} parent=0
    #allocation2 [shape = 'u8[507904]{0}', space=vmem, size = 0x7c000, scoped, tag = 'input window, operand 1, single buffered']
    #allocation3 [shape = 's32[1]{0}', space=sflag, size = 0x4, scoped, tag = 'scoped memory for forward_pallas.1']
    #allocation4 [shape = 'u8[139264]{0}', space=vmem, size = 0x22000, scoped, tag = 'input window, operand 2, single buffered']
    #allocation5 [shape = 's32[1]{0}', space=sflag, size = 0x4, scoped, tag = 'scoped memory for forward_pallas.1']
    %8 = vsyncpa [#allocation3], 0
    %9 = vsyncpa [#allocation5], 0
    // Predicated region
    $region2: #{forward_pallas.1} parent=1 // pred_check
      _
    $region3: #{forward_pallas.1} parent=1 // pred_check_branch
      %11 = sbr.rel (0) target = $region5
    $region4: #{forward_pallas.1} parent=1 // pred_region
      _
    $region5: #{forward_pallas.1} parent=1 // pred_fallthru
      _
    // Predicated region
    $region6: #{forward_pallas.1} parent=1 // pred_check
      _
    $region7: #{forward_pallas.1} parent=1 // pred_check_branch
      %13 = sbr.rel (0) target = $region9
    $region8: #{forward_pallas.1} parent=1 // pred_region
      %s15 = ssub.s32 15872, 15872
      %16 = vsyncadd [#allocation3], %s15
      %s17 = sshll.u32 [#allocation2], 4
      %s18 = int_to_ptr.vmem [resolvable:$true] %s17
      %23 = dma.hbm_to_vmem [thread:$0]  %s1, 15872, %s18, [#allocation3], 128, 128, 8
    $region9: #{forward_pallas.1} parent=1 // pred_fallthru
      _
    // Predicated region
    $region10: #{forward_pallas.1} parent=1 // pred_check
      _
    $region11: #{forward_pallas.1} parent=1 // pred_check_branch
      %25 = sbr.rel (0) target = $region13
    $region12: #{forward_pallas.1} parent=1 // pred_region
      %s27 = ssub.s32 4352, 4352
      %28 = vsyncadd [#allocation5], %s27
      %s29 = sshll.u32 [#allocation4], 4
      %s30 = int_to_ptr.vmem [resolvable:$true] %s29
      %35 = dma.hbm_to_vmem [thread:$0]  %s2, 4352, %s30, [#allocation5], 256, 256, 16
    $region13: #{forward_pallas.1} parent=1 // pred_fallthru
      _
    // Predicated region
    $region14: #{forward_pallas.1} parent=1 // pred_check
      _
    $region15: #{forward_pallas.1} parent=1 // pred_check_branch
      %37 = sbr.rel (0) target = $region17
    $region16: #{forward_pallas.1} parent=1 // pred_region
      %38 = dma.done [#allocation3], 15872
    $region17: #{forward_pallas.1} parent=1 // pred_fallthru
      _
    // Predicated region
    $region18: #{forward_pallas.1} parent=1 // pred_check
      _
    $region19: #{forward_pallas.1} parent=1 // pred_check_branch
      %40 = sbr.rel (0) target = $region21
    $region20: #{forward_pallas.1} parent=1 // pred_region
      %41 = dma.done [#allocation5], 4352
    $region21: #{forward_pallas.1} parent=1 // pred_fallthru
      _
    %v43 = vld [vmem:[%s0] sm:$0xff]
    %v44 = vld [vmem:[%s0 + $0x8] sm:$0xff]
    %v45 = vld [vmem:[%s0 + $0x10] sm:$0x3]
    %v46 = vld [vmem:[#allocation2] sm:$0xf]
    %v47 = vld [vmem:[#allocation2 + $0x8] sm:$0xf]
    %v48 = vpack.c.bf16 %v44, %v43
    %v49 = vld [vmem:[#allocation4] sm:$0xff]
    %v50 = vld [vmem:[#allocation4 + $0x10] sm:$0xff]
    %v53 = vunpack.c.l.b16 %v46
    %v54 = vunpack.c.l.b16 %v47
    %v55 = vpack.c.b16 %v54, %v53
    %vm57 = vcmask 130048
    %v59 = vsel %vm57, %v48, 0
    %61 = vmatprep.subr.bf16.mxu0 0
    %62 = vmatpush1.bf16.msra.mxu0 %v55
    %63 = vmatprep.subr.bf16.mxu0 0
    %64 = vmatpush1.bf16.msra.mxu0 0
    %65 = vmatprep.subr.bf16.mxu0 0
    %66 = vmatpush1.bf16.msra.mxu0 0
    %67 = vmatprep.subr.bf16.mxu0 0
    %68 = vmatpush1.bf16.msra.mxu0 0
    %69 = vmatprep.subr.bf16.mxu0 0
    %70 = vmatpush1.bf16.msra.mxu0 0
    %71 = vmatprep.subr.bf16.mxu0 0
    %72 = vmatpush1.bf16.msra.mxu0 0
    %73 = vmatprep.subr.bf16.mxu0 0
    %74 = vmatpush1.bf16.msra.mxu0 0
    %75 = vmatprep.subr.bf16.mxu0 0
    %76 = vmatpush1.bf16.msra.mxu0 0
    %77 = vmatprep.subr.bf16.mxu0 0
    %78 = vmatpush1.bf16.msra.mxu0 0
    %79 = vmatprep.subr.bf16.mxu0 0
    %80 = vmatpush1.bf16.msra.mxu0 0
    %81 = vmatprep.subr.bf16.mxu0 0
    %82 = vmatpush1.bf16.msra.mxu0 0
    %83 = vmatprep.subr.bf16.mxu0 0
    %84 = vmatpush1.bf16.msra.mxu0 0
    %85 = vmatprep.subr.bf16.mxu0 0
    %86 = vmatpush1.bf16.msra.mxu0 0
    %87 = vmatprep.subr.bf16.mxu0 0
    %88 = vmatpush1.bf16.msra.mxu0 0
    %89 = vmatprep.subr.bf16.mxu0 0
    %90 = vmatpush1.bf16.msra.mxu0 0
    %91 = vmatprep.subr.bf16.mxu0 0
    %92 = vmatpush1.bf16.msra.mxu0 0
    %93 = vmatprep.mubr.bf16.mxu0 0
    %94 = vmatmul.mubr.bf16.gmra.mrb[0].mxu0 %v59
    %v95 = vpop.f32.mrb[0].mxu0
    %v96 = vadd.f32 %v49, %v95
    %v97 = vpop.f32.mrb[0].mxu0
    %v98 = vpop.f32.mrb[0].mxu0
    %v99 = vadd.f32 %v50, %v98
    %v100 = vpop.f32.mrb[0].mxu0
    %101 = vdwg.mxu0
    %v102 = vld [vmem:[#allocation4 + $0x40] sm:$0x80]
    %v103 = vld [vmem:[#allocation4 + $0x50] sm:$0xff]
    %v104 = vld [vmem:[#allocation4 + $0x60] sm:$0xff]
    %v105 = vld [vmem:[#allocation4 + $0x70] sm:$0xff]
    %v106 = vld [vmem:[#allocation4 + $0x80] sm:$0xff]
    %v107 = vld [vmem:[#allocation4 + $0x90] sm:$0xff]
    %v108 = vld [vmem:[#allocation4 + $0xa0] sm:$0xff]
    %v109 = vld [vmem:[#allocation4 + $0xb0] sm:$0xff]
    %v110 = vld [vmem:[#allocation4 + $0xc0] sm:$0x7f]
    %v111 = vld [vmem:[#allocation2 + $0x10] sm:$0xff]
    %v112 = vld [vmem:[#allocation2 + $0x18] sm:$0xff]
    %v113 = vld [vmem:[#allocation2 + $0x20] sm:$0xff]
    %v114 = vld [vmem:[#allocation2 + $0x28] sm:$0xff]
    %v115 = vld [vmem:[#allocation2 + $0x30] sm:$0xff]
    %v116 = vld [vmem:[#allocation2 + $0x38] sm:$0xff]
    %v117 = vld [vmem:[#allocation2 + $0x40] sm:$0xff]
    %v118 = vld [vmem:[#allocation2 + $0x48] sm:$0xff]
    %v119 = vpack.c.bf16 %v99, %v96
    %s120 = scalar_lea.vmem [#allocation4], 32
    %v121 = vld [vmem:[%s120] ss:$8 sm:$0x3]
    %v123 = vlaneseq
    %v124 = vshrl.u32 %v123, 7
    %v125 = vsub.s32 0, %v124
    %v126 = vrot.slane %v121, %v125
    %v127 = vlaneseq
    %v128 = vshrl.u32 %v127, 7
    %v129 = vsub.s32 1, %v128
    %v130 = vrot.slane %v121, %v129
    %v141 = vunpack.c.l.b16 %v111
    %v142 = vunpack.c.h.b16 %v111
    %v143 = vunpack.c.l.b16 %v112
    %v144 = vunpack.c.h.b16 %v112
    %v145 = vunpack.c.l.b16 %v113
    %v146 = vunpack.c.h.b16 %v113
    %v147 = vunpack.c.l.b16 %v114
    %v148 = vunpack.c.h.b16 %v114
    %v149 = vunpack.c.l.b16 %v115
    %v150 = vunpack.c.h.b16 %v115
    %v151 = vunpack.c.l.b16 %v116
    %v152 = vunpack.c.h.b16 %v116
    %v153 = vunpack.c.l.b16 %v117
    %v154 = vunpack.c.h.b16 %v117
    %v155 = vunpack.c.l.b16 %v118
    %v156 = vunpack.c.h.b16 %v118
    %v157 = vpack.c.b16 %v143, %v141
    %v158 = vpack.c.b16 %v144, %v142
    %v159 = vpack.c.b16 %v147, %v145
    %v160 = vpack.c.b16 %v148, %v146
    %v161 = vpack.c.b16 %v151, %v149
    %v162 = vpack.c.b16 %v152, %v150
    %v163 = vpack.c.b16 %v155, %v153
    %v164 = vpack.c.b16 %v156, %v154
    %vm173 = vcmask 523264
    %v175 = vsel %vm173, %v119, 0
    %177 = vmatprep.subr.bf16.mxu0 %v158
    %178 = vmatpush1.bf16.msra.mxu0 %v157
    %179 = vmatprep.subr.bf16.mxu0 %v160
    %180 = vmatpush1.bf16.msra.mxu0 %v159
    %181 = vmatprep.subr.bf16.mxu0 %v162
    %182 = vmatpush1.bf16.msra.mxu0 %v161
    %183 = vmatprep.subr.bf16.mxu0 %v164
    %184 = vmatpush1.bf16.msra.mxu0 %v163
    %185 = vmatprep.subr.bf16.mxu0 0
    %186 = vmatpush1.bf16.msra.mxu0 0
    %187 = vmatprep.subr.bf16.mxu0 0
    %188 = vmatpush1.bf16.msra.mxu0 0
    %189 = vmatprep.subr.bf16.mxu0 0
    %190 = vmatpush1.bf16.msra.mxu0 0
    %191 = vmatprep.subr.bf16.mxu0 0
    %192 = vmatpush1.bf16.msra.mxu0 0
    %193 = vmatprep.subr.bf16.mxu0 0
    %194 = vmatpush1.bf16.msra.mxu0 0
    %195 = vmatprep.subr.bf16.mxu0 0
    %196 = vmatpush1.bf16.msra.mxu0 0
    %197 = vmatprep.subr.bf16.mxu0 0
    %198 = vmatpush1.bf16.msra.mxu0 0
    %199 = vmatprep.subr.bf16.mxu0 0
    %200 = vmatpush1.bf16.msra.mxu0 0
    %201 = vmatprep.subr.bf16.mxu0 0
    %202 = vmatpush1.bf16.msra.mxu0 0
    %203 = vmatprep.subr.bf16.mxu0 0
    %204 = vmatpush1.bf16.msra.mxu0 0
    %205 = vmatprep.subr.bf16.mxu0 0
    %206 = vmatpush1.bf16.msra.mxu0 0
    %207 = vmatprep.subr.bf16.mxu0 0
    %208 = vmatpush1.bf16.msra.mxu0 0
    %209 = vmatprep.mubr.bf16.mxu0 0
    %210 = vmatmul.mubr.bf16.gmra.mrb[0].mxu0 %v175
    %v211 = vpop.f32.mrb[0].mxu0
    %v212 = vadd.f32 %v126, %v211
    %v213 = vpop.f32.mrb[0].mxu0
    %v214 = vadd.f32 %v130, %v213
    %v215 = vpop.f32.mrb[0].mxu0
    %v216 = vadd.f32 %v126, %v215
    %v217 = vpop.f32.mrb[0].mxu0
    %v218 = vadd.f32 %v130, %v217
    %219 = vdwg.mxu0
    %222 = vrot.lane.b32.xlu0 %v212, 64
    %v223 = vpop.permute.xlu0 %222
    %224 = vrot.lane.b32.xlu0 %v216, 64
    %v225 = vpop.permute.xlu0 %224
    %v228 = vmul.f32 %v212, %v223
    %v229 = vmul.f32 %v216, %v225
    %vm239 = vcmask 1040384
    %v240 = vrot.slane %v102, 7
    %v241 = vrot.slane %v103, 7
    %v242 = vsel %vm239, %v240, %v241
    %v243 = vrot.slane %v104, 7
    %v244 = vsel %vm239, %v241, %v243
    %v245 = vrot.slane %v105, 7
    %v246 = vsel %vm239, %v243, %v245
    %v247 = vrot.slane %v106, 7
    %v248 = vsel %vm239, %v245, %v247
    %v249 = vrot.slane %v107, 7
    %v250 = vsel %vm239, %v247, %v249
    %v251 = vrot.slane %v108, 7
    %v252 = vsel %vm239, %v249, %v251
    %v253 = vrot.slane %v109, 7
    %v254 = vsel %vm239, %v251, %v253
    %v255 = vrot.slane %v110, 7
    %v256 = vsel %vm239, %v253, %v255
    %v266 = vsel %vm173, %v228, 0
    %v269 = vsel %vm173, %v229, 0
    %271 = vmatprep.subr.mxu0 0.0
    %272 = vmatpush1.msra.mxu0 %v242
    %273 = vmatprep.subr.mxu0 0.0
    %274 = vmatpush1.msra.mxu0 %v244
    %275 = vmatprep.subr.mxu0 0.0
    %276 = vmatpush1.msra.mxu0 %v246
    %277 = vmatprep.subr.mxu0 0.0
    %278 = vmatpush1.msra.mxu0 %v248
    %279 = vmatprep.subr.mxu0 0.0
    %280 = vmatpush1.msra.mxu0 %v250
    %281 = vmatprep.subr.mxu0 0.0
    %282 = vmatpush1.msra.mxu0 %v252
    %283 = vmatprep.subr.mxu0 0.0
    %284 = vmatpush1.msra.mxu0 %v254
    %285 = vmatprep.subr.mxu0 0.0
    %286 = vmatpush1.msra.mxu0 %v256
    %287 = vmatprep.subr.mxu0 0.0
    %288 = vmatpush1.msra.mxu0 0.0
    %289 = vmatprep.subr.mxu0 0.0
    %290 = vmatpush1.msra.mxu0 0.0
    %291 = vmatprep.subr.mxu0 0.0
    %292 = vmatpush1.msra.mxu0 0.0
    %293 = vmatprep.subr.mxu0 0.0
    %294 = vmatpush1.msra.mxu0 0.0
    %295 = vmatprep.subr.mxu0 0.0
    %296 = vmatpush1.msra.mxu0 0.0
    %297 = vmatprep.subr.mxu0 0.0
    %298 = vmatpush1.msra.mxu0 0.0
    %299 = vmatprep.subr.mxu0 0.0
    %300 = vmatpush1.msra.mxu0 0.0
    %301 = vmatprep.subr.mxu0 0.0
    %302 = vmatpush1.msra.mxu0 0.0
    %303 = vmatprep.subr.mxu0 0.0
    %304 = vmatpush1.msra.mxu0 0.0
    %305 = vmatprep.subr.mxu0 0.0
    %306 = vmatpush1.msra.mxu0 0.0
    %307 = vmatprep.subr.mxu0 0.0
    %308 = vmatpush1.msra.mxu0 0.0
    %309 = vmatprep.subr.mxu0 0.0
    %310 = vmatpush1.msra.mxu0 0.0
    %311 = vmatprep.subr.mxu0 0.0
    %312 = vmatpush1.msra.mxu0 0.0
    %313 = vmatprep.subr.mxu0 0.0
    %314 = vmatpush1.msra.mxu0 0.0
    %315 = vmatprep.subr.mxu0 0.0
    %316 = vmatpush1.msra.mxu0 0.0
    %317 = vmatprep.subr.mxu0 0.0
    %318 = vmatpush1.msra.mxu0 0.0
    %319 = vmatprep.subr.mxu0 0.0
    %320 = vmatpush1.msra.mxu0 0.0
    %321 = vmatprep.subr.mxu0 0.0
    %322 = vmatpush1.msra.mxu0 0.0
    %323 = vmatprep.subr.mxu0 0.0
    %324 = vmatpush1.msra.mxu0 0.0
    %325 = vmatprep.subr.mxu0 0.0
    %326 = vmatpush1.msra.mxu0 0.0
    %327 = vmatprep.subr.mxu0 0.0
    %328 = vmatpush1.msra.mxu0 0.0
    %329 = vmatprep.subr.mxu0 0.0
    %330 = vmatpush1.msra.mxu0 0.0
    %331 = vmatprep.subr.mxu0 0.0
    %332 = vmatpush1.msra.mxu0 0.0
    %333 = vmatprep.subr.mxu0 0.0
    %334 = vmatpush1.msra.mxu0 0.0
    %335 = vmatprep.mubr.f32.mxu0 0.0
    %336 = vmatmul.mubr.f32.gmra.mrb[0].mxu0 %v266
    %v337 = vpop.f32.mrb[0].mxu0
    %v338 = vadd.f32 0.0, %v337
    %v339 = vpop.f32.mrb[0].mxu0
    %340 = vmatprep.mubr.f32.mxu0 0.0
    %341 = vmatmul.mubr.f32.gmra.mrb[0].mxu0 %v269
    %v342 = vpop.f32.mrb[0].mxu0
    %v343 = vadd.f32 0.0, %v342
    %v344 = vpop.f32.mrb[0].mxu0
    %345 = vdwg.mxu0
    %v346 = vmul.f32 %v212, %v225
    %v347 = vmul.f32 %v216, %v223
    %v349 = vsel %vm173, %v346, 0
    %v352 = vsel %vm173, %v347, 0
    %354 = vmatprep.subr.mxu0 0.0
    %355 = vmatpush1.msra.mxu0 %v242
    %356 = vmatprep.subr.mxu0 0.0
    %357 = vmatpush1.msra.mxu0 %v244
    %358 = vmatprep.subr.mxu0 0.0
    %359 = vmatpush1.msra.mxu0 %v246
    %360 = vmatprep.subr.mxu0 0.0
    %361 = vmatpush1.msra.mxu0 %v248
    %362 = vmatprep.subr.mxu0 0.0
    %363 = vmatpush1.msra.mxu0 %v250
    %364 = vmatprep.subr.mxu0 0.0
    %365 = vmatpush1.msra.mxu0 %v252
    %366 = vmatprep.subr.mxu0 0.0
    %367 = vmatpush1.msra.mxu0 %v254
    %368 = vmatprep.subr.mxu0 0.0
    %369 = vmatpush1.msra.mxu0 %v256
    %370 = vmatprep.subr.mxu0 0.0
    %371 = vmatpush1.msra.mxu0 0.0
    %372 = vmatprep.subr.mxu0 0.0
    %373 = vmatpush1.msra.mxu0 0.0
    %374 = vmatprep.subr.mxu0 0.0
    %375 = vmatpush1.msra.mxu0 0.0
    %376 = vmatprep.subr.mxu0 0.0
    %377 = vmatpush1.msra.mxu0 0.0
    %378 = vmatprep.subr.mxu0 0.0
    %379 = vmatpush1.msra.mxu0 0.0
    %380 = vmatprep.subr.mxu0 0.0
    %381 = vmatpush1.msra.mxu0 0.0
    %382 = vmatprep.subr.mxu0 0.0
    %383 = vmatpush1.msra.mxu0 0.0
    %384 = vmatprep.subr.mxu0 0.0
    %385 = vmatpush1.msra.mxu0 0.0
    %386 = vmatprep.subr.mxu0 0.0
    %387 = vmatpush1.msra.mxu0 0.0
    %388 = vmatprep.subr.mxu0 0.0
    %389 = vmatpush1.msra.mxu0 0.0
    %390 = vmatprep.subr.mxu0 0.0
    %391 = vmatpush1.msra.mxu0 0.0
    %392 = vmatprep.subr.mxu0 0.0
    %393 = vmatpush1.msra.mxu0 0.0
    %394 = vmatprep.subr.mxu0 0.0
    %395 = vmatpush1.msra.mxu0 0.0
    %396 = vmatprep.subr.mxu0 0.0
    %397 = vmatpush1.msra.mxu0 0.0
    %398 = vmatprep.subr.mxu0 0.0
    %399 = vmatpush1.msra.mxu0 0.0
    %400 = vmatprep.subr.mxu0 0.0
    %401 = vmatpush1.msra.mxu0 0.0
    %402 = vmatprep.subr.mxu0 0.0
    %403 = vmatpush1.msra.mxu0 0.0
    %404 = vmatprep.subr.mxu0 0.0
    %405 = vmatpush1.msra.mxu0 0.0
    %406 = vmatprep.subr.mxu0 0.0
    %407 = vmatpush1.msra.mxu0 0.0
    %408 = vmatprep.subr.mxu0 0.0
    %409 = vmatpush1.msra.mxu0 0.0
    %410 = vmatprep.subr.mxu0 0.0
    %411 = vmatpush1.msra.mxu0 0.0
    %412 = vmatprep.subr.mxu0 0.0
    %413 = vmatpush1.msra.mxu0 0.0
    %414 = vmatprep.subr.mxu0 0.0
    %415 = vmatpush1.msra.mxu0 0.0
    %416 = vmatprep.subr.mxu0 0.0
    %417 = vmatpush1.msra.mxu0 0.0
    %418 = vmatprep.mubr.f32.mxu0 0.0
    %419 = vmatmul.mubr.f32.gmra.mrb[0].mxu0 %v349
    %v420 = vpop.f32.mrb[0].mxu0
    %v421 = vadd.f32 0.0, %v420
    %v422 = vpop.f32.mrb[0].mxu0
    %423 = vmatprep.mubr.f32.mxu0 0.0
    %424 = vmatmul.mubr.f32.gmra.mrb[0].mxu0 %v352
    %v425 = vpop.f32.mrb[0].mxu0
    %v426 = vadd.f32 0.0, %v425
    %v427 = vpop.f32.mrb[0].mxu0
    %428 = vdwg.mxu0
    %v429 = vmax.f32 %v338, %v421
    %v430 = vmax.f32 %v343, %v426
    %v431 = vsub.f32 %v338, %v429
    %v432 = vsub.f32 %v343, %v430
    %v433 = vmul.f32 %v431, 1.442695
    %v434 = vpow.pop %v433
    %v435 = vmul.f32 %v432, 1.442695
    %v436 = vpow.pop %v435
    %v437 = vsub.f32 %v421, %v429
    %v438 = vsub.f32 %v426, %v430
    %v439 = vmul.f32 %v437, 1.442695
    %v440 = vpow.pop %v439
    %v441 = vmul.f32 %v438, 1.442695
    %v442 = vpow.pop %v441
    %v443 = vadd.f32 %v434, %v440
    %v444 = vadd.f32 %v436, %v442
    %v445 = vrcp.pop %v443
    %v446 = vrcp.pop %v444
    %v447 = vmul.f32 %v434, %v214
    %v448 = vmul.f32 %v436, %v218
    %v449 = vmul.f32 %v440, %v218
    %v450 = vmul.f32 %v442, %v214
    %v451 = vadd.f32 %v447, %v449
    %v452 = vadd.f32 %v448, %v450
    %v453 = vmul.f32 %v451, %v445
    %v454 = vmul.f32 %v452, %v446
    %v455 = vld [vmem:[#allocation2 + $0x50] sm:$0xf]
    %v456 = vld [vmem:[#allocation2 + $0x58] sm:$0xf]
    %v457 = vld [vmem:[#allocation2 + $0x60] sm:$0xf]
    %v458 = vld [vmem:[#allocation2 + $0x68] sm:$0xf]
    %v459 = vld [vmem:[#allocation2 + $0x70] sm:$0xf]
    %v460 = vld [vmem:[#allocation2 + $0x78] sm:$0xf]
    %v461 = vld [vmem:[#allocation2 + $0x80] sm:$0xf]
    %v462 = vld [vmem:[#allocation2 + $0x88] sm:$0xf]
    %v463 = vpack.c.bf16 %v454, %v453
    %v464 = vld [vmem:[#allocation4 + $0x21] ss:$0 sm:$0xff]
    %v473 = vunpack.c.l.b16 %v455
    %v474 = vunpack.c.l.b16 %v456
    %v475 = vunpack.c.l.b16 %v457
    %v476 = vunpack.c.l.b16 %v458
    %v477 = vunpack.c.l.b16 %v459
    %v478 = vunpack.c.l.b16 %v460
    %v479 = vunpack.c.l.b16 %v461
    %v480 = vunpack.c.l.b16 %v462
    %v481 = vpack.c.b16 %v474, %v473
    %v482 = vpack.c.b16 %v476, %v475
    %v483 = vpack.c.b16 %v478, %v477
    %v484 = vpack.c.b16 %v480, %v479
    %v490 = vsel %vm173, %v463, 0
    %492 = vmatprep.subr.bf16.mxu0 0
    %493 = vmatpush1.bf16.msra.mxu0 %v481
    %494 = vmatprep.subr.bf16.mxu0 0
    %495 = vmatpush1.bf16.msra.mxu0 %v482
    %496 = vmatprep.subr.bf16.mxu0 0
    %497 = vmatpush1.bf16.msra.mxu0 %v483
    %498 = vmatprep.subr.bf16.mxu0 0
    %499 = vmatpush1.bf16.msra.mxu0 %v484
    %500 = vmatprep.subr.bf16.mxu0 0
    %501 = vmatpush1.bf16.msra.mxu0 0
    %502 = vmatprep.subr.bf16.mxu0 0
    %503 = vmatpush1.bf16.msra.mxu0 0
    %504 = vmatprep.subr.bf16.mxu0 0
    %505 = vmatpush1.bf16.msra.mxu0 0
    %506 = vmatprep.subr.bf16.mxu0 0
    %507 = vmatpush1.bf16.msra.mxu0 0
    %508 = vmatprep.subr.bf16.mxu0 0
    %509 = vmatpush1.bf16.msra.mxu0 0
    %510 = vmatprep.subr.bf16.mxu0 0
    %511 = vmatpush1.bf16.msra.mxu0 0
    %512 = vmatprep.subr.bf16.mxu0 0
    %513 = vmatpush1.bf16.msra.mxu0 0
    %514 = vmatprep.subr.bf16.mxu0 0
    %515 = vmatpush1.bf16.msra.mxu0 0
    %516 = vmatprep.subr.bf16.mxu0 0
    %517 = vmatpush1.bf16.msra.mxu0 0
    %518 = vmatprep.subr.bf16.mxu0 0
    %519 = vmatpush1.bf16.msra.mxu0 0
    %520 = vmatprep.subr.bf16.mxu0 0
    %521 = vmatpush1.bf16.msra.mxu0 0
    %522 = vmatprep.subr.bf16.mxu0 0
    %523 = vmatpush1.bf16.msra.mxu0 0
    %524 = vmatprep.mubr.bf16.mxu0 0
    %525 = vmatmul.mubr.bf16.gmra.mrb[0].mxu0 %v490
    %v526 = vpop.f32.mrb[0].mxu0
    %v527 = vadd.f32 %v464, %v526
    %v528 = vpop.f32.mrb[0].mxu0
    %v529 = vpop.f32.mrb[0].mxu0
    %v530 = vadd.f32 %v464, %v529
    %v531 = vpop.f32.mrb[0].mxu0
    %532 = vdwg.mxu0
    %v533 = vadd.f32 %v96, %v527
    %v534 = vadd.f32 %v99, %v530
    %v535 = vld [vmem:[#allocation4 + $0x24] ss:$0 sm:$0xff]
    %v536 = vld [vmem:[#allocation4 + $0x25] ss:$0 sm:$0xff]
    %v537 = vsel %vm173, %v533, 0.0
    %538 = vadd.xlane.f32.xlu0 %v537
    %v539 = vpop.xlane.xlu0 %538
    %v540 = vsel %vm173, %v534, 0.0
    %541 = vadd.xlane.f32.xlu0 %v540
    %v542 = vpop.xlane.xlu0 %541
    %v543 = vrcp.pop 64.0
    %v544 = vmul.f32 %v539, %v543
    %v545 = vmul.f32 %v542, %v543
    %v546 = vsub.f32 %v533, %v544
    %v547 = vsub.f32 %v534, %v545
    %v548 = vmul.f32 %v546, %v546
    %v549 = vmul.f32 %v547, %v547
    %v550 = vsel %vm173, %v548, 0.0
    %551 = vadd.xlane.f32.xlu0 %v550
    %v552 = vpop.xlane.xlu0 %551
    %v553 = vsel %vm173, %v549, 0.0
    %554 = vadd.xlane.f32.xlu0 %v553
    %v555 = vpop.xlane.xlu0 %554
    %v556 = vmul.f32 %v552, %v543
    %v557 = vmul.f32 %v555, %v543
    %v558 = vadd.f32 %v556, 1e-05
    %v559 = vadd.f32 %v557, 1e-05
    %v560 = vrsqrt.pop %v558
    %v561 = vrsqrt.pop %v559
    %v562 = vmul.f32 %v546, %v560
    %v563 = vmul.f32 %v547, %v561
    %v564 = vmul.f32 %v562, %v535
    %v565 = vmul.f32 %v563, %v535
    %v566 = vadd.f32 %v564, %v536
    %v567 = vadd.f32 %v565, %v536
    %v568 = vld [vmem:[#allocation2 + $0x90] sm:$0xf]
    %v569 = vld [vmem:[#allocation2 + $0x98] sm:$0xf]
    %v570 = vld [vmem:[#allocation2 + $0xa0] sm:$0xf]
    %v571 = vld [vmem:[#allocation2 + $0xa8] sm:$0xf]
    %v572 = vld [vmem:[#allocation2 + $0xb0] sm:$0xf]
    %v573 = vld [vmem:[#allocation2 + $0xb8] sm:$0xf]
    %v574 = vld [vmem:[#allocation2 + $0xc0] sm:$0xf]
    %v575 = vld [vmem:[#allocation2 + $0xc8] sm:$0xf]
    %v576 = vpack.c.bf16 %v567, %v566
    %v577 = vld [vmem:[#allocation4 + $0x22] ss:$0 sm:$0xff]
    %v586 = vunpack.c.l.b16 %v568
    %v587 = vunpack.c.l.b16 %v569
    %v588 = vunpack.c.l.b16 %v570
    %v589 = vunpack.c.l.b16 %v571
    %v590 = vunpack.c.l.b16 %v572
    %v591 = vunpack.c.l.b16 %v573
    %v592 = vunpack.c.l.b16 %v574
    %v593 = vunpack.c.l.b16 %v575
    %v594 = vpack.c.b16 %v587, %v586
    %v595 = vpack.c.b16 %v589, %v588
    %v596 = vpack.c.b16 %v591, %v590
    %v597 = vpack.c.b16 %v593, %v592
    %v603 = vsel %vm173, %v576, 0
    %605 = vmatprep.subr.bf16.mxu0 0
    %606 = vmatpush1.bf16.msra.mxu0 %v594
    %607 = vmatprep.subr.bf16.mxu0 0
    %608 = vmatpush1.bf16.msra.mxu0 %v595
    %609 = vmatprep.subr.bf16.mxu0 0
    %610 = vmatpush1.bf16.msra.mxu0 %v596
    %611 = vmatprep.subr.bf16.mxu0 0
    %612 = vmatpush1.bf16.msra.mxu0 %v597
    %613 = vmatprep.subr.bf16.mxu0 0
    %614 = vmatpush1.bf16.msra.mxu0 0
    %615 = vmatprep.subr.bf16.mxu0 0
    %616 = vmatpush1.bf16.msra.mxu0 0
    %617 = vmatprep.subr.bf16.mxu0 0
    %618 = vmatpush1.bf16.msra.mxu0 0
    %619 = vmatprep.subr.bf16.mxu0 0
    %620 = vmatpush1.bf16.msra.mxu0 0
    %621 = vmatprep.subr.bf16.mxu0 0
    %622 = vmatpush1.bf16.msra.mxu0 0
    %623 = vmatprep.subr.bf16.mxu0 0
    %624 = vmatpush1.bf16.msra.mxu0 0
    %625 = vmatprep.subr.bf16.mxu0 0
    %626 = vmatpush1.bf16.msra.mxu0 0
    %627 = vmatprep.subr.bf16.mxu0 0
    %628 = vmatpush1.bf16.msra.mxu0 0
    %629 = vmatprep.subr.bf16.mxu0 0
    %630 = vmatpush1.bf16.msra.mxu0 0
    %631 = vmatprep.subr.bf16.mxu0 0
    %632 = vmatpush1.bf16.msra.mxu0 0
    %633 = vmatprep.subr.bf16.mxu0 0
    %634 = vmatpush1.bf16.msra.mxu0 0
    %635 = vmatprep.subr.bf16.mxu0 0
    %636 = vmatpush1.bf16.msra.mxu0 0
    %637 = vmatprep.mubr.bf16.mxu0 0
    %638 = vmatmul.mubr.bf16.gmra.mrb[0].mxu0 %v603
    %v639 = vpop.f32.mrb[0].mxu0
    %v640 = vadd.f32 %v577, %v639
    %v641 = vpop.f32.mrb[0].mxu0
    %v642 = vpop.f32.mrb[0].mxu0
    %v643 = vadd.f32 %v577, %v642
    %v644 = vpop.f32.mrb[0].mxu0
    %645 = vdwg.mxu0
    %v646 = vmax.f32 %v640, 0.0
    %v647 = vmax.f32 %v643, 0.0
    %v648 = vld [vmem:[#allocation2 + $0xd0] sm:$0xf]
    %v649 = vld [vmem:[#allocation2 + $0xd8] sm:$0xf]
    %v650 = vld [vmem:[#allocation2 + $0xe0] sm:$0xf]
    %v651 = vld [vmem:[#allocation2 + $0xe8] sm:$0xf]
    %v652 = vld [vmem:[#allocation2 + $0xf0] sm:$0xf]
    %v653 = vld [vmem:[#allocation2 + $0xf8] sm:$0xf]
    %v654 = vld [vmem:[#allocation2 + $0x100] sm:$0xf]
    %v655 = vld [vmem:[#allocation2 + $0x108] sm:$0xf]
    %v656 = vpack.c.bf16 %v647, %v646
    %v657 = vld [vmem:[#allocation4 + $0x23] ss:$0 sm:$0xff]
    %v666 = vunpack.c.l.b16 %v648
    %v667 = vunpack.c.l.b16 %v649
    %v668 = vunpack.c.l.b16 %v650
    %v669 = vunpack.c.l.b16 %v651
    %v670 = vunpack.c.l.b16 %v652
    %v671 = vunpack.c.l.b16 %v653
    %v672 = vunpack.c.l.b16 %v654
    %v673 = vunpack.c.l.b16 %v655
    %v674 = vpack.c.b16 %v667, %v666
    %v675 = vpack.c.b16 %v669, %v668
    %v676 = vpack.c.b16 %v671, %v670
    %v677 = vpack.c.b16 %v673, %v672
    %v683 = vsel %vm173, %v656, 0
    %685 = vmatprep.subr.bf16.mxu0 0
    %686 = vmatpush1.bf16.msra.mxu0 %v674
    %687 = vmatprep.subr.bf16.mxu0 0
    %688 = vmatpush1.bf16.msra.mxu0 %v675
    %689 = vmatprep.subr.bf16.mxu0 0
    %690 = vmatpush1.bf16.msra.mxu0 %v676
    %691 = vmatprep.subr.bf16.mxu0 0
    %692 = vmatpush1.bf16.msra.mxu0 %v677
    %693 = vmatprep.subr.bf16.mxu0 0
    %694 = vmatpush1.bf16.msra.mxu0 0
    %695 = vmatprep.subr.bf16.mxu0 0
    %696 = vmatpush1.bf16.msra.mxu0 0
    %697 = vmatprep.subr.bf16.mxu0 0
    %698 = vmatpush1.bf16.msra.mxu0 0
    %699 = vmatprep.subr.bf16.mxu0 0
    %700 = vmatpush1.bf16.msra.mxu0 0
    %701 = vmatprep.subr.bf16.mxu0 0
    %702 = vmatpush1.bf16.msra.mxu0 0
    %703 = vmatprep.subr.bf16.mxu0 0
    %704 = vmatpush1.bf16.msra.mxu0 0
    %705 = vmatprep.subr.bf16.mxu0 0
    %706 = vmatpush1.bf16.msra.mxu0 0
    %707 = vmatprep.subr.bf16.mxu0 0
    %708 = vmatpush1.bf16.msra.mxu0 0
    %709 = vmatprep.subr.bf16.mxu0 0
    %710 = vmatpush1.bf16.msra.mxu0 0
    %711 = vmatprep.subr.bf16.mxu0 0
    %712 = vmatpush1.bf16.msra.mxu0 0
    %713 = vmatprep.subr.bf16.mxu0 0
    %714 = vmatpush1.bf16.msra.mxu0 0
    %715 = vmatprep.subr.bf16.mxu0 0
    %716 = vmatpush1.bf16.msra.mxu0 0
    %717 = vmatprep.mubr.bf16.mxu0 0
    %718 = vmatmul.mubr.bf16.gmra.mrb[0].mxu0 %v683
    %v719 = vpop.f32.mrb[0].mxu0
    %v720 = vadd.f32 %v657, %v719
    %v721 = vpop.f32.mrb[0].mxu0
    %v722 = vpop.f32.mrb[0].mxu0
    %v723 = vadd.f32 %v657, %v722
    %v724 = vpop.f32.mrb[0].mxu0
    %725 = vdwg.mxu0
    %v726 = vadd.f32 %v566, %v720
    %v727 = vadd.f32 %v567, %v723
    %v728 = vld [vmem:[#allocation4 + $0x26] ss:$0 sm:$0xff]
    %v729 = vld [vmem:[#allocation4 + $0x27] ss:$0 sm:$0xff]
    %v730 = vsel %vm173, %v726, 0.0
    %731 = vadd.xlane.f32.xlu0 %v730
    %v732 = vpop.xlane.xlu0 %731
    %v733 = vsel %vm173, %v727, 0.0
    %734 = vadd.xlane.f32.xlu0 %v733
    %v735 = vpop.xlane.xlu0 %734
    %v736 = vmul.f32 %v732, %v543
    %v737 = vmul.f32 %v735, %v543
    %v738 = vsub.f32 %v726, %v736
    %v739 = vsub.f32 %v727, %v737
    %v740 = vmul.f32 %v738, %v738
    %v741 = vmul.f32 %v739, %v739
    %v742 = vsel %vm173, %v740, 0.0
    %743 = vadd.xlane.f32.xlu0 %v742
    %v744 = vpop.xlane.xlu0 %743
    %v745 = vsel %vm173, %v741, 0.0
    %746 = vadd.xlane.f32.xlu0 %v745
    %v747 = vpop.xlane.xlu0 %746
    %v748 = vmul.f32 %v744, %v543
    %v749 = vmul.f32 %v747, %v543
    %v750 = vadd.f32 %v748, 1e-05
    %v751 = vadd.f32 %v749, 1e-05
    %v752 = vrsqrt.pop %v750
    %v753 = vrsqrt.pop %v751
    %v754 = vmul.f32 %v738, %v752
    %v755 = vmul.f32 %v739, %v753
    %v756 = vmul.f32 %v754, %v728
    %v757 = vmul.f32 %v755, %v728
    %v758 = vadd.f32 %v756, %v729
    %v759 = vadd.f32 %v757, %v729
    %v760 = vld [vmem:[#allocation2 + $0x110] sm:$0xff]
    %v761 = vld [vmem:[#allocation2 + $0x118] sm:$0xff]
    %v762 = vld [vmem:[#allocation2 + $0x120] sm:$0xff]
    %v763 = vld [vmem:[#allocation2 + $0x128] sm:$0xff]
    %v764 = vld [vmem:[#allocation2 + $0x130] sm:$0xff]
    %v765 = vld [vmem:[#allocation2 + $0x138] sm:$0xff]
    %v766 = vld [vmem:[#allocation2 + $0x140] sm:$0xff]
    %v767 = vld [vmem:[#allocation2 + $0x148] sm:$0xff]
    %v768 = vpack.c.bf16 %v759, %v758
    %s769 = scalar_lea.vmem [#allocation4], 48
    %v770 = vld [vmem:[%s769] ss:$8 sm:$0x3]
    %v772 = vlaneseq
    %v773 = vshrl.u32 %v772, 7
    %v774 = vsub.s32 0, %v773
    %v775 = vrot.slane %v770, %v774
    %v776 = vlaneseq
    %v777 = vshrl.u32 %v776, 7
    %v778 = vsub.s32 1, %v777
    %v779 = vrot.slane %v770, %v778
    %v790 = vunpack.c.l.b16 %v760
    %v791 = vunpack.c.h.b16 %v760
    %v792 = vunpack.c.l.b16 %v761
    %v793 = vunpack.c.h.b16 %v761
    %v794 = vunpack.c.l.b16 %v762
    %v795 = vunpack.c.h.b16 %v762
    %v796 = vunpack.c.l.b16 %v763
    %v797 = vunpack.c.h.b16 %v763
    %v798 = vunpack.c.l.b16 %v764
    %v799 = vunpack.c.h.b16 %v764
    %v800 = vunpack.c.l.b16 %v765
    %v801 = vunpack.c.h.b16 %v765
    %v802 = vunpack.c.l.b16 %v766
    %v803 = vunpack.c.h.b16 %v766
    %v804 = vunpack.c.l.b16 %v767
    %v805 = vunpack.c.h.b16 %v767
    %v806 = vpack.c.b16 %v792, %v790
    %v807 = vpack.c.b16 %v793, %v791
    %v808 = vpack.c.b16 %v796, %v794
    %v809 = vpack.c.b16 %v797, %v795
    %v810 = vpack.c.b16 %v800, %v798
    %v811 = vpack.c.b16 %v801, %v799
    %v812 = vpack.c.b16 %v804, %v802
    %v813 = vpack.c.b16 %v805, %v803
    %v823 = vsel %vm173, %v768, 0
    %825 = vmatprep.subr.bf16.mxu0 %v807
    %826 = vmatpush1.bf16.msra.mxu0 %v806
    %827 = vmatprep.subr.bf16.mxu0 %v809
    %828 = vmatpush1.bf16.msra.mxu0 %v808
    %829 = vmatprep.subr.bf16.mxu0 %v811
    %830 = vmatpush1.bf16.msra.mxu0 %v810
    %831 = vmatprep.subr.bf16.mxu0 %v813
    %832 = vmatpush1.bf16.msra.mxu0 %v812
    %833 = vmatprep.subr.bf16.mxu0 0
    %834 = vmatpush1.bf16.msra.mxu0 0
    %835 = vmatprep.subr.bf16.mxu0 0
    %836 = vmatpush1.bf16.msra.mxu0 0
    %837 = vmatprep.subr.bf16.mxu0 0
    %838 = vmatpush1.bf16.msra.mxu0 0
    %839 = vmatprep.subr.bf16.mxu0 0
    %840 = vmatpush1.bf16.msra.mxu0 0
    %841 = vmatprep.subr.bf16.mxu0 0
    %842 = vmatpush1.bf16.msra.mxu0 0
    %843 = vmatprep.subr.bf16.mxu0 0
    %844 = vmatpush1.bf16.msra.mxu0 0
    %845 = vmatprep.subr.bf16.mxu0 0
    %846 = vmatpush1.bf16.msra.mxu0 0
    %847 = vmatprep.subr.bf16.mxu0 0
    %848 = vmatpush1.bf16.msra.mxu0 0
    %849 = vmatprep.subr.bf16.mxu0 0
    %850 = vmatpush1.bf16.msra.mxu0 0
    %851 = vmatprep.subr.bf16.mxu0 0
    %852 = vmatpush1.bf16.msra.mxu0 0
    %853 = vmatprep.subr.bf16.mxu0 0
    %854 = vmatpush1.bf16.msra.mxu0 0
    %855 = vmatprep.subr.bf16.mxu0 0
    %856 = vmatpush1.bf16.msra.mxu0 0
    %857 = vmatprep.mubr.bf16.mxu0 0
    %858 = vmatmul.mubr.bf16.gmra.mrb[0].mxu0 %v823
    %v859 = vpop.f32.mrb[0].mxu0
    %v860 = vadd.f32 %v775, %v859
    %v861 = vpop.f32.mrb[0].mxu0
    %v862 = vadd.f32 %v779, %v861
    %v863 = vpop.f32.mrb[0].mxu0
    %v864 = vadd.f32 %v775, %v863
    %v865 = vpop.f32.mrb[0].mxu0
    %v866 = vadd.f32 %v779, %v865
    %867 = vdwg.mxu0
    %870 = vrot.lane.b32.xlu0 %v860, 64
    %v871 = vpop.permute.xlu0 %870
    %872 = vrot.lane.b32.xlu0 %v864, 64
    %v873 = vpop.permute.xlu0 %872
    %v876 = vmul.f32 %v860, %v871
    %v877 = vmul.f32 %v864, %v873
    %v879 = vsel %vm173, %v876, 0
    %v882 = vsel %vm173, %v877, 0
    %884 = vmatprep.subr.mxu0 0.0
    %885 = vmatpush1.msra.mxu0 %v242
    %886 = vmatprep.subr.mxu0 0.0
    %887 = vmatpush1.msra.mxu0 %v244
    %888 = vmatprep.subr.mxu0 0.0
    %889 = vmatpush1.msra.mxu0 %v246
    %890 = vmatprep.subr.mxu0 0.0
    %891 = vmatpush1.msra.mxu0 %v248
    %892 = vmatprep.subr.mxu0 0.0
    %893 = vmatpush1.msra.mxu0 %v250
    %894 = vmatprep.subr.mxu0 0.0
    %895 = vmatpush1.msra.mxu0 %v252
    %896 = vmatprep.subr.mxu0 0.0
    %897 = vmatpush1.msra.mxu0 %v254
    %898 = vmatprep.subr.mxu0 0.0
    %899 = vmatpush1.msra.mxu0 %v256
    %900 = vmatprep.subr.mxu0 0.0
    %901 = vmatpush1.msra.mxu0 0.0
    %902 = vmatprep.subr.mxu0 0.0
    %903 = vmatpush1.msra.mxu0 0.0
    %904 = vmatprep.subr.mxu0 0.0
    %905 = vmatpush1.msra.mxu0 0.0
    %906 = vmatprep.subr.mxu0 0.0
    %907 = vmatpush1.msra.mxu0 0.0
    %908 = vmatprep.subr.mxu0 0.0
    %909 = vmatpush1.msra.mxu0 0.0
    %910 = vmatprep.subr.mxu0 0.0
    %911 = vmatpush1.msra.mxu0 0.0
    %912 = vmatprep.subr.mxu0 0.0
    %913 = vmatpush1.msra.mxu0 0.0
    %914 = vmatprep.subr.mxu0 0.0
    %915 = vmatpush1.msra.mxu0 0.0
    %916 = vmatprep.subr.mxu0 0.0
    %917 = vmatpush1.msra.mxu0 0.0
    %918 = vmatprep.subr.mxu0 0.0
    %919 = vmatpush1.msra.mxu0 0.0
    %920 = vmatprep.subr.mxu0 0.0
    %921 = vmatpush1.msra.mxu0 0.0
    %922 = vmatprep.subr.mxu0 0.0
    %923 = vmatpush1.msra.mxu0 0.0
    %924 = vmatprep.subr.mxu0 0.0
    %925 = vmatpush1.msra.mxu0 0.0
    %926 = vmatprep.subr.mxu0 0.0
    %927 = vmatpush1.msra.mxu0 0.0
    %928 = vmatprep.subr.mxu0 0.0
    %929 = vmatpush1.msra.mxu0 0.0
    %930 = vmatprep.subr.mxu0 0.0
    %931 = vmatpush1.msra.mxu0 0.0
    %932 = vmatprep.subr.mxu0 0.0
    %933 = vmatpush1.msra.mxu0 0.0
    %934 = vmatprep.subr.mxu0 0.0
    %935 = vmatpush1.msra.mxu0 0.0
    %936 = vmatprep.subr.mxu0 0.0
    %937 = vmatpush1.msra.mxu0 0.0
    %938 = vmatprep.subr.mxu0 0.0
    %939 = vmatpush1.msra.mxu0 0.0
    %940 = vmatprep.subr.mxu0 0.0
    %941 = vmatpush1.msra.mxu0 0.0
    %942 = vmatprep.subr.mxu0 0.0
    %943 = vmatpush1.msra.mxu0 0.0
    %944 = vmatprep.subr.mxu0 0.0
    %945 = vmatpush1.msra.mxu0 0.0
    %946 = vmatprep.subr.mxu0 0.0
    %947 = vmatpush1.msra.mxu0 0.0
    %948 = vmatprep.mubr.f32.mxu0 0.0
    %949 = vmatmul.mubr.f32.gmra.mrb[0].mxu0 %v879
    %v950 = vpop.f32.mrb[0].mxu0
    %v951 = vadd.f32 0.0, %v950
    %v952 = vpop.f32.mrb[0].mxu0
    %953 = vmatprep.mubr.f32.mxu0 0.0
    %954 = vmatmul.mubr.f32.gmra.mrb[0].mxu0 %v882
    %v955 = vpop.f32.mrb[0].mxu0
    %v956 = vadd.f32 0.0, %v955
    %v957 = vpop.f32.mrb[0].mxu0
    %958 = vdwg.mxu0
    %v959 = vmul.f32 %v860, %v873
    %v960 = vmul.f32 %v864, %v871
    %v962 = vsel %vm173, %v959, 0
    %v965 = vsel %vm173, %v960, 0
    %967 = vmatprep.subr.mxu0 0.0
    %968 = vmatpush1.msra.mxu0 %v242
    %969 = vmatprep.subr.mxu0 0.0
    %970 = vmatpush1.msra.mxu0 %v244
    %971 = vmatprep.subr.mxu0 0.0
    %972 = vmatpush1.msra.mxu0 %v246
    %973 = vmatprep.subr.mxu0 0.0
    %974 = vmatpush1.msra.mxu0 %v248
    %975 = vmatprep.subr.mxu0 0.0
    %976 = vmatpush1.msra.mxu0 %v250
    %977 = vmatprep.subr.mxu0 0.0
    %978 = vmatpush1.msra.mxu0 %v252
    %979 = vmatprep.subr.mxu0 0.0
    %980 = vmatpush1.msra.mxu0 %v254
    %981 = vmatprep.subr.mxu0 0.0
    %982 = vmatpush1.msra.mxu0 %v256
    %983 = vmatprep.subr.mxu0 0.0
    %984 = vmatpush1.msra.mxu0 0.0
    %985 = vmatprep.subr.mxu0 0.0
    %986 = vmatpush1.msra.mxu0 0.0
    %987 = vmatprep.subr.mxu0 0.0
    %988 = vmatpush1.msra.mxu0 0.0
    %989 = vmatprep.subr.mxu0 0.0
    %990 = vmatpush1.msra.mxu0 0.0
    %991 = vmatprep.subr.mxu0 0.0
    %992 = vmatpush1.msra.mxu0 0.0
    %993 = vmatprep.subr.mxu0 0.0
    %994 = vmatpush1.msra.mxu0 0.0
    %995 = vmatprep.subr.mxu0 0.0
    %996 = vmatpush1.msra.mxu0 0.0
    %997 = vmatprep.subr.mxu0 0.0
    %998 = vmatpush1.msra.mxu0 0.0
    %999 = vmatprep.subr.mxu0 0.0
    %1000 = vmatpush1.msra.mxu0 0.0
    %1001 = vmatprep.subr.mxu0 0.0
    %1002 = vmatpush1.msra.mxu0 0.0
    %1003 = vmatprep.subr.mxu0 0.0
    %1004 = vmatpush1.msra.mxu0 0.0
    %1005 = vmatprep.subr.mxu0 0.0
    %1006 = vmatpush1.msra.mxu0 0.0
    %1007 = vmatprep.subr.mxu0 0.0
    %1008 = vmatpush1.msra.mxu0 0.0
    %1009 = vmatprep.subr.mxu0 0.0
    %1010 = vmatpush1.msra.mxu0 0.0
    %1011 = vmatprep.subr.mxu0 0.0
    %1012 = vmatpush1.msra.mxu0 0.0
    %1013 = vmatprep.subr.mxu0 0.0
    %1014 = vmatpush1.msra.mxu0 0.0
    %1015 = vmatprep.subr.mxu0 0.0
    %1016 = vmatpush1.msra.mxu0 0.0
    %1017 = vmatprep.subr.mxu0 0.0
    %1018 = vmatpush1.msra.mxu0 0.0
    %1019 = vmatprep.subr.mxu0 0.0
    %1020 = vmatpush1.msra.mxu0 0.0
    %1021 = vmatprep.subr.mxu0 0.0
    %1022 = vmatpush1.msra.mxu0 0.0
    %1023 = vmatprep.subr.mxu0 0.0
    %1024 = vmatpush1.msra.mxu0 0.0
    %1025 = vmatprep.subr.mxu0 0.0
    %1026 = vmatpush1.msra.mxu0 0.0
    %1027 = vmatprep.subr.mxu0 0.0
    %1028 = vmatpush1.msra.mxu0 0.0
    %1029 = vmatprep.subr.mxu0 0.0
    %1030 = vmatpush1.msra.mxu0 0.0
    %1031 = vmatprep.mubr.f32.mxu0 0.0
    %1032 = vmatmul.mubr.f32.gmra.mrb[0].mxu0 %v962
    %v1033 = vpop.f32.mrb[0].mxu0
    %v1034 = vadd.f32 0.0, %v1033
    %v1035 = vpop.f32.mrb[0].mxu0
    %1036 = vmatprep.mubr.f32.mxu0 0.0
    %1037 = vmatmul.mubr.f32.gmra.mrb[0].mxu0 %v965
    %v1038 = vpop.f32.mrb[0].mxu0
    %v1039 = vadd.f32 0.0, %v1038
    %v1040 = vpop.f32.mrb[0].mxu0
    %1041 = vdwg.mxu0
    %v1042 = vmax.f32 %v951, %v1034
    %v1043 = vmax.f32 %v956, %v1039
    %v1044 = vsub.f32 %v951, %v1042
    %v1045 = vsub.f32 %v956, %v1043
    %v1046 = vmul.f32 %v1044, 1.442695
    %v1047 = vpow.pop %v1046
    %v1048 = vmul.f32 %v1045, 1.442695
    %v1049 = vpow.pop %v1048
    %v1050 = vsub.f32 %v1034, %v1042
    %v1051 = vsub.f32 %v1039, %v1043
    %v1052 = vmul.f32 %v1050, 1.442695
    %v1053 = vpow.pop %v1052
    %v1054 = vmul.f32 %v1051, 1.442695
    %v1055 = vpow.pop %v1054
    %v1056 = vadd.f32 %v1047, %v1053
    %v1057 = vadd.f32 %v1049, %v1055
    %v1058 = vrcp.pop %v1056
    %v1059 = vrcp.pop %v1057
    %v1060 = vmul.f32 %v1047, %v862
    %v1061 = vmul.f32 %v1049, %v866
    %v1062 = vmul.f32 %v1053, %v866
    %v1063 = vmul.f32 %v1055, %v862
    %v1064 = vadd.f32 %v1060, %v1062
    %v1065 = vadd.f32 %v1061, %v1063
    %v1066 = vmul.f32 %v1064, %v1058
    %v1067 = vmul.f32 %v1065, %v1059
    %v1068 = vld [vmem:[#allocation2 + $0x150] sm:$0xf]
    %v1069 = vld [vmem:[#allocation2 + $0x158] sm:$0xf]
    %v1070 = vld [vmem:[#allocation2 + $0x160] sm:$0xf]
    %v1071 = vld [vmem:[#allocation2 + $0x168] sm:$0xf]
    %v1072 = vld [vmem:[#allocation2 + $0x170] sm:$0xf]
    %v1073 = vld [vmem:[#allocation2 + $0x178] sm:$0xf]
    %v1074 = vld [vmem:[#allocation2 + $0x180] sm:$0xf]
    %v1075 = vld [vmem:[#allocation2 + $0x188] sm:$0xf]
    %v1076 = vpack.c.bf16 %v1067, %v1066
    %v1077 = vld [vmem:[#allocation4 + $0x31] ss:$0 sm:$0xff]
    %v1086 = vunpack.c.l.b16 %v1068
    %v1087 = vunpack.c.l.b16 %v1069
    %v1088 = vunpack.c.l.b16 %v1070
    %v1089 = vunpack.c.l.b16 %v1071
    %v1090 = vunpack.c.l.b16 %v1072
    %v1091 = vunpack.c.l.b16 %v1073
    %v1092 = vunpack.c.l.b16 %v1074
    %v1093 = vunpack.c.l.b16 %v1075
    %v1094 = vpack.c.b16 %v1087, %v1086
    %v1095 = vpack.c.b16 %v1089, %v1088
    %v1096 = vpack.c.b16 %v1091, %v1090
    %v1097 = vpack.c.b16 %v1093, %v1092
    %v1103 = vsel %vm173, %v1076, 0
    %1105 = vmatprep.subr.bf16.mxu0 0
    %1106 = vmatpush1.bf16.msra.mxu0 %v1094
    %1107 = vmatprep.subr.bf16.mxu0 0
    %1108 = vmatpush1.bf16.msra.mxu0 %v1095
    %1109 = vmatprep.subr.bf16.mxu0 0
    %1110 = vmatpush1.bf16.msra.mxu0 %v1096
    %1111 = vmatprep.subr.bf16.mxu0 0
    %1112 = vmatpush1.bf16.msra.mxu0 %v1097
    %1113 = vmatprep.subr.bf16.mxu0 0
    %1114 = vmatpush1.bf16.msra.mxu0 0
    %1115 = vmatprep.subr.bf16.mxu0 0
    %1116 = vmatpush1.bf16.msra.mxu0 0
    %1117 = vmatprep.subr.bf16.mxu0 0
    %1118 = vmatpush1.bf16.msra.mxu0 0
    %1119 = vmatprep.subr.bf16.mxu0 0
    %1120 = vmatpush1.bf16.msra.mxu0 0
    %1121 = vmatprep.subr.bf16.mxu0 0
    %1122 = vmatpush1.bf16.msra.mxu0 0
    %1123 = vmatprep.subr.bf16.mxu0 0
    %1124 = vmatpush1.bf16.msra.mxu0 0
    %1125 = vmatprep.subr.bf16.mxu0 0
    %1126 = vmatpush1.bf16.msra.mxu0 0
    %1127 = vmatprep.subr.bf16.mxu0 0
    %1128 = vmatpush1.bf16.msra.mxu0 0
    %1129 = vmatprep.subr.bf16.mxu0 0
    %1130 = vmatpush1.bf16.msra.mxu0 0
    %1131 = vmatprep.subr.bf16.mxu0 0
    %1132 = vmatpush1.bf16.msra.mxu0 0
    %1133 = vmatprep.subr.bf16.mxu0 0
    %1134 = vmatpush1.bf16.msra.mxu0 0
    %1135 = vmatprep.subr.bf16.mxu0 0
    %1136 = vmatpush1.bf16.msra.mxu0 0
    %1137 = vmatprep.mubr.bf16.mxu0 0
    %1138 = vmatmul.mubr.bf16.gmra.mrb[0].mxu0 %v1103
    %v1139 = vpop.f32.mrb[0].mxu0
    %v1140 = vadd.f32 %v1077, %v1139
    %v1141 = vpop.f32.mrb[0].mxu0
    %v1142 = vpop.f32.mrb[0].mxu0
    %v1143 = vadd.f32 %v1077, %v1142
    %v1144 = vpop.f32.mrb[0].mxu0
    %1145 = vdwg.mxu0
    %v1146 = vadd.f32 %v758, %v1140
    %v1147 = vadd.f32 %v759, %v1143
    %v1148 = vld [vmem:[#allocation4 + $0x34] ss:$0 sm:$0xff]
    %v1149 = vld [vmem:[#allocation4 + $0x35] ss:$0 sm:$0xff]
    %v1150 = vsel %vm173, %v1146, 0.0
    %1151 = vadd.xlane.f32.xlu0 %v1150
    %v1152 = vpop.xlane.xlu0 %1151
    %v1153 = vsel %vm173, %v1147, 0.0
    %1154 = vadd.xlane.f32.xlu0 %v1153
    %v1155 = vpop.xlane.xlu0 %1154
    %v1156 = vmul.f32 %v1152, %v543
    %v1157 = vmul.f32 %v1155, %v543
    %v1158 = vsub.f32 %v1146, %v1156
    %v1159 = vsub.f32 %v1147, %v1157
    %v1160 = vmul.f32 %v1158, %v1158
    %v1161 = vmul.f32 %v1159, %v1159
    %v1162 = vsel %vm173, %v1160, 0.0
    %1163 = vadd.xlane.f32.xlu0 %v1162
    %v1164 = vpop.xlane.xlu0 %1163
    %v1165 = vsel %vm173, %v1161, 0.0
    %1166 = vadd.xlane.f32.xlu0 %v1165
    %v1167 = vpop.xlane.xlu0 %1166
    %v1168 = vmul.f32 %v1164, %v543
    %v1169 = vmul.f32 %v1167, %v543
    %v1170 = vadd.f32 %v1168, 1e-05
    %v1171 = vadd.f32 %v1169, 1e-05
    %v1172 = vrsqrt.pop %v1170
    %v1173 = vrsqrt.pop %v1171
    %v1174 = vmul.f32 %v1158, %v1172
    %v1175 = vmul.f32 %v1159, %v1173
    %v1176 = vmul.f32 %v1174, %v1148
    %v1177 = vmul.f32 %v1175, %v1148
    %v1178 = vadd.f32 %v1176, %v1149
    %v1179 = vadd.f32 %v1177, %v1149
    %v1180 = vld [vmem:[#allocation2 + $0x190] sm:$0xf]
    %v1181 = vld [vmem:[#allocation2 + $0x198] sm:$0xf]
    %v1182 = vld [vmem:[#allocation2 + $0x1a0] sm:$0xf]
    %v1183 = vld [vmem:[#allocation2 + $0x1a8] sm:$0xf]
    %v1184 = vld [vmem:[#allocation2 + $0x1b0] sm:$0xf]
    %v1185 = vld [vmem:[#allocation2 + $0x1b8] sm:$0xf]
    %v1186 = vld [vmem:[#allocation2 + $0x1c0] sm:$0xf]
    %v1187 = vld [vmem:[#allocation2 + $0x1c8] sm:$0xf]
    %v1188 = vpack.c.bf16 %v1179, %v1178
    %v1189 = vld [vmem:[#allocation4 + $0x32] ss:$0 sm:$0xff]
    %v1198 = vunpack.c.l.b16 %v1180
    %v1199 = vunpack.c.l.b16 %v1181
    %v1200 = vunpack.c.l.b16 %v1182
    %v1201 = vunpack.c.l.b16 %v1183
    %v1202 = vunpack.c.l.b16 %v1184
    %v1203 = vunpack.c.l.b16 %v1185
    %v1204 = vunpack.c.l.b16 %v1186
    %v1205 = vunpack.c.l.b16 %v1187
    %v1206 = vpack.c.b16 %v1199, %v1198
    %v1207 = vpack.c.b16 %v1201, %v1200
    %v1208 = vpack.c.b16 %v1203, %v1202
    %v1209 = vpack.c.b16 %v1205, %v1204
    %v1215 = vsel %vm173, %v1188, 0
    %1217 = vmatprep.subr.bf16.mxu0 0
    %1218 = vmatpush1.bf16.msra.mxu0 %v1206
    %1219 = vmatprep.subr.bf16.mxu0 0
    %1220 = vmatpush1.bf16.msra.mxu0 %v1207
    %1221 = vmatprep.subr.bf16.mxu0 0
    %1222 = vmatpush1.bf16.msra.mxu0 %v1208
    %1223 = vmatprep.subr.bf16.mxu0 0
    %1224 = vmatpush1.bf16.msra.mxu0 %v1209
    %1225 = vmatprep.subr.bf16.mxu0 0
    %1226 = vmatpush1.bf16.msra.mxu0 0
    %1227 = vmatprep.subr.bf16.mxu0 0
    %1228 = vmatpush1.bf16.msra.mxu0 0
    %1229 = vmatprep.subr.bf16.mxu0 0
    %1230 = vmatpush1.bf16.msra.mxu0 0
    %1231 = vmatprep.subr.bf16.mxu0 0
    %1232 = vmatpush1.bf16.msra.mxu0 0
    %1233 = vmatprep.subr.bf16.mxu0 0
    %1234 = vmatpush1.bf16.msra.mxu0 0
    %1235 = vmatprep.subr.bf16.mxu0 0
    %1236 = vmatpush1.bf16.msra.mxu0 0
    %1237 = vmatprep.subr.bf16.mxu0 0
    %1238 = vmatpush1.bf16.msra.mxu0 0
    %1239 = vmatprep.subr.bf16.mxu0 0
    %1240 = vmatpush1.bf16.msra.mxu0 0
    %1241 = vmatprep.subr.bf16.mxu0 0
    %1242 = vmatpush1.bf16.msra.mxu0 0
    %1243 = vmatprep.subr.bf16.mxu0 0
    %1244 = vmatpush1.bf16.msra.mxu0 0
    %1245 = vmatprep.subr.bf16.mxu0 0
    %1246 = vmatpush1.bf16.msra.mxu0 0
    %1247 = vmatprep.subr.bf16.mxu0 0
    %1248 = vmatpush1.bf16.msra.mxu0 0
    %1249 = vmatprep.mubr.bf16.mxu0 0
    %1250 = vmatmul.mubr.bf16.gmra.mrb[0].mxu0 %v1215
    %v1251 = vpop.f32.mrb[0].mxu0
    %v1252 = vadd.f32 %v1189, %v1251
    %v1253 = vpop.f32.mrb[0].mxu0
    %v1254 = vpop.f32.mrb[0].mxu0
    %v1255 = vadd.f32 %v1189, %v1254
    %v1256 = vpop.f32.mrb[0].mxu0
    %1257 = vdwg.mxu0
    %v1258 = vmax.f32 %v1252, 0.0
    %v1259 = vmax.f32 %v1255, 0.0
    %v1260 = vld [vmem:[#allocation2 + $0x1d0] sm:$0xf]
    %v1261 = vld [vmem:[#allocation2 + $0x1d8] sm:$0xf]
    %v1262 = vld [vmem:[#allocation2 + $0x1e0] sm:$0xf]
    %v1263 = vld [vmem:[#allocation2 + $0x1e8] sm:$0xf]
    %v1264 = vld [vmem:[#allocation2 + $0x1f0] sm:$0xf]
    %v1265 = vld [vmem:[#allocation2 + $0x1f8] sm:$0xf]
    %v1266 = vld [vmem:[#allocation2 + $0x200] sm:$0xf]
    %v1267 = vld [vmem:[#allocation2 + $0x208] sm:$0xf]
    %v1268 = vpack.c.bf16 %v1259, %v1258
    %v1269 = vld [vmem:[#allocation4 + $0x33] ss:$0 sm:$0xff]
    %v1278 = vunpack.c.l.b16 %v1260
    %v1279 = vunpack.c.l.b16 %v1261
    %v1280 = vunpack.c.l.b16 %v1262
    %v1281 = vunpack.c.l.b16 %v1263
    %v1282 = vunpack.c.l.b16 %v1264
    %v1283 = vunpack.c.l.b16 %v1265
    %v1284 = vunpack.c.l.b16 %v1266
    %v1285 = vunpack.c.l.b16 %v1267
    %v1286 = vpack.c.b16 %v1279, %v1278
    %v1287 = vpack.c.b16 %v1281, %v1280
    %v1288 = vpack.c.b16 %v1283, %v1282
    %v1289 = vpack.c.b16 %v1285, %v1284
    %v1295 = vsel %vm173, %v1268, 0
    %1297 = vmatprep.subr.bf16.mxu0 0
    %1298 = vmatpush1.bf16.msra.mxu0 %v1286
    %1299 = vmatprep.subr.bf16.mxu0 0
    %1300 = vmatpush1.bf16.msra.mxu0 %v1287
    %1301 = vmatprep.subr.bf16.mxu0 0
    %1302 = vmatpush1.bf16.msra.mxu0 %v1288
    %1303 = vmatprep.subr.bf16.mxu0 0
    %1304 = vmatpush1.bf16.msra.mxu0 %v1289
    %1305 = vmatprep.subr.bf16.mxu0 0
    %1306 = vmatpush1.bf16.msra.mxu0 0
    %1307 = vmatprep.subr.bf16.mxu0 0
    %1308 = vmatpush1.bf16.msra.mxu0 0
    %1309 = vmatprep.subr.bf16.mxu0 0
    %1310 = vmatpush1.bf16.msra.mxu0 0
    %1311 = vmatprep.subr.bf16.mxu0 0
    %1312 = vmatpush1.bf16.msra.mxu0 0
    %1313 = vmatprep.subr.bf16.mxu0 0
    %1314 = vmatpush1.bf16.msra.mxu0 0
    %1315 = vmatprep.subr.bf16.mxu0 0
    %1316 = vmatpush1.bf16.msra.mxu0 0
    %1317 = vmatprep.subr.bf16.mxu0 0
    %1318 = vmatpush1.bf16.msra.mxu0 0
    %1319 = vmatprep.subr.bf16.mxu0 0
    %1320 = vmatpush1.bf16.msra.mxu0 0
    %1321 = vmatprep.subr.bf16.mxu0 0
    %1322 = vmatpush1.bf16.msra.mxu0 0
    %1323 = vmatprep.subr.bf16.mxu0 0
    %1324 = vmatpush1.bf16.msra.mxu0 0
    %1325 = vmatprep.subr.bf16.mxu0 0
    %1326 = vmatpush1.bf16.msra.mxu0 0
    %1327 = vmatprep.subr.bf16.mxu0 0
    %1328 = vmatpush1.bf16.msra.mxu0 0
    %1329 = vmatprep.mubr.bf16.mxu0 0
    %1330 = vmatmul.mubr.bf16.gmra.mrb[0].mxu0 %v1295
    %v1331 = vpop.f32.mrb[0].mxu0
    %v1332 = vadd.f32 %v1269, %v1331
    %v1333 = vpop.f32.mrb[0].mxu0
    %v1334 = vpop.f32.mrb[0].mxu0
    %v1335 = vadd.f32 %v1269, %v1334
    %v1336 = vpop.f32.mrb[0].mxu0
    %1337 = vdwg.mxu0
    %v1338 = vadd.f32 %v1178, %v1332
    %v1339 = vadd.f32 %v1179, %v1335
    %v1340 = vld [vmem:[#allocation4 + $0x36] ss:$0 sm:$0xff]
    %v1341 = vld [vmem:[#allocation4 + $0x37] ss:$0 sm:$0xff]
    %v1342 = vsel %vm173, %v1338, 0.0
    %1343 = vadd.xlane.f32.xlu0 %v1342
    %v1344 = vpop.xlane.xlu0 %1343
    %v1345 = vsel %vm173, %v1339, 0.0
    %1346 = vadd.xlane.f32.xlu0 %v1345
    %v1347 = vpop.xlane.xlu0 %1346
    %v1348 = vmul.f32 %v1344, %v543
    %v1349 = vmul.f32 %v1347, %v543
    %v1350 = vsub.f32 %v1338, %v1348
    %v1351 = vsub.f32 %v1339, %v1349
    %v1352 = vmul.f32 %v1350, %v1350
    %v1353 = vmul.f32 %v1351, %v1351
    %v1354 = vsel %vm173, %v1352, 0.0
    %1355 = vadd.xlane.f32.xlu0 %v1354
    %v1356 = vpop.xlane.xlu0 %1355
    %v1357 = vsel %vm173, %v1353, 0.0
    %1358 = vadd.xlane.f32.xlu0 %v1357
    %v1359 = vpop.xlane.xlu0 %1358
    %v1360 = vmul.f32 %v1356, %v543
    %v1361 = vmul.f32 %v1359, %v543
    %v1362 = vadd.f32 %v1360, 1e-05
    %v1363 = vadd.f32 %v1361, 1e-05
    %v1364 = vrsqrt.pop %v1362
    %v1365 = vrsqrt.pop %v1363
    %v1366 = vmul.f32 %v1350, %v1364
    %v1367 = vmul.f32 %v1351, %v1365
    %v1368 = vmul.f32 %v1366, %v1340
    %v1369 = vmul.f32 %v1367, %v1340
    %v1370 = vadd.f32 %v1368, %v1341
    %v1371 = vadd.f32 %v1369, %v1341
    %v1372 = vld [vmem:[#allocation4 + $0xc0] sm:$0x80]
    %v1373 = vld [vmem:[#allocation4 + $0xd0] sm:$0xff]
    %v1374 = vld [vmem:[#allocation4 + $0xe0] sm:$0x7f]
    %v1375 = vld [vmem:[#allocation4 + $0xe0] sm:$0x80]
    %v1376 = vld [vmem:[#allocation4 + $0xf0] sm:$0xff]
    %v1377 = vld [vmem:[#allocation4 + $0x100] sm:$0x7f]
    %v1381 = vrot.slane %v1372, 7
    %v1382 = vrot.slane %v1373, 7
    %v1383 = vsel %vm239, %v1381, %v1382
    %v1384 = vrot.slane %v1374, 7
    %v1385 = vsel %vm239, %v1382, %v1384
    %v1386 = vsel %vm57, %v1383, 0
    %v1388 = vsel %vm57, %v1385, 0
    %1390 = vmatprep.subr.mxu0 0.0
    %1391 = vmatpush1.msra.mxu0 %v1370
    %1392 = vmatprep.subr.mxu0 0.0
    %1393 = vmatpush1.msra.mxu0 %v1371
    %1394 = vmatprep.subr.mxu0 0.0
    %1395 = vmatpush1.msra.mxu0 0.0
    %1396 = vmatprep.subr.mxu0 0.0
    %1397 = vmatpush1.msra.mxu0 0.0
    %1398 = vmatprep.subr.mxu0 0.0
    %1399 = vmatpush1.msra.mxu0 0.0
    %1400 = vmatprep.subr.mxu0 0.0
    %1401 = vmatpush1.msra.mxu0 0.0
    %1402 = vmatprep.subr.mxu0 0.0
    %1403 = vmatpush1.msra.mxu0 0.0
    %1404 = vmatprep.subr.mxu0 0.0
    %1405 = vmatpush1.msra.mxu0 0.0
    %1406 = vmatprep.subr.mxu0 0.0
    %1407 = vmatpush1.msra.mxu0 0.0
    %1408 = vmatprep.subr.mxu0 0.0
    %1409 = vmatpush1.msra.mxu0 0.0
    %1410 = vmatprep.subr.mxu0 0.0
    %1411 = vmatpush1.msra.mxu0 0.0
    %1412 = vmatprep.subr.mxu0 0.0
    %1413 = vmatpush1.msra.mxu0 0.0
    %1414 = vmatprep.subr.mxu0 0.0
    %1415 = vmatpush1.msra.mxu0 0.0
    %1416 = vmatprep.subr.mxu0 0.0
    %1417 = vmatpush1.msra.mxu0 0.0
    %1418 = vmatprep.subr.mxu0 0.0
    %1419 = vmatpush1.msra.mxu0 0.0
    %1420 = vmatprep.subr.mxu0 0.0
    %1421 = vmatpush1.msra.mxu0 0.0
    %1422 = vmatprep.subr.mxu0 0.0
    %1423 = vmatpush1.msra.mxu0 0.0
    %1424 = vmatprep.subr.mxu0 0.0
    %1425 = vmatpush1.msra.mxu0 0.0
    %1426 = vmatprep.subr.mxu0 0.0
    %1427 = vmatpush1.msra.mxu0 0.0
    %1428 = vmatprep.subr.mxu0 0.0
    %1429 = vmatpush1.msra.mxu0 0.0
    %1430 = vmatprep.subr.mxu0 0.0
    %1431 = vmatpush1.msra.mxu0 0.0
    %1432 = vmatprep.subr.mxu0 0.0
    %1433 = vmatpush1.msra.mxu0 0.0
    %1434 = vmatprep.subr.mxu0 0.0
    %1435 = vmatpush1.msra.mxu0 0.0
    %1436 = vmatprep.subr.mxu0 0.0
    %1437 = vmatpush1.msra.mxu0 0.0
    %1438 = vmatprep.subr.mxu0 0.0
    %1439 = vmatpush1.msra.mxu0 0.0
    %1440 = vmatprep.subr.mxu0 0.0
    %1441 = vmatpush1.msra.mxu0 0.0
    %1442 = vmatprep.subr.mxu0 0.0
    %1443 = vmatpush1.msra.mxu0 0.0
    %1444 = vmatprep.subr.mxu0 0.0
    %1445 = vmatpush1.msra.mxu0 0.0
    %1446 = vmatprep.subr.mxu0 0.0
    %1447 = vmatpush1.msra.mxu0 0.0
    %1448 = vmatprep.subr.mxu0 0.0
    %1449 = vmatpush1.msra.mxu0 0.0
    %1450 = vmatprep.subr.mxu0 0.0
    %1451 = vmatpush1.msra.mxu0 0.0
    %1452 = vmatprep.subr.mxu0 0.0
    %1453 = vmatpush1.msra.mxu0 0.0
    %1454 = vmatprep.mubr.f32.mxu0 0.0
    %1455 = vmatmul.mubr.f32.gmra.mrb[0].mxu0 %v1386
    %v1456 = vpop.f32.mrb[0].mxu0
    %v1457 = vadd.f32 0.0, %v1456
    %v1458 = vpop.f32.mrb[0].mxu0
    %1459 = vmatprep.mubr.f32.mxu0 0.0
    %1460 = vmatmul.mubr.f32.gmra.mrb[0].mxu0 %v1388
    %v1461 = vpop.f32.mrb[0].mxu0
    %v1462 = vadd.f32 0.0, %v1461
    %v1463 = vpop.f32.mrb[0].mxu0
    %1464 = vdwg.mxu0
    %s1465 = scalar_lea.vmem [#allocation4], 67
    %v1466 = vld [vmem:[%s1465] ss:$8 sm:$0x3]
    %v1467 = vld [vmem:[#allocation2 + $0x210] sm:$0xff]
    %v1468 = vld [vmem:[#allocation2 + $0x218] sm:$0xff]
    %v1469 = vld [vmem:[#allocation2 + $0x220] sm:$0xff]
    %v1470 = vld [vmem:[#allocation2 + $0x228] sm:$0xff]
    %v1471 = vld [vmem:[#allocation2 + $0x230] sm:$0xff]
    %v1472 = vld [vmem:[#allocation2 + $0x238] sm:$0xff]
    %v1473 = vld [vmem:[#allocation2 + $0x240] sm:$0xff]
    %v1474 = vld [vmem:[#allocation2 + $0x248] sm:$0xff]
    %v1475 = vld [vmem:[#allocation2 + $0x250] sm:$0xff]
    %v1476 = vld [vmem:[#allocation2 + $0x258] sm:$0xff]
    %v1477 = vld [vmem:[#allocation2 + $0x260] sm:$0xff]
    %v1478 = vld [vmem:[#allocation2 + $0x268] sm:$0xff]
    %v1479 = vld [vmem:[#allocation2 + $0x270] sm:$0xff]
    %v1480 = vld [vmem:[#allocation2 + $0x278] sm:$0xff]
    %v1481 = vld [vmem:[#allocation2 + $0x280] sm:$0xff]
    %v1482 = vld [vmem:[#allocation2 + $0x288] sm:$0xff]
    %v1483 = vpack.c.bf16 %v1462, %v1457
    %s1484 = scalar_lea.vmem [#allocation4], 64
    %v1485 = vld [vmem:[%s1484] ss:$8 sm:$0x3]
    %v1487 = vlaneseq
    %v1488 = vshrl.u32 %v1487, 7
    %v1489 = vsub.s32 0, %v1488
    %v1490 = vrot.slane %v1485, %v1489
    %v1491 = vlaneseq
    %v1492 = vshrl.u32 %v1491, 7
    %v1493 = vsub.s32 1, %v1492
    %v1494 = vrot.slane %v1485, %v1493
    %v1505 = vunpack.c.l.b16 %v1467
    %v1506 = vunpack.c.h.b16 %v1467
    %v1507 = vunpack.c.l.b16 %v1468
    %v1508 = vunpack.c.h.b16 %v1468
    %v1509 = vunpack.c.l.b16 %v1469
    %v1510 = vunpack.c.h.b16 %v1469
    %v1511 = vunpack.c.l.b16 %v1470
    %v1512 = vunpack.c.h.b16 %v1470
    %v1513 = vunpack.c.l.b16 %v1471
    %v1514 = vunpack.c.h.b16 %v1471
    %v1515 = vunpack.c.l.b16 %v1472
    %v1516 = vunpack.c.h.b16 %v1472
    %v1517 = vunpack.c.l.b16 %v1473
    %v1518 = vunpack.c.h.b16 %v1473
    %v1519 = vunpack.c.l.b16 %v1474
    %v1520 = vunpack.c.h.b16 %v1474
    %v1521 = vpack.c.b16 %v1507, %v1505
    %v1522 = vpack.c.b16 %v1508, %v1506
    %v1523 = vpack.c.b16 %v1511, %v1509
    %v1524 = vpack.c.b16 %v1512, %v1510
    %v1525 = vpack.c.b16 %v1515, %v1513
    %v1526 = vpack.c.b16 %v1516, %v1514
    %v1527 = vpack.c.b16 %v1519, %v1517
    %v1528 = vpack.c.b16 %v1520, %v1518
    %v1538 = vsel %vm173, %v1483, 0
    %1540 = vmatprep.subr.bf16.mxu0 %v1522
    %1541 = vmatpush1.bf16.msra.mxu0 %v1521
    %1542 = vmatprep.subr.bf16.mxu0 %v1524
    %1543 = vmatpush1.bf16.msra.mxu0 %v1523
    %1544 = vmatprep.subr.bf16.mxu0 %v1526
    %1545 = vmatpush1.bf16.msra.mxu0 %v1525
    %1546 = vmatprep.subr.bf16.mxu0 %v1528
    %1547 = vmatpush1.bf16.msra.mxu0 %v1527
    %1548 = vmatprep.subr.bf16.mxu0 0
    %1549 = vmatpush1.bf16.msra.mxu0 0
    %1550 = vmatprep.subr.bf16.mxu0 0
    %1551 = vmatpush1.bf16.msra.mxu0 0
    %1552 = vmatprep.subr.bf16.mxu0 0
    %1553 = vmatpush1.bf16.msra.mxu0 0
    %1554 = vmatprep.subr.bf16.mxu0 0
    %1555 = vmatpush1.bf16.msra.mxu0 0
    %1556 = vmatprep.subr.bf16.mxu0 0
    %1557 = vmatpush1.bf16.msra.mxu0 0
    %1558 = vmatprep.subr.bf16.mxu0 0
    %1559 = vmatpush1.bf16.msra.mxu0 0
    %1560 = vmatprep.subr.bf16.mxu0 0
    %1561 = vmatpush1.bf16.msra.mxu0 0
    %1562 = vmatprep.subr.bf16.mxu0 0
    %1563 = vmatpush1.bf16.msra.mxu0 0
    %1564 = vmatprep.subr.bf16.mxu0 0
    %1565 = vmatpush1.bf16.msra.mxu0 0
    %1566 = vmatprep.subr.bf16.mxu0 0
    %1567 = vmatpush1.bf16.msra.mxu0 0
    %1568 = vmatprep.subr.bf16.mxu0 0
    %1569 = vmatpush1.bf16.msra.mxu0 0
    %1570 = vmatprep.subr.bf16.mxu0 0
    %1571 = vmatpush1.bf16.msra.mxu0 0
    %1572 = vmatprep.mubr.bf16.mxu0 0
    %1573 = vmatmul.mubr.bf16.gmra.mrb[0].mxu0 %v1538
    %v1574 = vpop.f32.mrb[0].mxu0
    %v1575 = vadd.f32 %v1490, %v1574
    %v1576 = vpop.f32.mrb[0].mxu0
    %v1577 = vadd.f32 %v1494, %v1576
    %v1578 = vpop.f32.mrb[0].mxu0
    %v1579 = vadd.f32 %v1490, %v1578
    %v1580 = vpop.f32.mrb[0].mxu0
    %v1581 = vadd.f32 %v1494, %v1580
    %1582 = vdwg.mxu0
    %v1586 = vrot.slane %v1375, 7
    %v1587 = vrot.slane %v1376, 7
    %v1588 = vsel %vm239, %v1586, %v1587
    %v1589 = vrot.slane %v1377, 7
    %v1590 = vsel %vm239, %v1587, %v1589
    %v1591 = vsel %vm57, %v1588, 0
    %v1593 = vsel %vm57, %v1590, 0
    %1595 = vmatprep.subr.mxu0 %v1577
    %1596 = vmatpush1.msra.mxu0 %v1575
    %1597 = vmatprep.subr.mxu0 %v1581
    %1598 = vmatpush1.msra.mxu0 %v1579
    %1599 = vmatprep.subr.mxu0 0.0
    %1600 = vmatpush1.msra.mxu0 0.0
    %1601 = vmatprep.subr.mxu0 0.0
    %1602 = vmatpush1.msra.mxu0 0.0
    %1603 = vmatprep.subr.mxu0 0.0
    %1604 = vmatpush1.msra.mxu0 0.0
    %1605 = vmatprep.subr.mxu0 0.0
    %1606 = vmatpush1.msra.mxu0 0.0
    %1607 = vmatprep.subr.mxu0 0.0
    %1608 = vmatpush1.msra.mxu0 0.0
    %1609 = vmatprep.subr.mxu0 0.0
    %1610 = vmatpush1.msra.mxu0 0.0
    %1611 = vmatprep.subr.mxu0 0.0
    %1612 = vmatpush1.msra.mxu0 0.0
    %1613 = vmatprep.subr.mxu0 0.0
    %1614 = vmatpush1.msra.mxu0 0.0
    %1615 = vmatprep.subr.mxu0 0.0
    %1616 = vmatpush1.msra.mxu0 0.0
    %1617 = vmatprep.subr.mxu0 0.0
    %1618 = vmatpush1.msra.mxu0 0.0
    %1619 = vmatprep.subr.mxu0 0.0
    %1620 = vmatpush1.msra.mxu0 0.0
    %1621 = vmatprep.subr.mxu0 0.0
    %1622 = vmatpush1.msra.mxu0 0.0
    %1623 = vmatprep.subr.mxu0 0.0
    %1624 = vmatpush1.msra.mxu0 0.0
    %1625 = vmatprep.subr.mxu0 0.0
    %1626 = vmatpush1.msra.mxu0 0.0
    %1627 = vmatprep.subr.mxu0 0.0
    %1628 = vmatpush1.msra.mxu0 0.0
    %1629 = vmatprep.subr.mxu0 0.0
    %1630 = vmatpush1.msra.mxu0 0.0
    %1631 = vmatprep.subr.mxu0 0.0
    %1632 = vmatpush1.msra.mxu0 0.0
    %1633 = vmatprep.subr.mxu0 0.0
    %1634 = vmatpush1.msra.mxu0 0.0
    %1635 = vmatprep.subr.mxu0 0.0
    %1636 = vmatpush1.msra.mxu0 0.0
    %1637 = vmatprep.subr.mxu0 0.0
    %1638 = vmatpush1.msra.mxu0 0.0
    %1639 = vmatprep.subr.mxu0 0.0
    %1640 = vmatpush1.msra.mxu0 0.0
    %1641 = vmatprep.subr.mxu0 0.0
    %1642 = vmatpush1.msra.mxu0 0.0
    %1643 = vmatprep.subr.mxu0 0.0
    %1644 = vmatpush1.msra.mxu0 0.0
    %1645 = vmatprep.subr.mxu0 0.0
    %1646 = vmatpush1.msra.mxu0 0.0
    %1647 = vmatprep.subr.mxu0 0.0
    %1648 = vmatpush1.msra.mxu0 0.0
    %1649 = vmatprep.subr.mxu0 0.0
    %1650 = vmatpush1.msra.mxu0 0.0
    %1651 = vmatprep.subr.mxu0 0.0
    %1652 = vmatpush1.msra.mxu0 0.0
    %1653 = vmatprep.subr.mxu0 0.0
    %1654 = vmatpush1.msra.mxu0 0.0
    %1655 = vmatprep.subr.mxu0 0.0
    %1656 = vmatpush1.msra.mxu0 0.0
    %1657 = vmatprep.subr.mxu0 0.0
    %1658 = vmatpush1.msra.mxu0 0.0
    %1659 = vmatprep.mubr.f32.mxu0 0.0
    %1660 = vmatmul.mubr.f32.gmra.mrb[0].mxu0 %v1591
    %v1661 = vpop.f32.mrb[0].mxu0
    %v1662 = vadd.f32 0.0, %v1661
    %v1663 = vpop.f32.mrb[0].mxu0
    %v1664 = vadd.f32 0.0, %v1663
    %1665 = vmatprep.mubr.f32.mxu0 0.0
    %1666 = vmatmul.mubr.f32.gmra.mrb[0].mxu0 %v1593
    %v1667 = vpop.f32.mrb[0].mxu0
    %v1668 = vadd.f32 0.0, %v1667
    %v1669 = vpop.f32.mrb[0].mxu0
    %v1670 = vadd.f32 0.0, %v1669
    %1671 = vdwg.mxu0
    %v1673 = vlaneseq
    %v1674 = vshrl.u32 %v1673, 7
    %v1675 = vsub.s32 0, %v1674
    %v1676 = vrot.slane %v1466, %v1675
    %v1677 = vlaneseq
    %v1678 = vshrl.u32 %v1677, 7
    %v1679 = vsub.s32 1, %v1678
    %v1680 = vrot.slane %v1466, %v1679
    %v1683 = vmul.f32 %v1676, %v1575
    %v1684 = vmul.f32 %v1680, %v1577
    %v1685 = vmul.f32 %v1676, %v1579
    %v1686 = vmul.f32 %v1680, %v1581
    %v1687 = vsub.f32 1.0, %v1466
    %v1689 = vlaneseq
    %v1690 = vshrl.u32 %v1689, 7
    %v1691 = vsub.s32 0, %v1690
    %v1692 = vrot.slane %v1687, %v1691
    %v1693 = vlaneseq
    %v1694 = vshrl.u32 %v1693, 7
    %v1695 = vsub.s32 1, %v1694
    %v1696 = vrot.slane %v1687, %v1695
    %v1699 = vmul.f32 %v1692, %v1662
    %v1700 = vmul.f32 %v1696, %v1664
    %v1701 = vmul.f32 %v1692, %v1668
    %v1702 = vmul.f32 %v1696, %v1670
    %v1703 = vadd.f32 %v1683, %v1699
    %v1704 = vadd.f32 %v1684, %v1700
    %v1705 = vadd.f32 %v1685, %v1701
    %v1706 = vadd.f32 %v1686, %v1702
    %v1715 = vunpack.c.l.b16 %v1475
    %v1716 = vunpack.c.h.b16 %v1475
    %v1717 = vunpack.c.l.b16 %v1476
    %v1718 = vunpack.c.h.b16 %v1476
    %v1719 = vunpack.c.l.b16 %v1477
    %v1720 = vunpack.c.h.b16 %v1477
    %v1721 = vunpack.c.l.b16 %v1478
    %v1722 = vunpack.c.h.b16 %v1478
    %v1723 = vunpack.c.l.b16 %v1479
    %v1724 = vunpack.c.h.b16 %v1479
    %v1725 = vunpack.c.l.b16 %v1480
    %v1726 = vunpack.c.h.b16 %v1480
    %v1727 = vunpack.c.l.b16 %v1481
    %v1728 = vunpack.c.h.b16 %v1481
    %v1729 = vunpack.c.l.b16 %v1482
    %v1730 = vunpack.c.h.b16 %v1482
    %v1731 = vpack.c.b16 %v1717, %v1715
    %v1732 = vpack.c.b16 %v1718, %v1716
    %v1733 = vpack.c.b16 %v1721, %v1719
    %v1734 = vpack.c.b16 %v1722, %v1720
    %v1735 = vpack.c.b16 %v1725, %v1723
    %v1736 = vpack.c.b16 %v1726, %v1724
    %v1737 = vpack.c.b16 %v1729, %v1727
    %v1738 = vpack.c.b16 %v1730, %v1728
    %v1748 = vsel %vm173, 0, 0
    %1750 = vmatprep.subr.bf16.mxu0 %v1732
    %1751 = vmatpush1.bf16.msra.mxu0 %v1731
    %1752 = vmatprep.subr.bf16.mxu0 %v1734
    %1753 = vmatpush1.bf16.msra.mxu0 %v1733
    %1754 = vmatprep.subr.bf16.mxu0 %v1736
    %1755 = vmatpush1.bf16.msra.mxu0 %v1735
    %1756 = vmatprep.subr.bf16.mxu0 %v1738
    %1757 = vmatpush1.bf16.msra.mxu0 %v1737
    %1758 = vmatprep.subr.bf16.mxu0 0
    %1759 = vmatpush1.bf16.msra.mxu0 0
    %1760 = vmatprep.subr.bf16.mxu0 0
    %1761 = vmatpush1.bf16.msra.mxu0 0
    %1762 = vmatprep.subr.bf16.mxu0 0
    %1763 = vmatpush1.bf16.msra.mxu0 0
    %1764 = vmatprep.subr.bf16.mxu0 0
    %1765 = vmatpush1.bf16.msra.mxu0 0
    %1766 = vmatprep.subr.bf16.mxu0 0
    %1767 = vmatpush1.bf16.msra.mxu0 0
    %1768 = vmatprep.subr.bf16.mxu0 0
    %1769 = vmatpush1.bf16.msra.mxu0 0
    %1770 = vmatprep.subr.bf16.mxu0 0
    %1771 = vmatpush1.bf16.msra.mxu0 0
    %1772 = vmatprep.subr.bf16.mxu0 0
    %1773 = vmatpush1.bf16.msra.mxu0 0
    %1774 = vmatprep.subr.bf16.mxu0 0
    %1775 = vmatpush1.bf16.msra.mxu0 0
    %1776 = vmatprep.subr.bf16.mxu0 0
    %1777 = vmatpush1.bf16.msra.mxu0 0
    %1778 = vmatprep.subr.bf16.mxu0 0
    %1779 = vmatpush1.bf16.msra.mxu0 0
    %1780 = vmatprep.subr.bf16.mxu0 0
    %1781 = vmatpush1.bf16.msra.mxu0 0
    %1782 = vmatprep.mubr.bf16.mxu0 0
    %1783 = vmatmul.mubr.bf16.gmra.mrb[0].mxu0 %v1748
    %v1784 = vpop.f32.mrb[0].mxu0
    %v1785 = vadd.f32 0.0, %v1784
    %v1786 = vpop.f32.mrb[0].mxu0
    %v1787 = vadd.f32 0.0, %v1786
    %v1788 = vpop.f32.mrb[0].mxu0
    %v1789 = vpop.f32.mrb[0].mxu0
    %1790 = vdwg.mxu0
    %v1791 = vadd.f32 %v1703, %v1785
    %v1792 = vadd.f32 %v1704, %v1787
    %v1793 = vxor.u32 %v1791, 2147483648
    %v1794 = vxor.u32 %v1792, 2147483648
    %v1795 = vmul.f32 %v1793, 1.442695
    %v1796 = vpow.pop %v1795
    %v1797 = vmul.f32 %v1794, 1.442695
    %v1798 = vpow.pop %v1797
    %v1799 = vadd.f32 %v1796, 1.0
    %v1800 = vadd.f32 %v1798, 1.0
    %v1801 = vrcp.pop %v1799
    %v1802 = vmul.f32 1.0, %v1801
    %v1803 = vrcp.pop %v1800
    %v1804 = vmul.f32 1.0, %v1803
    %v1805 = vtanh.pop %v1792
    %v1806 = vmul.f32 %v1802, 0.0
    %1808 = vrot.lane.b32.xlu0 %v1805, 64
    %v1809 = vpop.permute.xlu0 %1808
    %v1811 = vmul.f32 %v1802, %v1809
    %1813 = vrot.lane.b32.xlu0 %v1811, 64
    %v1814 = vpop.permute.xlu0 %1813
    %v1816 = vadd.f32 %v1806, %v1814
    %v1817 = vtanh.pop %v1816
    %1819 = vrot.lane.b32.xlu0 %v1817, 64
    %v1820 = vpop.permute.xlu0 %1819
    %v1822 = vmul.f32 %v1804, %v1820
    %v1823 = vpack.c.bf16 %v1822, %v1822
    %v1825 = vsel %vm173, %v1823, 0
    %1827 = vmatprep.subr.bf16.mxu0 %v1732
    %1828 = vmatpush1.bf16.msra.mxu0 %v1731
    %1829 = vmatprep.subr.bf16.mxu0 %v1734
    %1830 = vmatpush1.bf16.msra.mxu0 %v1733
    %1831 = vmatprep.subr.bf16.mxu0 %v1736
    %1832 = vmatpush1.bf16.msra.mxu0 %v1735
    %1833 = vmatprep.subr.bf16.mxu0 %v1738
    %1834 = vmatpush1.bf16.msra.mxu0 %v1737
    %1835 = vmatprep.subr.bf16.mxu0 0
    %1836 = vmatpush1.bf16.msra.mxu0 0
    %1837 = vmatprep.subr.bf16.mxu0 0
    %1838 = vmatpush1.bf16.msra.mxu0 0
    %1839 = vmatprep.subr.bf16.mxu0 0
    %1840 = vmatpush1.bf16.msra.mxu0 0
    %1841 = vmatprep.subr.bf16.mxu0 0
    %1842 = vmatpush1.bf16.msra.mxu0 0
    %1843 = vmatprep.subr.bf16.mxu0 0
    %1844 = vmatpush1.bf16.msra.mxu0 0
    %1845 = vmatprep.subr.bf16.mxu0 0
    %1846 = vmatpush1.bf16.msra.mxu0 0
    %1847 = vmatprep.subr.bf16.mxu0 0
    %1848 = vmatpush1.bf16.msra.mxu0 0
    %1849 = vmatprep.subr.bf16.mxu0 0
    %1850 = vmatpush1.bf16.msra.mxu0 0
    %1851 = vmatprep.subr.bf16.mxu0 0
    %1852 = vmatpush1.bf16.msra.mxu0 0
    %1853 = vmatprep.subr.bf16.mxu0 0
    %1854 = vmatpush1.bf16.msra.mxu0 0
    %1855 = vmatprep.subr.bf16.mxu0 0
    %1856 = vmatpush1.bf16.msra.mxu0 0
    %1857 = vmatprep.subr.bf16.mxu0 0
    %1858 = vmatpush1.bf16.msra.mxu0 0
    %1859 = vmatprep.mubr.bf16.mxu0 0
    %1860 = vmatmul.mubr.bf16.gmra.mrb[0].mxu0 %v1825
    %v1861 = vpop.f32.mrb[0].mxu0
    %v1862 = vadd.f32 0.0, %v1861
    %v1863 = vpop.f32.mrb[0].mxu0
    %v1864 = vadd.f32 0.0, %v1863
    %v1865 = vpop.f32.mrb[0].mxu0
    %v1866 = vpop.f32.mrb[0].mxu0
    %1867 = vdwg.mxu0
    %v1870 = vrot.slane %v1862, 6
    %v1871 = vrot.slane %v1864, 6
    %v1874 = vadd.f32 %v1703, %v1870
    %v1875 = vadd.f32 %v1704, %v1871
    %v1876 = vxor.u32 %v1874, 2147483648
    %v1877 = vxor.u32 %v1875, 2147483648
    %v1878 = vmul.f32 %v1876, 1.442695
    %v1879 = vpow.pop %v1878
    %v1880 = vmul.f32 %v1877, 1.442695
    %v1881 = vpow.pop %v1880
    %v1882 = vadd.f32 %v1879, 1.0
    %v1883 = vadd.f32 %v1881, 1.0
    %v1884 = vrcp.pop %v1882
    %v1885 = vmul.f32 1.0, %v1884
    %v1886 = vrcp.pop %v1883
    %v1887 = vmul.f32 1.0, %v1886
    %v1888 = vtanh.pop %v1875
    %v1890 = vrot.slane %v1816, 6
    %v1892 = vmul.f32 %v1885, %v1890
    %1894 = vrot.lane.b32.xlu0 %v1888, 64
    %v1895 = vpop.permute.xlu0 %1894
    %v1897 = vmul.f32 %v1885, %v1895
    %1899 = vrot.lane.b32.xlu0 %v1897, 64
    %v1900 = vpop.permute.xlu0 %1899
    %v1902 = vadd.f32 %v1892, %v1900
    %v1903 = vtanh.pop %v1902
    %1905 = vrot.lane.b32.xlu0 %v1903, 64
    %v1906 = vpop.permute.xlu0 %1905
    %v1908 = vmul.f32 %v1887, %v1906
    %v1909 = vpack.c.bf16 %v1908, %v1908
    %v1911 = vrot.slane %v1909, 1
    %v1913 = vsel %vm173, %v1911, 0
    %1915 = vmatprep.subr.bf16.mxu0 %v1732
    %1916 = vmatpush1.bf16.msra.mxu0 %v1731
    %1917 = vmatprep.subr.bf16.mxu0 %v1734
    %1918 = vmatpush1.bf16.msra.mxu0 %v1733
    %1919 = vmatprep.subr.bf16.mxu0 %v1736
    %1920 = vmatpush1.bf16.msra.mxu0 %v1735
    %1921 = vmatprep.subr.bf16.mxu0 %v1738
    %1922 = vmatpush1.bf16.msra.mxu0 %v1737
    %1923 = vmatprep.subr.bf16.mxu0 0
    %1924 = vmatpush1.bf16.msra.mxu0 0
    %1925 = vmatprep.subr.bf16.mxu0 0
    %1926 = vmatpush1.bf16.msra.mxu0 0
    %1927 = vmatprep.subr.bf16.mxu0 0
    %1928 = vmatpush1.bf16.msra.mxu0 0
    %1929 = vmatprep.subr.bf16.mxu0 0
    %1930 = vmatpush1.bf16.msra.mxu0 0
    %1931 = vmatprep.subr.bf16.mxu0 0
    %1932 = vmatpush1.bf16.msra.mxu0 0
    %1933 = vmatprep.subr.bf16.mxu0 0
    %1934 = vmatpush1.bf16.msra.mxu0 0
    %1935 = vmatprep.subr.bf16.mxu0 0
    %1936 = vmatpush1.bf16.msra.mxu0 0
    %1937 = vmatprep.subr.bf16.mxu0 0
    %1938 = vmatpush1.bf16.msra.mxu0 0
    %1939 = vmatprep.subr.bf16.mxu0 0
    %1940 = vmatpush1.bf16.msra.mxu0 0
    %1941 = vmatprep.subr.bf16.mxu0 0
    %1942 = vmatpush1.bf16.msra.mxu0 0
    %1943 = vmatprep.subr.bf16.mxu0 0
    %1944 = vmatpush1.bf16.msra.mxu0 0
    %1945 = vmatprep.subr.bf16.mxu0 0
    %1946 = vmatpush1.bf16.msra.mxu0 0
    %1947 = vmatprep.mubr.bf16.mxu0 0
    %1948 = vmatmul.mubr.bf16.gmra.mrb[0].mxu0 %v1913
    %v1949 = vpop.f32.mrb[0].mxu0
    %v1950 = vadd.f32 0.0, %v1949
    %v1951 = vpop.f32.mrb[0].mxu0
    %v1952 = vadd.f32 0.0, %v1951
    %v1953 = vpop.f32.mrb[0].mxu0
    %v1954 = vpop.f32.mrb[0].mxu0
    %1955 = vdwg.mxu0
    %v1958 = vrot.slane %v1950, 4
    %v1959 = vrot.slane %v1952, 4
    %v1962 = vadd.f32 %v1703, %v1958
    %v1963 = vadd.f32 %v1704, %v1959
    %v1964 = vxor.u32 %v1962, 2147483648
    %v1965 = vxor.u32 %v1963, 2147483648
    %v1966 = vmul.f32 %v1964, 1.442695
    %v1967 = vpow.pop %v1966
    %v1968 = vmul.f32 %v1965, 1.442695
    %v1969 = vpow.pop %v1968
    %v1970 = vadd.f32 %v1967, 1.0
    %v1971 = vadd.f32 %v1969, 1.0
    %v1972 = vrcp.pop %v1970
    %v1973 = vmul.f32 1.0, %v1972
    %v1974 = vrcp.pop %v1971
    %v1975 = vmul.f32 1.0, %v1974
    %v1976 = vtanh.pop %v1963
    %v1978 = vrot.slane %v1902, 6
    %v1980 = vmul.f32 %v1973, %v1978
    %1982 = vrot.lane.b32.xlu0 %v1976, 64
    %v1983 = vpop.permute.xlu0 %1982
    %v1985 = vmul.f32 %v1973, %v1983
    %1987 = vrot.lane.b32.xlu0 %v1985, 64
    %v1988 = vpop.permute.xlu0 %1987
    %v1990 = vadd.f32 %v1980, %v1988
    %v1991 = vtanh.pop %v1990
    %1993 = vrot.lane.b32.xlu0 %v1991, 64
    %v1994 = vpop.permute.xlu0 %1993
    %v1996 = vmul.f32 %v1975, %v1994
    %v1997 = vpack.c.bf16 %v1996, %v1996
    %v1999 = vrot.slane %v1997, 2
    %v2001 = vsel %vm173, %v1999, 0
    %2003 = vmatprep.subr.bf16.mxu0 %v1732
    %2004 = vmatpush1.bf16.msra.mxu0 %v1731
    %2005 = vmatprep.subr.bf16.mxu0 %v1734
    %2006 = vmatpush1.bf16.msra.mxu0 %v1733
    %2007 = vmatprep.subr.bf16.mxu0 %v1736
    %2008 = vmatpush1.bf16.msra.mxu0 %v1735
    %2009 = vmatprep.subr.bf16.mxu0 %v1738
    %2010 = vmatpush1.bf16.msra.mxu0 %v1737
    %2011 = vmatprep.subr.bf16.mxu0 0
    %2012 = vmatpush1.bf16.msra.mxu0 0
    %2013 = vmatprep.subr.bf16.mxu0 0
    %2014 = vmatpush1.bf16.msra.mxu0 0
    %2015 = vmatprep.subr.bf16.mxu0 0
    %2016 = vmatpush1.bf16.msra.mxu0 0
    %2017 = vmatprep.subr.bf16.mxu0 0
    %2018 = vmatpush1.bf16.msra.mxu0 0
    %2019 = vmatprep.subr.bf16.mxu0 0
    %2020 = vmatpush1.bf16.msra.mxu0 0
    %2021 = vmatprep.subr.bf16.mxu0 0
    %2022 = vmatpush1.bf16.msra.mxu0 0
    %2023 = vmatprep.subr.bf16.mxu0 0
    %2024 = vmatpush1.bf16.msra.mxu0 0
    %2025 = vmatprep.subr.bf16.mxu0 0
    %2026 = vmatpush1.bf16.msra.mxu0 0
    %2027 = vmatprep.subr.bf16.mxu0 0
    %2028 = vmatpush1.bf16.msra.mxu0 0
    %2029 = vmatprep.subr.bf16.mxu0 0
    %2030 = vmatpush1.bf16.msra.mxu0 0
    %2031 = vmatprep.subr.bf16.mxu0 0
    %2032 = vmatpush1.bf16.msra.mxu0 0
    %2033 = vmatprep.subr.bf16.mxu0 0
    %2034 = vmatpush1.bf16.msra.mxu0 0
    %2035 = vmatprep.mubr.bf16.mxu0 0
    %2036 = vmatmul.mubr.bf16.gmra.mrb[0].mxu0 %v2001
    %v2037 = vpop.f32.mrb[0].mxu0
    %v2038 = vadd.f32 0.0, %v2037
    %v2039 = vpop.f32.mrb[0].mxu0
    %v2040 = vadd.f32 0.0, %v2039
    %v2041 = vpop.f32.mrb[0].mxu0
    %v2042 = vpop.f32.mrb[0].mxu0
    %2043 = vdwg.mxu0
    %v2046 = vrot.slane %v2038, 2
    %v2047 = vrot.slane %v2040, 2
    %v2050 = vadd.f32 %v1703, %v2046
    %v2051 = vadd.f32 %v1704, %v2047
    %v2052 = vxor.u32 %v2050, 2147483648
    %v2053 = vxor.u32 %v2051, 2147483648
    %v2054 = vmul.f32 %v2052, 1.442695
    %v2055 = vpow.pop %v2054
    %v2056 = vmul.f32 %v2053, 1.442695
    %v2057 = vpow.pop %v2056
    %v2058 = vadd.f32 %v2055, 1.0
    %v2059 = vadd.f32 %v2057, 1.0
    %v2060 = vrcp.pop %v2058
    %v2061 = vmul.f32 1.0, %v2060
    %v2062 = vrcp.pop %v2059
    %v2063 = vmul.f32 1.0, %v2062
    %v2064 = vtanh.pop %v2051
    %v2066 = vrot.slane %v1990, 6
    %v2068 = vmul.f32 %v2061, %v2066
    %2070 = vrot.lane.b32.xlu0 %v2064, 64
    %v2071 = vpop.permute.xlu0 %2070
    %v2073 = vmul.f32 %v2061, %v2071
    %2075 = vrot.lane.b32.xlu0 %v2073, 64
    %v2076 = vpop.permute.xlu0 %2075
    %v2078 = vadd.f32 %v2068, %v2076
    %v2079 = vtanh.pop %v2078
    %2081 = vrot.lane.b32.xlu0 %v2079, 64
    %v2082 = vpop.permute.xlu0 %2081
    %v2084 = vmul.f32 %v2063, %v2082
    %v2085 = vpack.c.bf16 %v2084, %v2084
    %v2087 = vrot.slane %v2085, 3
    %v2089 = vsel %vm173, %v2087, 0
    %2091 = vmatprep.subr.bf16.mxu0 %v1732
    %2092 = vmatpush1.bf16.msra.mxu0 %v1731
    %2093 = vmatprep.subr.bf16.mxu0 %v1734
    %2094 = vmatpush1.bf16.msra.mxu0 %v1733
    %2095 = vmatprep.subr.bf16.mxu0 %v1736
    %2096 = vmatpush1.bf16.msra.mxu0 %v1735
    %2097 = vmatprep.subr.bf16.mxu0 %v1738
    %2098 = vmatpush1.bf16.msra.mxu0 %v1737
    %2099 = vmatprep.subr.bf16.mxu0 0
    %2100 = vmatpush1.bf16.msra.mxu0 0
    %2101 = vmatprep.subr.bf16.mxu0 0
    %2102 = vmatpush1.bf16.msra.mxu0 0
    %2103 = vmatprep.subr.bf16.mxu0 0
    %2104 = vmatpush1.bf16.msra.mxu0 0
    %2105 = vmatprep.subr.bf16.mxu0 0
    %2106 = vmatpush1.bf16.msra.mxu0 0
    %2107 = vmatprep.subr.bf16.mxu0 0
    %2108 = vmatpush1.bf16.msra.mxu0 0
    %2109 = vmatprep.subr.bf16.mxu0 0
    %2110 = vmatpush1.bf16.msra.mxu0 0
    %2111 = vmatprep.subr.bf16.mxu0 0
    %2112 = vmatpush1.bf16.msra.mxu0 0
    %2113 = vmatprep.subr.bf16.mxu0 0
    %2114 = vmatpush1.bf16.msra.mxu0 0
    %2115 = vmatprep.subr.bf16.mxu0 0
    %2116 = vmatpush1.bf16.msra.mxu0 0
    %2117 = vmatprep.subr.bf16.mxu0 0
    %2118 = vmatpush1.bf16.msra.mxu0 0
    %2119 = vmatprep.subr.bf16.mxu0 0
    %2120 = vmatpush1.bf16.msra.mxu0 0
    %2121 = vmatprep.subr.bf16.mxu0 0
    %2122 = vmatpush1.bf16.msra.mxu0 0
    %2123 = vmatprep.mubr.bf16.mxu0 0
    %2124 = vmatmul.mubr.bf16.gmra.mrb[0].mxu0 %v2089
    %v2125 = vpop.f32.mrb[0].mxu0
    %v2126 = vadd.f32 0.0, %v2125
    %v2127 = vpop.f32.mrb[0].mxu0
    %v2128 = vadd.f32 0.0, %v2127
    %v2129 = vpop.f32.mrb[0].mxu0
    %v2130 = vpop.f32.mrb[0].mxu0
    %2131 = vdwg.mxu0
    %v2132 = vadd.f32 %v1705, %v2126
    %v2133 = vadd.f32 %v1706, %v2128
    %v2134 = vxor.u32 %v2132, 2147483648
    %v2135 = vxor.u32 %v2133, 2147483648
    %v2136 = vmul.f32 %v2134, 1.442695
    %v2137 = vpow.pop %v2136
    %v2138 = vmul.f32 %v2135, 1.442695
    %v2139 = vpow.pop %v2138
    %v2140 = vadd.f32 %v2137, 1.0
    %v2141 = vadd.f32 %v2139, 1.0
    %v2142 = vrcp.pop %v2140
    %v2143 = vmul.f32 1.0, %v2142
    %v2144 = vrcp.pop %v2141
    %v2145 = vmul.f32 1.0, %v2144
    %v2146 = vtanh.pop %v2133
    %v2148 = vrot.slane %v2078, 6
    %v2150 = vmul.f32 %v2143, %v2148
    %2152 = vrot.lane.b32.xlu0 %v2146, 64
    %v2153 = vpop.permute.xlu0 %2152
    %v2155 = vmul.f32 %v2143, %v2153
    %2157 = vrot.lane.b32.xlu0 %v2155, 64
    %v2158 = vpop.permute.xlu0 %2157
    %v2160 = vadd.f32 %v2150, %v2158
    %v2161 = vtanh.pop %v2160
    %2163 = vrot.lane.b32.xlu0 %v2161, 64
    %v2164 = vpop.permute.xlu0 %2163
    %v2166 = vmul.f32 %v2145, %v2164
    %v2167 = vpack.c.bf16 %v2166, %v2166
    %v2169 = vsel %vm173, %v2167, 0
    %2171 = vmatprep.subr.bf16.mxu0 %v1732
    %2172 = vmatpush1.bf16.msra.mxu0 %v1731
    %2173 = vmatprep.subr.bf16.mxu0 %v1734
    %2174 = vmatpush1.bf16.msra.mxu0 %v1733
    %2175 = vmatprep.subr.bf16.mxu0 %v1736
    %2176 = vmatpush1.bf16.msra.mxu0 %v1735
    %2177 = vmatprep.subr.bf16.mxu0 %v1738
    %2178 = vmatpush1.bf16.msra.mxu0 %v1737
    %2179 = vmatprep.subr.bf16.mxu0 0
    %2180 = vmatpush1.bf16.msra.mxu0 0
    %2181 = vmatprep.subr.bf16.mxu0 0
    %2182 = vmatpush1.bf16.msra.mxu0 0
    %2183 = vmatprep.subr.bf16.mxu0 0
    %2184 = vmatpush1.bf16.msra.mxu0 0
    %2185 = vmatprep.subr.bf16.mxu0 0
    %2186 = vmatpush1.bf16.msra.mxu0 0
    %2187 = vmatprep.subr.bf16.mxu0 0
    %2188 = vmatpush1.bf16.msra.mxu0 0
    %2189 = vmatprep.subr.bf16.mxu0 0
    %2190 = vmatpush1.bf16.msra.mxu0 0
    %2191 = vmatprep.subr.bf16.mxu0 0
    %2192 = vmatpush1.bf16.msra.mxu0 0
    %2193 = vmatprep.subr.bf16.mxu0 0
    %2194 = vmatpush1.bf16.msra.mxu0 0
    %2195 = vmatprep.subr.bf16.mxu0 0
    %2196 = vmatpush1.bf16.msra.mxu0 0
    %2197 = vmatprep.subr.bf16.mxu0 0
    %2198 = vmatpush1.bf16.msra.mxu0 0
    %2199 = vmatprep.subr.bf16.mxu0 0
    %2200 = vmatpush1.bf16.msra.mxu0 0
    %2201 = vmatprep.subr.bf16.mxu0 0
    %2202 = vmatpush1.bf16.msra.mxu0 0
    %2203 = vmatprep.mubr.bf16.mxu0 0
    %2204 = vmatmul.mubr.bf16.gmra.mrb[0].mxu0 %v2169
    %v2205 = vpop.f32.mrb[0].mxu0
    %v2206 = vadd.f32 0.0, %v2205
    %v2207 = vpop.f32.mrb[0].mxu0
    %v2208 = vadd.f32 0.0, %v2207
    %v2209 = vpop.f32.mrb[0].mxu0
    %v2210 = vpop.f32.mrb[0].mxu0
    %2211 = vdwg.mxu0
    %v2214 = vrot.slane %v2206, 6
    %v2215 = vrot.slane %v2208, 6
    %v2218 = vadd.f32 %v1705, %v2214
    %v2219 = vadd.f32 %v1706, %v2215
    %v2220 = vxor.u32 %v2218, 2147483648
    %v2221 = vxor.u32 %v2219, 2147483648
    %v2222 = vmul.f32 %v2220, 1.442695
    %v2223 = vpow.pop %v2222
    %v2224 = vmul.f32 %v2221, 1.442695
    %v2225 = vpow.pop %v2224
    %v2226 = vadd.f32 %v2223, 1.0
    %v2227 = vadd.f32 %v2225, 1.0
    %v2228 = vrcp.pop %v2226
    %v2229 = vmul.f32 1.0, %v2228
    %v2230 = vrcp.pop %v2227
    %v2231 = vmul.f32 1.0, %v2230
    %v2232 = vtanh.pop %v2219
    %v2234 = vrot.slane %v2160, 6
    %v2236 = vmul.f32 %v2229, %v2234
    %2238 = vrot.lane.b32.xlu0 %v2232, 64
    %v2239 = vpop.permute.xlu0 %2238
    %v2241 = vmul.f32 %v2229, %v2239
    %2243 = vrot.lane.b32.xlu0 %v2241, 64
    %v2244 = vpop.permute.xlu0 %2243
    %v2246 = vadd.f32 %v2236, %v2244
    %v2247 = vtanh.pop %v2246
    %2249 = vrot.lane.b32.xlu0 %v2247, 64
    %v2250 = vpop.permute.xlu0 %2249
    %v2252 = vmul.f32 %v2231, %v2250
    %v2253 = vpack.c.bf16 %v2252, %v2252
    %v2255 = vrot.slane %v2253, 1
    %v2257 = vsel %vm173, %v2255, 0
    %2259 = vmatprep.subr.bf16.mxu0 %v1732
    %2260 = vmatpush1.bf16.msra.mxu0 %v1731
    %2261 = vmatprep.subr.bf16.mxu0 %v1734
    %2262 = vmatpush1.bf16.msra.mxu0 %v1733
    %2263 = vmatprep.subr.bf16.mxu0 %v1736
    %2264 = vmatpush1.bf16.msra.mxu0 %v1735
    %2265 = vmatprep.subr.bf16.mxu0 %v1738
    %2266 = vmatpush1.bf16.msra.mxu0 %v1737
    %2267 = vmatprep.subr.bf16.mxu0 0
    %2268 = vmatpush1.bf16.msra.mxu0 0
    %2269 = vmatprep.subr.bf16.mxu0 0
    %2270 = vmatpush1.bf16.msra.mxu0 0
    %2271 = vmatprep.subr.bf16.mxu0 0
    %2272 = vmatpush1.bf16.msra.mxu0 0
    %2273 = vmatprep.subr.bf16.mxu0 0
    %2274 = vmatpush1.bf16.msra.mxu0 0
    %2275 = vmatprep.subr.bf16.mxu0 0
    %2276 = vmatpush1.bf16.msra.mxu0 0
    %2277 = vmatprep.subr.bf16.mxu0 0
    %2278 = vmatpush1.bf16.msra.mxu0 0
    %2279 = vmatprep.subr.bf16.mxu0 0
    %2280 = vmatpush1.bf16.msra.mxu0 0
    %2281 = vmatprep.subr.bf16.mxu0 0
    %2282 = vmatpush1.bf16.msra.mxu0 0
    %2283 = vmatprep.subr.bf16.mxu0 0
    %2284 = vmatpush1.bf16.msra.mxu0 0
    %2285 = vmatprep.subr.bf16.mxu0 0
    %2286 = vmatpush1.bf16.msra.mxu0 0
    %2287 = vmatprep.subr.bf16.mxu0 0
    %2288 = vmatpush1.bf16.msra.mxu0 0
    %2289 = vmatprep.subr.bf16.mxu0 0
    %2290 = vmatpush1.bf16.msra.mxu0 0
    %2291 = vmatprep.mubr.bf16.mxu0 0
    %2292 = vmatmul.mubr.bf16.gmra.mrb[0].mxu0 %v2257
    %v2293 = vpop.f32.mrb[0].mxu0
    %v2294 = vadd.f32 0.0, %v2293
    %v2295 = vpop.f32.mrb[0].mxu0
    %v2296 = vadd.f32 0.0, %v2295
    %v2297 = vpop.f32.mrb[0].mxu0
    %v2298 = vpop.f32.mrb[0].mxu0
    %2299 = vdwg.mxu0
    %v2302 = vrot.slane %v2294, 4
    %v2303 = vrot.slane %v2296, 4
    %v2306 = vadd.f32 %v1705, %v2302
    %v2307 = vadd.f32 %v1706, %v2303
    %v2308 = vxor.u32 %v2306, 2147483648
    %v2309 = vxor.u32 %v2307, 2147483648
    %v2310 = vmul.f32 %v2308, 1.442695
    %v2311 = vpow.pop %v2310
    %v2312 = vmul.f32 %v2309, 1.442695
    %v2313 = vpow.pop %v2312
    %v2314 = vadd.f32 %v2311, 1.0
    %v2315 = vadd.f32 %v2313, 1.0
    %v2316 = vrcp.pop %v2314
    %v2317 = vmul.f32 1.0, %v2316
    %v2318 = vrcp.pop %v2315
    %v2319 = vmul.f32 1.0, %v2318
    %v2320 = vtanh.pop %v2307
    %v2322 = vrot.slane %v2246, 6
    %v2324 = vmul.f32 %v2317, %v2322
    %2326 = vrot.lane.b32.xlu0 %v2320, 64
    %v2327 = vpop.permute.xlu0 %2326
    %v2329 = vmul.f32 %v2317, %v2327
    %2331 = vrot.lane.b32.xlu0 %v2329, 64
    %v2332 = vpop.permute.xlu0 %2331
    %v2334 = vadd.f32 %v2324, %v2332
    %v2335 = vtanh.pop %v2334
    %2337 = vrot.lane.b32.xlu0 %v2335, 64
    %v2338 = vpop.permute.xlu0 %2337
    %v2340 = vmul.f32 %v2319, %v2338
    %v2341 = vpack.c.bf16 %v2340, %v2340
    %v2343 = vrot.slane %v2341, 2
    %v2345 = vsel %vm173, %v2343, 0
    %2347 = vmatprep.subr.bf16.mxu0 %v1732
    %2348 = vmatpush1.bf16.msra.mxu0 %v1731
    %2349 = vmatprep.subr.bf16.mxu0 %v1734
    %2350 = vmatpush1.bf16.msra.mxu0 %v1733
    %2351 = vmatprep.subr.bf16.mxu0 %v1736
    %2352 = vmatpush1.bf16.msra.mxu0 %v1735
    %2353 = vmatprep.subr.bf16.mxu0 %v1738
    %2354 = vmatpush1.bf16.msra.mxu0 %v1737
    %2355 = vmatprep.subr.bf16.mxu0 0
    %2356 = vmatpush1.bf16.msra.mxu0 0
    %2357 = vmatprep.subr.bf16.mxu0 0
    %2358 = vmatpush1.bf16.msra.mxu0 0
    %2359 = vmatprep.subr.bf16.mxu0 0
    %2360 = vmatpush1.bf16.msra.mxu0 0
    %2361 = vmatprep.subr.bf16.mxu0 0
    %2362 = vmatpush1.bf16.msra.mxu0 0
    %2363 = vmatprep.subr.bf16.mxu0 0
    %2364 = vmatpush1.bf16.msra.mxu0 0
    %2365 = vmatprep.subr.bf16.mxu0 0
    %2366 = vmatpush1.bf16.msra.mxu0 0
    %2367 = vmatprep.subr.bf16.mxu0 0
    %2368 = vmatpush1.bf16.msra.mxu0 0
    %2369 = vmatprep.subr.bf16.mxu0 0
    %2370 = vmatpush1.bf16.msra.mxu0 0
    %2371 = vmatprep.subr.bf16.mxu0 0
    %2372 = vmatpush1.bf16.msra.mxu0 0
    %2373 = vmatprep.subr.bf16.mxu0 0
    %2374 = vmatpush1.bf16.msra.mxu0 0
    %2375 = vmatprep.subr.bf16.mxu0 0
    %2376 = vmatpush1.bf16.msra.mxu0 0
    %2377 = vmatprep.subr.bf16.mxu0 0
    %2378 = vmatpush1.bf16.msra.mxu0 0
    %2379 = vmatprep.mubr.bf16.mxu0 0
    %2380 = vmatmul.mubr.bf16.gmra.mrb[0].mxu0 %v2345
    %v2381 = vpop.f32.mrb[0].mxu0
    %v2382 = vadd.f32 0.0, %v2381
    %v2383 = vpop.f32.mrb[0].mxu0
    %v2384 = vadd.f32 0.0, %v2383
    %v2385 = vpop.f32.mrb[0].mxu0
    %v2386 = vpop.f32.mrb[0].mxu0
    %2387 = vdwg.mxu0
    %v2390 = vrot.slane %v2382, 2
    %v2391 = vrot.slane %v2384, 2
    %v2394 = vadd.f32 %v1705, %v2390
    %v2395 = vadd.f32 %v1706, %v2391
    %v2396 = vxor.u32 %v2394, 2147483648
    %v2397 = vxor.u32 %v2395, 2147483648
    %v2398 = vmul.f32 %v2396, 1.442695
    %v2399 = vpow.pop %v2398
    %v2400 = vmul.f32 %v2397, 1.442695
    %v2401 = vpow.pop %v2400
    %v2402 = vadd.f32 %v2399, 1.0
    %v2403 = vadd.f32 %v2401, 1.0
    %v2404 = vrcp.pop %v2402
    %v2405 = vmul.f32 1.0, %v2404
    %v2406 = vrcp.pop %v2403
    %v2407 = vmul.f32 1.0, %v2406
    %v2408 = vtanh.pop %v2395
    %v2410 = vrot.slane %v2334, 6
    %v2412 = vmul.f32 %v2405, %v2410
    %2414 = vrot.lane.b32.xlu0 %v2408, 64
    %v2415 = vpop.permute.xlu0 %2414
    %v2417 = vmul.f32 %v2405, %v2415
    %2419 = vrot.lane.b32.xlu0 %v2417, 64
    %v2420 = vpop.permute.xlu0 %2419
    %v2422 = vadd.f32 %v2412, %v2420
    %v2423 = vtanh.pop %v2422
    %2425 = vrot.lane.b32.xlu0 %v2423, 64
    %v2426 = vpop.permute.xlu0 %2425
    %v2428 = vmul.f32 %v2407, %v2426
    %vm2429 = vcmask 1041408
    %v2430 = vsel %vm2429, %v1822, %v1908
    %vm2431 = vcmask 1043456
    %v2432 = vsel %vm2431, %v2430, %v1996
    %vm2433 = vcmask 1045504
    %v2434 = vsel %vm2433, %v2432, %v2084
    %v2435 = vsel %vm2429, %v2166, %v2252
    %v2436 = vsel %vm2431, %v2435, %v2340
    %v2437 = vsel %vm2433, %v2436, %v2428
    %v2438 = vmul.f32 %v1676, %v2434
    %v2439 = vmul.f32 %v1676, %v2437
    %2440 = vmatprep.subr.mxu0 0.0
    %2441 = vmatpush1.msra.mxu0 %v2434
    %2442 = vmatprep.subr.mxu0 0.0
    %2443 = vmatpush1.msra.mxu0 %v2437
    %2444 = vmatprep.subr.mxu0 0.0
    %2445 = vmatpush1.msra.mxu0 0.0
    %2446 = vmatprep.subr.mxu0 0.0
    %2447 = vmatpush1.msra.mxu0 0.0
    %2448 = vmatprep.subr.mxu0 0.0
    %2449 = vmatpush1.msra.mxu0 0.0
    %2450 = vmatprep.subr.mxu0 0.0
    %2451 = vmatpush1.msra.mxu0 0.0
    %2452 = vmatprep.subr.mxu0 0.0
    %2453 = vmatpush1.msra.mxu0 0.0
    %2454 = vmatprep.subr.mxu0 0.0
    %2455 = vmatpush1.msra.mxu0 0.0
    %2456 = vmatprep.subr.mxu0 0.0
    %2457 = vmatpush1.msra.mxu0 0.0
    %2458 = vmatprep.subr.mxu0 0.0
    %2459 = vmatpush1.msra.mxu0 0.0
    %2460 = vmatprep.subr.mxu0 0.0
    %2461 = vmatpush1.msra.mxu0 0.0
    %2462 = vmatprep.subr.mxu0 0.0
    %2463 = vmatpush1.msra.mxu0 0.0
    %2464 = vmatprep.subr.mxu0 0.0
    %2465 = vmatpush1.msra.mxu0 0.0
    %2466 = vmatprep.subr.mxu0 0.0
    %2467 = vmatpush1.msra.mxu0 0.0
    %2468 = vmatprep.subr.mxu0 0.0
    %2469 = vmatpush1.msra.mxu0 0.0
    %2470 = vmatprep.subr.mxu0 0.0
    %2471 = vmatpush1.msra.mxu0 0.0
    %2472 = vmatprep.subr.mxu0 0.0
    %2473 = vmatpush1.msra.mxu0 0.0
    %2474 = vmatprep.subr.mxu0 0.0
    %2475 = vmatpush1.msra.mxu0 0.0
    %2476 = vmatprep.subr.mxu0 0.0
    %2477 = vmatpush1.msra.mxu0 0.0
    %2478 = vmatprep.subr.mxu0 0.0
    %2479 = vmatpush1.msra.mxu0 0.0
    %2480 = vmatprep.subr.mxu0 0.0
    %2481 = vmatpush1.msra.mxu0 0.0
    %2482 = vmatprep.subr.mxu0 0.0
    %2483 = vmatpush1.msra.mxu0 0.0
    %2484 = vmatprep.subr.mxu0 0.0
    %2485 = vmatpush1.msra.mxu0 0.0
    %2486 = vmatprep.subr.mxu0 0.0
    %2487 = vmatpush1.msra.mxu0 0.0
    %2488 = vmatprep.subr.mxu0 0.0
    %2489 = vmatpush1.msra.mxu0 0.0
    %2490 = vmatprep.subr.mxu0 0.0
    %2491 = vmatpush1.msra.mxu0 0.0
    %2492 = vmatprep.subr.mxu0 0.0
    %2493 = vmatpush1.msra.mxu0 0.0
    %2494 = vmatprep.subr.mxu0 0.0
    %2495 = vmatpush1.msra.mxu0 0.0
    %2496 = vmatprep.subr.mxu0 0.0
    %2497 = vmatpush1.msra.mxu0 0.0
    %2498 = vmatprep.subr.mxu0 0.0
    %2499 = vmatpush1.msra.mxu0 0.0
    %2500 = vmatprep.subr.mxu0 0.0
    %2501 = vmatpush1.msra.mxu0 0.0
    %2502 = vmatprep.subr.mxu0 0.0
    %2503 = vmatpush1.msra.mxu0 0.0
    %2504 = vmatprep.mubr.f32.mxu0 0.0
    %2505 = vmatmul.mubr.f32.gmra.mrb[0].mxu0 %v1591
    %v2506 = vpop.f32.mrb[0].mxu0
    %v2507 = vadd.f32 0.0, %v2506
    %v2508 = vpop.f32.mrb[0].mxu0
    %2509 = vmatprep.mubr.f32.mxu0 0.0
    %2510 = vmatmul.mubr.f32.gmra.mrb[0].mxu0 %v1593
    %v2511 = vpop.f32.mrb[0].mxu0
    %v2512 = vadd.f32 0.0, %v2511
    %v2513 = vpop.f32.mrb[0].mxu0
    %2514 = vdwg.mxu0
    %v2515 = vmul.f32 %v1692, %v2507
    %v2516 = vmul.f32 %v1692, %v2512
    %v2517 = vadd.f32 %v2438, %v2515
    %v2518 = vadd.f32 %v2439, %v2516
    %v2519 = vld [vmem:[#allocation2 + $0x290] sm:$0xff]
    %v2520 = vld [vmem:[#allocation2 + $0x298] sm:$0xff]
    %v2521 = vld [vmem:[#allocation2 + $0x2a0] sm:$0xff]
    %v2522 = vld [vmem:[#allocation2 + $0x2a8] sm:$0xff]
    %v2523 = vld [vmem:[#allocation2 + $0x2b0] sm:$0xff]
    %v2524 = vld [vmem:[#allocation2 + $0x2b8] sm:$0xff]
    %v2525 = vld [vmem:[#allocation2 + $0x2c0] sm:$0xff]
    %v2526 = vld [vmem:[#allocation2 + $0x2c8] sm:$0xff]
    %v2527 = vld [vmem:[#allocation2 + $0x2d0] sm:$0xff]
    %v2528 = vld [vmem:[#allocation2 + $0x2d8] sm:$0xff]
    %v2529 = vld [vmem:[#allocation2 + $0x2e0] sm:$0xff]
    %v2530 = vld [vmem:[#allocation2 + $0x2e8] sm:$0xff]
    %v2531 = vld [vmem:[#allocation2 + $0x2f0] sm:$0xff]
    %v2532 = vld [vmem:[#allocation2 + $0x2f8] sm:$0xff]
    %v2533 = vld [vmem:[#allocation2 + $0x300] sm:$0xff]
    %v2534 = vld [vmem:[#allocation2 + $0x308] sm:$0xff]
    %v2535 = vpack.c.bf16 %v2518, %v2517
    %s2536 = scalar_lea.vmem [#allocation4], 65
    %v2537 = vld [vmem:[%s2536] ss:$8 sm:$0x3]
    %v2539 = vlaneseq
    %v2540 = vshrl.u32 %v2539, 7
    %v2541 = vsub.s32 0, %v2540
    %v2542 = vrot.slane %v2537, %v2541
    %v2543 = vlaneseq
    %v2544 = vshrl.u32 %v2543, 7
    %v2545 = vsub.s32 1, %v2544
    %v2546 = vrot.slane %v2537, %v2545
    %v2557 = vunpack.c.l.b16 %v2519
    %v2558 = vunpack.c.h.b16 %v2519
    %v2559 = vunpack.c.l.b16 %v2520
    %v2560 = vunpack.c.h.b16 %v2520
    %v2561 = vunpack.c.l.b16 %v2521
    %v2562 = vunpack.c.h.b16 %v2521
    %v2563 = vunpack.c.l.b16 %v2522
    %v2564 = vunpack.c.h.b16 %v2522
    %v2565 = vunpack.c.l.b16 %v2523
    %v2566 = vunpack.c.h.b16 %v2523
    %v2567 = vunpack.c.l.b16 %v2524
    %v2568 = vunpack.c.h.b16 %v2524
    %v2569 = vunpack.c.l.b16 %v2525
    %v2570 = vunpack.c.h.b16 %v2525
    %v2571 = vunpack.c.l.b16 %v2526
    %v2572 = vunpack.c.h.b16 %v2526
    %v2573 = vpack.c.b16 %v2559, %v2557
    %v2574 = vpack.c.b16 %v2560, %v2558
    %v2575 = vpack.c.b16 %v2563, %v2561
    %v2576 = vpack.c.b16 %v2564, %v2562
    %v2577 = vpack.c.b16 %v2567, %v2565
    %v2578 = vpack.c.b16 %v2568, %v2566
    %v2579 = vpack.c.b16 %v2571, %v2569
    %v2580 = vpack.c.b16 %v2572, %v2570
    %v2590 = vsel %vm173, %v2535, 0
    %2592 = vmatprep.subr.bf16.mxu0 %v2574
    %2593 = vmatpush1.bf16.msra.mxu0 %v2573
    %2594 = vmatprep.subr.bf16.mxu0 %v2576
    %2595 = vmatpush1.bf16.msra.mxu0 %v2575
    %2596 = vmatprep.subr.bf16.mxu0 %v2578
    %2597 = vmatpush1.bf16.msra.mxu0 %v2577
    %2598 = vmatprep.subr.bf16.mxu0 %v2580
    %2599 = vmatpush1.bf16.msra.mxu0 %v2579
    %2600 = vmatprep.subr.bf16.mxu0 0
    %2601 = vmatpush1.bf16.msra.mxu0 0
    %2602 = vmatprep.subr.bf16.mxu0 0
    %2603 = vmatpush1.bf16.msra.mxu0 0
    %2604 = vmatprep.subr.bf16.mxu0 0
    %2605 = vmatpush1.bf16.msra.mxu0 0
    %2606 = vmatprep.subr.bf16.mxu0 0
    %2607 = vmatpush1.bf16.msra.mxu0 0
    %2608 = vmatprep.subr.bf16.mxu0 0
    %2609 = vmatpush1.bf16.msra.mxu0 0
    %2610 = vmatprep.subr.bf16.mxu0 0
    %2611 = vmatpush1.bf16.msra.mxu0 0
    %2612 = vmatprep.subr.bf16.mxu0 0
    %2613 = vmatpush1.bf16.msra.mxu0 0
    %2614 = vmatprep.subr.bf16.mxu0 0
    %2615 = vmatpush1.bf16.msra.mxu0 0
    %2616 = vmatprep.subr.bf16.mxu0 0
    %2617 = vmatpush1.bf16.msra.mxu0 0
    %2618 = vmatprep.subr.bf16.mxu0 0
    %2619 = vmatpush1.bf16.msra.mxu0 0
    %2620 = vmatprep.subr.bf16.mxu0 0
    %2621 = vmatpush1.bf16.msra.mxu0 0
    %2622 = vmatprep.subr.bf16.mxu0 0
    %2623 = vmatpush1.bf16.msra.mxu0 0
    %2624 = vmatprep.mubr.bf16.mxu0 0
    %2625 = vmatmul.mubr.bf16.gmra.mrb[0].mxu0 %v2590
    %v2626 = vpop.f32.mrb[0].mxu0
    %v2627 = vadd.f32 %v2542, %v2626
    %v2628 = vpop.f32.mrb[0].mxu0
    %v2629 = vadd.f32 %v2546, %v2628
    %v2630 = vpop.f32.mrb[0].mxu0
    %v2631 = vadd.f32 %v2542, %v2630
    %v2632 = vpop.f32.mrb[0].mxu0
    %v2633 = vadd.f32 %v2546, %v2632
    %2634 = vdwg.mxu0
    %2635 = vmatprep.subr.mxu0 %v2629
    %2636 = vmatpush1.msra.mxu0 %v2627
    %2637 = vmatprep.subr.mxu0 %v2633
    %2638 = vmatpush1.msra.mxu0 %v2631
    %2639 = vmatprep.subr.mxu0 0.0
    %2640 = vmatpush1.msra.mxu0 0.0
    %2641 = vmatprep.subr.mxu0 0.0
    %2642 = vmatpush1.msra.mxu0 0.0
    %2643 = vmatprep.subr.mxu0 0.0
    %2644 = vmatpush1.msra.mxu0 0.0
    %2645 = vmatprep.subr.mxu0 0.0
    %2646 = vmatpush1.msra.mxu0 0.0
    %2647 = vmatprep.subr.mxu0 0.0
    %2648 = vmatpush1.msra.mxu0 0.0
    %2649 = vmatprep.subr.mxu0 0.0
    %2650 = vmatpush1.msra.mxu0 0.0
    %2651 = vmatprep.subr.mxu0 0.0
    %2652 = vmatpush1.msra.mxu0 0.0
    %2653 = vmatprep.subr.mxu0 0.0
    %2654 = vmatpush1.msra.mxu0 0.0
    %2655 = vmatprep.subr.mxu0 0.0
    %2656 = vmatpush1.msra.mxu0 0.0
    %2657 = vmatprep.subr.mxu0 0.0
    %2658 = vmatpush1.msra.mxu0 0.0
    %2659 = vmatprep.subr.mxu0 0.0
    %2660 = vmatpush1.msra.mxu0 0.0
    %2661 = vmatprep.subr.mxu0 0.0
    %2662 = vmatpush1.msra.mxu0 0.0
    %2663 = vmatprep.subr.mxu0 0.0
    %2664 = vmatpush1.msra.mxu0 0.0
    %2665 = vmatprep.subr.mxu0 0.0
    %2666 = vmatpush1.msra.mxu0 0.0
    %2667 = vmatprep.subr.mxu0 0.0
    %2668 = vmatpush1.msra.mxu0 0.0
    %2669 = vmatprep.subr.mxu0 0.0
    %2670 = vmatpush1.msra.mxu0 0.0
    %2671 = vmatprep.subr.mxu0 0.0
    %2672 = vmatpush1.msra.mxu0 0.0
    %2673 = vmatprep.subr.mxu0 0.0
    %2674 = vmatpush1.msra.mxu0 0.0
    %2675 = vmatprep.subr.mxu0 0.0
    %2676 = vmatpush1.msra.mxu0 0.0
    %2677 = vmatprep.subr.mxu0 0.0
    %2678 = vmatpush1.msra.mxu0 0.0
    %2679 = vmatprep.subr.mxu0 0.0
    %2680 = vmatpush1.msra.mxu0 0.0
    %2681 = vmatprep.subr.mxu0 0.0
    %2682 = vmatpush1.msra.mxu0 0.0
    %2683 = vmatprep.subr.mxu0 0.0
    %2684 = vmatpush1.msra.mxu0 0.0
    %2685 = vmatprep.subr.mxu0 0.0
    %2686 = vmatpush1.msra.mxu0 0.0
    %2687 = vmatprep.subr.mxu0 0.0
    %2688 = vmatpush1.msra.mxu0 0.0
    %2689 = vmatprep.subr.mxu0 0.0
    %2690 = vmatpush1.msra.mxu0 0.0
    %2691 = vmatprep.subr.mxu0 0.0
    %2692 = vmatpush1.msra.mxu0 0.0
    %2693 = vmatprep.subr.mxu0 0.0
    %2694 = vmatpush1.msra.mxu0 0.0
    %2695 = vmatprep.subr.mxu0 0.0
    %2696 = vmatpush1.msra.mxu0 0.0
    %2697 = vmatprep.subr.mxu0 0.0
    %2698 = vmatpush1.msra.mxu0 0.0
    %2699 = vmatprep.mubr.f32.mxu0 0.0
    %2700 = vmatmul.mubr.f32.gmra.mrb[0].mxu0 %v1591
    %v2701 = vpop.f32.mrb[0].mxu0
    %v2702 = vadd.f32 0.0, %v2701
    %v2703 = vpop.f32.mrb[0].mxu0
    %v2704 = vadd.f32 0.0, %v2703
    %2705 = vmatprep.mubr.f32.mxu0 0.0
    %2706 = vmatmul.mubr.f32.gmra.mrb[0].mxu0 %v1593
    %v2707 = vpop.f32.mrb[0].mxu0
    %v2708 = vadd.f32 0.0, %v2707
    %v2709 = vpop.f32.mrb[0].mxu0
    %v2710 = vadd.f32 0.0, %v2709
    %2711 = vdwg.mxu0
    %v2712 = vmul.f32 %v1676, %v2627
    %v2713 = vmul.f32 %v1680, %v2629
    %v2714 = vmul.f32 %v1676, %v2631
    %v2715 = vmul.f32 %v1680, %v2633
    %v2716 = vmul.f32 %v1692, %v2702
    %v2717 = vmul.f32 %v1696, %v2704
    %v2718 = vmul.f32 %v1692, %v2708
    %v2719 = vmul.f32 %v1696, %v2710
    %v2720 = vadd.f32 %v2712, %v2716
    %v2721 = vadd.f32 %v2713, %v2717
    %v2722 = vadd.f32 %v2714, %v2718
    %v2723 = vadd.f32 %v2715, %v2719
    %v2732 = vunpack.c.l.b16 %v2527
    %v2733 = vunpack.c.h.b16 %v2527
    %v2734 = vunpack.c.l.b16 %v2528
    %v2735 = vunpack.c.h.b16 %v2528
    %v2736 = vunpack.c.l.b16 %v2529
    %v2737 = vunpack.c.h.b16 %v2529
    %v2738 = vunpack.c.l.b16 %v2530
    %v2739 = vunpack.c.h.b16 %v2530
    %v2740 = vunpack.c.l.b16 %v2531
    %v2741 = vunpack.c.h.b16 %v2531
    %v2742 = vunpack.c.l.b16 %v2532
    %v2743 = vunpack.c.h.b16 %v2532
    %v2744 = vunpack.c.l.b16 %v2533
    %v2745 = vunpack.c.h.b16 %v2533
    %v2746 = vunpack.c.l.b16 %v2534
    %v2747 = vunpack.c.h.b16 %v2534
    %v2748 = vpack.c.b16 %v2734, %v2732
    %v2749 = vpack.c.b16 %v2735, %v2733
    %v2750 = vpack.c.b16 %v2738, %v2736
    %v2751 = vpack.c.b16 %v2739, %v2737
    %v2752 = vpack.c.b16 %v2742, %v2740
    %v2753 = vpack.c.b16 %v2743, %v2741
    %v2754 = vpack.c.b16 %v2746, %v2744
    %v2755 = vpack.c.b16 %v2747, %v2745
    %2764 = vmatprep.subr.bf16.mxu0 %v2749
    %2765 = vmatpush1.bf16.msra.mxu0 %v2748
    %2766 = vmatprep.subr.bf16.mxu0 %v2751
    %2767 = vmatpush1.bf16.msra.mxu0 %v2750
    %2768 = vmatprep.subr.bf16.mxu0 %v2753
    %2769 = vmatpush1.bf16.msra.mxu0 %v2752
    %2770 = vmatprep.subr.bf16.mxu0 %v2755
    %2771 = vmatpush1.bf16.msra.mxu0 %v2754
    %2772 = vmatprep.subr.bf16.mxu0 0
    %2773 = vmatpush1.bf16.msra.mxu0 0
    %2774 = vmatprep.subr.bf16.mxu0 0
    %2775 = vmatpush1.bf16.msra.mxu0 0
    %2776 = vmatprep.subr.bf16.mxu0 0
    %2777 = vmatpush1.bf16.msra.mxu0 0
    %2778 = vmatprep.subr.bf16.mxu0 0
    %2779 = vmatpush1.bf16.msra.mxu0 0
    %2780 = vmatprep.subr.bf16.mxu0 0
    %2781 = vmatpush1.bf16.msra.mxu0 0
    %2782 = vmatprep.subr.bf16.mxu0 0
    %2783 = vmatpush1.bf16.msra.mxu0 0
    %2784 = vmatprep.subr.bf16.mxu0 0
    %2785 = vmatpush1.bf16.msra.mxu0 0
    %2786 = vmatprep.subr.bf16.mxu0 0
    %2787 = vmatpush1.bf16.msra.mxu0 0
    %2788 = vmatprep.subr.bf16.mxu0 0
    %2789 = vmatpush1.bf16.msra.mxu0 0
    %2790 = vmatprep.subr.bf16.mxu0 0
    %2791 = vmatpush1.bf16.msra.mxu0 0
    %2792 = vmatprep.subr.bf16.mxu0 0
    %2793 = vmatpush1.bf16.msra.mxu0 0
    %2794 = vmatprep.subr.bf16.mxu0 0
    %2795 = vmatpush1.bf16.msra.mxu0 0
    %2796 = vmatprep.mubr.bf16.mxu0 0
    %2797 = vmatmul.mubr.bf16.gmra.mrb[0].mxu0 %v1748
    %v2798 = vpop.f32.mrb[0].mxu0
    %v2799 = vadd.f32 0.0, %v2798
    %v2800 = vpop.f32.mrb[0].mxu0
    %v2801 = vadd.f32 0.0, %v2800
    %v2802 = vpop.f32.mrb[0].mxu0
    %v2803 = vpop.f32.mrb[0].mxu0
    %2804 = vdwg.mxu0
    %v2805 = vadd.f32 %v2720, %v2799
    %v2806 = vadd.f32 %v2721, %v2801
    %v2807 = vxor.u32 %v2805, 2147483648
    %v2808 = vxor.u32 %v2806, 2147483648
    %v2809 = vmul.f32 %v2807, 1.442695
    %v2810 = vpow.pop %v2809
    %v2811 = vmul.f32 %v2808, 1.442695
    %v2812 = vpow.pop %v2811
    %v2813 = vadd.f32 %v2810, 1.0
    %v2814 = vadd.f32 %v2812, 1.0
    %v2815 = vrcp.pop %v2813
    %v2816 = vmul.f32 1.0, %v2815
    %v2817 = vrcp.pop %v2814
    %v2818 = vmul.f32 1.0, %v2817
    %v2819 = vtanh.pop %v2806
    %v2820 = vmul.f32 %v2816, 0.0
    %2822 = vrot.lane.b32.xlu0 %v2819, 64
    %v2823 = vpop.permute.xlu0 %2822
    %v2825 = vmul.f32 %v2816, %v2823
    %2827 = vrot.lane.b32.xlu0 %v2825, 64
    %v2828 = vpop.permute.xlu0 %2827
    %v2830 = vadd.f32 %v2820, %v2828
    %v2831 = vtanh.pop %v2830
    %2833 = vrot.lane.b32.xlu0 %v2831, 64
    %v2834 = vpop.permute.xlu0 %2833
    %v2836 = vmul.f32 %v2818, %v2834
    %v2837 = vpack.c.bf16 %v2836, %v2836
    %v2839 = vsel %vm173, %v2837, 0
    %2841 = vmatprep.subr.bf16.mxu0 %v2749
    %2842 = vmatpush1.bf16.msra.mxu0 %v2748
    %2843 = vmatprep.subr.bf16.mxu0 %v2751
    %2844 = vmatpush1.bf16.msra.mxu0 %v2750
    %2845 = vmatprep.subr.bf16.mxu0 %v2753
    %2846 = vmatpush1.bf16.msra.mxu0 %v2752
    %2847 = vmatprep.subr.bf16.mxu0 %v2755
    %2848 = vmatpush1.bf16.msra.mxu0 %v2754
    %2849 = vmatprep.subr.bf16.mxu0 0
    %2850 = vmatpush1.bf16.msra.mxu0 0
    %2851 = vmatprep.subr.bf16.mxu0 0
    %2852 = vmatpush1.bf16.msra.mxu0 0
    %2853 = vmatprep.subr.bf16.mxu0 0
    %2854 = vmatpush1.bf16.msra.mxu0 0
    %2855 = vmatprep.subr.bf16.mxu0 0
    %2856 = vmatpush1.bf16.msra.mxu0 0
    %2857 = vmatprep.subr.bf16.mxu0 0
    %2858 = vmatpush1.bf16.msra.mxu0 0
    %2859 = vmatprep.subr.bf16.mxu0 0
    %2860 = vmatpush1.bf16.msra.mxu0 0
    %2861 = vmatprep.subr.bf16.mxu0 0
    %2862 = vmatpush1.bf16.msra.mxu0 0
    %2863 = vmatprep.subr.bf16.mxu0 0
    %2864 = vmatpush1.bf16.msra.mxu0 0
    %2865 = vmatprep.subr.bf16.mxu0 0
    %2866 = vmatpush1.bf16.msra.mxu0 0
    %2867 = vmatprep.subr.bf16.mxu0 0
    %2868 = vmatpush1.bf16.msra.mxu0 0
    %2869 = vmatprep.subr.bf16.mxu0 0
    %2870 = vmatpush1.bf16.msra.mxu0 0
    %2871 = vmatprep.subr.bf16.mxu0 0
    %2872 = vmatpush1.bf16.msra.mxu0 0
    %2873 = vmatprep.mubr.bf16.mxu0 0
    %2874 = vmatmul.mubr.bf16.gmra.mrb[0].mxu0 %v2839
    %v2875 = vpop.f32.mrb[0].mxu0
    %v2876 = vadd.f32 0.0, %v2875
    %v2877 = vpop.f32.mrb[0].mxu0
    %v2878 = vadd.f32 0.0, %v2877
    %v2879 = vpop.f32.mrb[0].mxu0
    %v2880 = vpop.f32.mrb[0].mxu0
    %2881 = vdwg.mxu0
    %v2884 = vrot.slane %v2876, 6
    %v2885 = vrot.slane %v2878, 6
    %v2888 = vadd.f32 %v2720, %v2884
    %v2889 = vadd.f32 %v2721, %v2885
    %v2890 = vxor.u32 %v2888, 2147483648
    %v2891 = vxor.u32 %v2889, 2147483648
    %v2892 = vmul.f32 %v2890, 1.442695
    %v2893 = vpow.pop %v2892
    %v2894 = vmul.f32 %v2891, 1.442695
    %v2895 = vpow.pop %v2894
    %v2896 = vadd.f32 %v2893, 1.0
    %v2897 = vadd.f32 %v2895, 1.0
    %v2898 = vrcp.pop %v2896
    %v2899 = vmul.f32 1.0, %v2898
    %v2900 = vrcp.pop %v2897
    %v2901 = vmul.f32 1.0, %v2900
    %v2902 = vtanh.pop %v2889
    %v2904 = vrot.slane %v2830, 6
    %v2906 = vmul.f32 %v2899, %v2904
    %2908 = vrot.lane.b32.xlu0 %v2902, 64
    %v2909 = vpop.permute.xlu0 %2908
    %v2911 = vmul.f32 %v2899, %v2909
    %2913 = vrot.lane.b32.xlu0 %v2911, 64
    %v2914 = vpop.permute.xlu0 %2913
    %v2916 = vadd.f32 %v2906, %v2914
    %v2917 = vtanh.pop %v2916
    %2919 = vrot.lane.b32.xlu0 %v2917, 64
    %v2920 = vpop.permute.xlu0 %2919
    %v2922 = vmul.f32 %v2901, %v2920
    %v2923 = vpack.c.bf16 %v2922, %v2922
    %v2925 = vrot.slane %v2923, 1
    %v2927 = vsel %vm173, %v2925, 0
    %2929 = vmatprep.subr.bf16.mxu0 %v2749
    %2930 = vmatpush1.bf16.msra.mxu0 %v2748
    %2931 = vmatprep.subr.bf16.mxu0 %v2751
    %2932 = vmatpush1.bf16.msra.mxu0 %v2750
    %2933 = vmatprep.subr.bf16.mxu0 %v2753
    %2934 = vmatpush1.bf16.msra.mxu0 %v2752
    %2935 = vmatprep.subr.bf16.mxu0 %v2755
    %2936 = vmatpush1.bf16.msra.mxu0 %v2754
    %2937 = vmatprep.subr.bf16.mxu0 0
    %2938 = vmatpush1.bf16.msra.mxu0 0
    %2939 = vmatprep.subr.bf16.mxu0 0
    %2940 = vmatpush1.bf16.msra.mxu0 0
    %2941 = vmatprep.subr.bf16.mxu0 0
    %2942 = vmatpush1.bf16.msra.mxu0 0
    %2943 = vmatprep.subr.bf16.mxu0 0
    %2944 = vmatpush1.bf16.msra.mxu0 0
    %2945 = vmatprep.subr.bf16.mxu0 0
    %2946 = vmatpush1.bf16.msra.mxu0 0
    %2947 = vmatprep.subr.bf16.mxu0 0
    %2948 = vmatpush1.bf16.msra.mxu0 0
    %2949 = vmatprep.subr.bf16.mxu0 0
    %2950 = vmatpush1.bf16.msra.mxu0 0
    %2951 = vmatprep.subr.bf16.mxu0 0
    %2952 = vmatpush1.bf16.msra.mxu0 0
    %2953 = vmatprep.subr.bf16.mxu0 0
    %2954 = vmatpush1.bf16.msra.mxu0 0
    %2955 = vmatprep.subr.bf16.mxu0 0
    %2956 = vmatpush1.bf16.msra.mxu0 0
    %2957 = vmatprep.subr.bf16.mxu0 0
    %2958 = vmatpush1.bf16.msra.mxu0 0
    %2959 = vmatprep.subr.bf16.mxu0 0
    %2960 = vmatpush1.bf16.msra.mxu0 0
    %2961 = vmatprep.mubr.bf16.mxu0 0
    %2962 = vmatmul.mubr.bf16.gmra.mrb[0].mxu0 %v2927
    %v2963 = vpop.f32.mrb[0].mxu0
    %v2964 = vadd.f32 0.0, %v2963
    %v2965 = vpop.f32.mrb[0].mxu0
    %v2966 = vadd.f32 0.0, %v2965
    %v2967 = vpop.f32.mrb[0].mxu0
    %v2968 = vpop.f32.mrb[0].mxu0
    %2969 = vdwg.mxu0
    %v2972 = vrot.slane %v2964, 4
    %v2973 = vrot.slane %v2966, 4
    %v2976 = vadd.f32 %v2720, %v2972
    %v2977 = vadd.f32 %v2721, %v2973
    %v2978 = vxor.u32 %v2976, 2147483648
    %v2979 = vxor.u32 %v2977, 2147483648
    %v2980 = vmul.f32 %v2978, 1.442695
    %v2981 = vpow.pop %v2980
    %v2982 = vmul.f32 %v2979, 1.442695
    %v2983 = vpow.pop %v2982
    %v2984 = vadd.f32 %v2981, 1.0
    %v2985 = vadd.f32 %v2983, 1.0
    %v2986 = vrcp.pop %v2984
    %v2987 = vmul.f32 1.0, %v2986
    %v2988 = vrcp.pop %v2985
    %v2989 = vmul.f32 1.0, %v2988
    %v2990 = vtanh.pop %v2977
    %v2992 = vrot.slane %v2916, 6
    %v2994 = vmul.f32 %v2987, %v2992
    %2996 = vrot.lane.b32.xlu0 %v2990, 64
    %v2997 = vpop.permute.xlu0 %2996
    %v2999 = vmul.f32 %v2987, %v2997
    %3001 = vrot.lane.b32.xlu0 %v2999, 64
    %v3002 = vpop.permute.xlu0 %3001
    %v3004 = vadd.f32 %v2994, %v3002
    %v3005 = vtanh.pop %v3004
    %3007 = vrot.lane.b32.xlu0 %v3005, 64
    %v3008 = vpop.permute.xlu0 %3007
    %v3010 = vmul.f32 %v2989, %v3008
    %v3011 = vpack.c.bf16 %v3010, %v3010
    %v3013 = vrot.slane %v3011, 2
    %v3015 = vsel %vm173, %v3013, 0
    %3017 = vmatprep.subr.bf16.mxu0 %v2749
    %3018 = vmatpush1.bf16.msra.mxu0 %v2748
    %3019 = vmatprep.subr.bf16.mxu0 %v2751
    %3020 = vmatpush1.bf16.msra.mxu0 %v2750
    %3021 = vmatprep.subr.bf16.mxu0 %v2753
    %3022 = vmatpush1.bf16.msra.mxu0 %v2752
    %3023 = vmatprep.subr.bf16.mxu0 %v2755
    %3024 = vmatpush1.bf16.msra.mxu0 %v2754
    %3025 = vmatprep.subr.bf16.mxu0 0
    %3026 = vmatpush1.bf16.msra.mxu0 0
    %3027 = vmatprep.subr.bf16.mxu0 0
    %3028 = vmatpush1.bf16.msra.mxu0 0
    %3029 = vmatprep.subr.bf16.mxu0 0
    %3030 = vmatpush1.bf16.msra.mxu0 0
    %3031 = vmatprep.subr.bf16.mxu0 0
    %3032 = vmatpush1.bf16.msra.mxu0 0
    %3033 = vmatprep.subr.bf16.mxu0 0
    %3034 = vmatpush1.bf16.msra.mxu0 0
    %3035 = vmatprep.subr.bf16.mxu0 0
    %3036 = vmatpush1.bf16.msra.mxu0 0
    %3037 = vmatprep.subr.bf16.mxu0 0
    %3038 = vmatpush1.bf16.msra.mxu0 0
    %3039 = vmatprep.subr.bf16.mxu0 0
    %3040 = vmatpush1.bf16.msra.mxu0 0
    %3041 = vmatprep.subr.bf16.mxu0 0
    %3042 = vmatpush1.bf16.msra.mxu0 0
    %3043 = vmatprep.subr.bf16.mxu0 0
    %3044 = vmatpush1.bf16.msra.mxu0 0
    %3045 = vmatprep.subr.bf16.mxu0 0
    %3046 = vmatpush1.bf16.msra.mxu0 0
    %3047 = vmatprep.subr.bf16.mxu0 0
    %3048 = vmatpush1.bf16.msra.mxu0 0
    %3049 = vmatprep.mubr.bf16.mxu0 0
    %3050 = vmatmul.mubr.bf16.gmra.mrb[0].mxu0 %v3015
    %v3051 = vpop.f32.mrb[0].mxu0
    %v3052 = vadd.f32 0.0, %v3051
    %v3053 = vpop.f32.mrb[0].mxu0
    %v3054 = vadd.f32 0.0, %v3053
    %v3055 = vpop.f32.mrb[0].mxu0
    %v3056 = vpop.f32.mrb[0].mxu0
    %3057 = vdwg.mxu0
    %v3060 = vrot.slane %v3052, 2
    %v3061 = vrot.slane %v3054, 2
    %v3064 = vadd.f32 %v2720, %v3060
    %v3065 = vadd.f32 %v2721, %v3061
    %v3066 = vxor.u32 %v3064, 2147483648
    %v3067 = vxor.u32 %v3065, 2147483648
    %v3068 = vmul.f32 %v3066, 1.442695
    %v3069 = vpow.pop %v3068
    %v3070 = vmul.f32 %v3067, 1.442695
    %v3071 = vpow.pop %v3070
    %v3072 = vadd.f32 %v3069, 1.0
    %v3073 = vadd.f32 %v3071, 1.0
    %v3074 = vrcp.pop %v3072
    %v3075 = vmul.f32 1.0, %v3074
    %v3076 = vrcp.pop %v3073
    %v3077 = vmul.f32 1.0, %v3076
    %v3078 = vtanh.pop %v3065
    %v3080 = vrot.slane %v3004, 6
    %v3082 = vmul.f32 %v3075, %v3080
    %3084 = vrot.lane.b32.xlu0 %v3078, 64
    %v3085 = vpop.permute.xlu0 %3084
    %v3087 = vmul.f32 %v3075, %v3085
    %3089 = vrot.lane.b32.xlu0 %v3087, 64
    %v3090 = vpop.permute.xlu0 %3089
    %v3092 = vadd.f32 %v3082, %v3090
    %v3093 = vtanh.pop %v3092
    %3095 = vrot.lane.b32.xlu0 %v3093, 64
    %v3096 = vpop.permute.xlu0 %3095
    %v3098 = vmul.f32 %v3077, %v3096
    %v3099 = vpack.c.bf16 %v3098, %v3098
    %v3101 = vrot.slane %v3099, 3
    %v3103 = vsel %vm173, %v3101, 0
    %3105 = vmatprep.subr.bf16.mxu0 %v2749
    %3106 = vmatpush1.bf16.msra.mxu0 %v2748
    %3107 = vmatprep.subr.bf16.mxu0 %v2751
    %3108 = vmatpush1.bf16.msra.mxu0 %v2750
    %3109 = vmatprep.subr.bf16.mxu0 %v2753
    %3110 = vmatpush1.bf16.msra.mxu0 %v2752
    %3111 = vmatprep.subr.bf16.mxu0 %v2755
    %3112 = vmatpush1.bf16.msra.mxu0 %v2754
    %3113 = vmatprep.subr.bf16.mxu0 0
    %3114 = vmatpush1.bf16.msra.mxu0 0
    %3115 = vmatprep.subr.bf16.mxu0 0
    %3116 = vmatpush1.bf16.msra.mxu0 0
    %3117 = vmatprep.subr.bf16.mxu0 0
    %3118 = vmatpush1.bf16.msra.mxu0 0
    %3119 = vmatprep.subr.bf16.mxu0 0
    %3120 = vmatpush1.bf16.msra.mxu0 0
    %3121 = vmatprep.subr.bf16.mxu0 0
    %3122 = vmatpush1.bf16.msra.mxu0 0
    %3123 = vmatprep.subr.bf16.mxu0 0
    %3124 = vmatpush1.bf16.msra.mxu0 0
    %3125 = vmatprep.subr.bf16.mxu0 0
    %3126 = vmatpush1.bf16.msra.mxu0 0
    %3127 = vmatprep.subr.bf16.mxu0 0
    %3128 = vmatpush1.bf16.msra.mxu0 0
    %3129 = vmatprep.subr.bf16.mxu0 0
    %3130 = vmatpush1.bf16.msra.mxu0 0
    %3131 = vmatprep.subr.bf16.mxu0 0
    %3132 = vmatpush1.bf16.msra.mxu0 0
    %3133 = vmatprep.subr.bf16.mxu0 0
    %3134 = vmatpush1.bf16.msra.mxu0 0
    %3135 = vmatprep.subr.bf16.mxu0 0
    %3136 = vmatpush1.bf16.msra.mxu0 0
    %3137 = vmatprep.mubr.bf16.mxu0 0
    %3138 = vmatmul.mubr.bf16.gmra.mrb[0].mxu0 %v3103
    %v3139 = vpop.f32.mrb[0].mxu0
    %v3140 = vadd.f32 0.0, %v3139
    %v3141 = vpop.f32.mrb[0].mxu0
    %v3142 = vadd.f32 0.0, %v3141
    %v3143 = vpop.f32.mrb[0].mxu0
    %v3144 = vpop.f32.mrb[0].mxu0
    %3145 = vdwg.mxu0
    %v3146 = vadd.f32 %v2722, %v3140
    %v3147 = vadd.f32 %v2723, %v3142
    %v3148 = vxor.u32 %v3146, 2147483648
    %v3149 = vxor.u32 %v3147, 2147483648
    %v3150 = vmul.f32 %v3148, 1.442695
    %v3151 = vpow.pop %v3150
    %v3152 = vmul.f32 %v3149, 1.442695
    %v3153 = vpow.pop %v3152
    %v3154 = vadd.f32 %v3151, 1.0
    %v3155 = vadd.f32 %v3153, 1.0
    %v3156 = vrcp.pop %v3154
    %v3157 = vmul.f32 1.0, %v3156
    %v3158 = vrcp.pop %v3155
    %v3159 = vmul.f32 1.0, %v3158
    %v3160 = vtanh.pop %v3147
    %v3162 = vrot.slane %v3092, 6
    %v3164 = vmul.f32 %v3157, %v3162
    %3166 = vrot.lane.b32.xlu0 %v3160, 64
    %v3167 = vpop.permute.xlu0 %3166
    %v3169 = vmul.f32 %v3157, %v3167
    %3171 = vrot.lane.b32.xlu0 %v3169, 64
    %v3172 = vpop.permute.xlu0 %3171
    %v3174 = vadd.f32 %v3164, %v3172
    %v3175 = vtanh.pop %v3174
    %3177 = vrot.lane.b32.xlu0 %v3175, 64
    %v3178 = vpop.permute.xlu0 %3177
    %v3180 = vmul.f32 %v3159, %v3178
    %v3181 = vpack.c.bf16 %v3180, %v3180
    %v3183 = vsel %vm173, %v3181, 0
    %3185 = vmatprep.subr.bf16.mxu0 %v2749
    %3186 = vmatpush1.bf16.msra.mxu0 %v2748
    %3187 = vmatprep.subr.bf16.mxu0 %v2751
    %3188 = vmatpush1.bf16.msra.mxu0 %v2750
    %3189 = vmatprep.subr.bf16.mxu0 %v2753
    %3190 = vmatpush1.bf16.msra.mxu0 %v2752
    %3191 = vmatprep.subr.bf16.mxu0 %v2755
    %3192 = vmatpush1.bf16.msra.mxu0 %v2754
    %3193 = vmatprep.subr.bf16.mxu0 0
    %3194 = vmatpush1.bf16.msra.mxu0 0
    %3195 = vmatprep.subr.bf16.mxu0 0
    %3196 = vmatpush1.bf16.msra.mxu0 0
    %3197 = vmatprep.subr.bf16.mxu0 0
    %3198 = vmatpush1.bf16.msra.mxu0 0
    %3199 = vmatprep.subr.bf16.mxu0 0
    %3200 = vmatpush1.bf16.msra.mxu0 0
    %3201 = vmatprep.subr.bf16.mxu0 0
    %3202 = vmatpush1.bf16.msra.mxu0 0
    %3203 = vmatprep.subr.bf16.mxu0 0
    %3204 = vmatpush1.bf16.msra.mxu0 0
    %3205 = vmatprep.subr.bf16.mxu0 0
    %3206 = vmatpush1.bf16.msra.mxu0 0
    %3207 = vmatprep.subr.bf16.mxu0 0
    %3208 = vmatpush1.bf16.msra.mxu0 0
    %3209 = vmatprep.subr.bf16.mxu0 0
    %3210 = vmatpush1.bf16.msra.mxu0 0
    %3211 = vmatprep.subr.bf16.mxu0 0
    %3212 = vmatpush1.bf16.msra.mxu0 0
    %3213 = vmatprep.subr.bf16.mxu0 0
    %3214 = vmatpush1.bf16.msra.mxu0 0
    %3215 = vmatprep.subr.bf16.mxu0 0
    %3216 = vmatpush1.bf16.msra.mxu0 0
    %3217 = vmatprep.mubr.bf16.mxu0 0
    %3218 = vmatmul.mubr.bf16.gmra.mrb[0].mxu0 %v3183
    %v3219 = vpop.f32.mrb[0].mxu0
    %v3220 = vadd.f32 0.0, %v3219
    %v3221 = vpop.f32.mrb[0].mxu0
    %v3222 = vadd.f32 0.0, %v3221
    %v3223 = vpop.f32.mrb[0].mxu0
    %v3224 = vpop.f32.mrb[0].mxu0
    %3225 = vdwg.mxu0
    %v3228 = vrot.slane %v3220, 6
    %v3229 = vrot.slane %v3222, 6
    %v3232 = vadd.f32 %v2722, %v3228
    %v3233 = vadd.f32 %v2723, %v3229
    %v3234 = vxor.u32 %v3232, 2147483648
    %v3235 = vxor.u32 %v3233, 2147483648
    %v3236 = vmul.f32 %v3234, 1.442695
    %v3237 = vpow.pop %v3236
    %v3238 = vmul.f32 %v3235, 1.442695
    %v3239 = vpow.pop %v3238
    %v3240 = vadd.f32 %v3237, 1.0
    %v3241 = vadd.f32 %v3239, 1.0
    %v3242 = vrcp.pop %v3240
    %v3243 = vmul.f32 1.0, %v3242
    %v3244 = vrcp.pop %v3241
    %v3245 = vmul.f32 1.0, %v3244
    %v3246 = vtanh.pop %v3233
    %v3248 = vrot.slane %v3174, 6
    %v3250 = vmul.f32 %v3243, %v3248
    %3252 = vrot.lane.b32.xlu0 %v3246, 64
    %v3253 = vpop.permute.xlu0 %3252
    %v3255 = vmul.f32 %v3243, %v3253
    %3257 = vrot.lane.b32.xlu0 %v3255, 64
    %v3258 = vpop.permute.xlu0 %3257
    %v3260 = vadd.f32 %v3250, %v3258
    %v3261 = vtanh.pop %v3260
    %3263 = vrot.lane.b32.xlu0 %v3261, 64
    %v3264 = vpop.permute.xlu0 %3263
    %v3266 = vmul.f32 %v3245, %v3264
    %v3267 = vpack.c.bf16 %v3266, %v3266
    %v3269 = vrot.slane %v3267, 1
    %v3271 = vsel %vm173, %v3269, 0
    %3273 = vmatprep.subr.bf16.mxu0 %v2749
    %3274 = vmatpush1.bf16.msra.mxu0 %v2748
    %3275 = vmatprep.subr.bf16.mxu0 %v2751
    %3276 = vmatpush1.bf16.msra.mxu0 %v2750
    %3277 = vmatprep.subr.bf16.mxu0 %v2753
    %3278 = vmatpush1.bf16.msra.mxu0 %v2752
    %3279 = vmatprep.subr.bf16.mxu0 %v2755
    %3280 = vmatpush1.bf16.msra.mxu0 %v2754
    %3281 = vmatprep.subr.bf16.mxu0 0
    %3282 = vmatpush1.bf16.msra.mxu0 0
    %3283 = vmatprep.subr.bf16.mxu0 0
    %3284 = vmatpush1.bf16.msra.mxu0 0
    %3285 = vmatprep.subr.bf16.mxu0 0
    %3286 = vmatpush1.bf16.msra.mxu0 0
    %3287 = vmatprep.subr.bf16.mxu0 0
    %3288 = vmatpush1.bf16.msra.mxu0 0
    %3289 = vmatprep.subr.bf16.mxu0 0
    %3290 = vmatpush1.bf16.msra.mxu0 0
    %3291 = vmatprep.subr.bf16.mxu0 0
    %3292 = vmatpush1.bf16.msra.mxu0 0
    %3293 = vmatprep.subr.bf16.mxu0 0
    %3294 = vmatpush1.bf16.msra.mxu0 0
    %3295 = vmatprep.subr.bf16.mxu0 0
    %3296 = vmatpush1.bf16.msra.mxu0 0
    %3297 = vmatprep.subr.bf16.mxu0 0
    %3298 = vmatpush1.bf16.msra.mxu0 0
    %3299 = vmatprep.subr.bf16.mxu0 0
    %3300 = vmatpush1.bf16.msra.mxu0 0
    %3301 = vmatprep.subr.bf16.mxu0 0
    %3302 = vmatpush1.bf16.msra.mxu0 0
    %3303 = vmatprep.subr.bf16.mxu0 0
    %3304 = vmatpush1.bf16.msra.mxu0 0
    %3305 = vmatprep.mubr.bf16.mxu0 0
    %3306 = vmatmul.mubr.bf16.gmra.mrb[0].mxu0 %v3271
    %v3307 = vpop.f32.mrb[0].mxu0
    %v3308 = vadd.f32 0.0, %v3307
    %v3309 = vpop.f32.mrb[0].mxu0
    %v3310 = vadd.f32 0.0, %v3309
    %v3311 = vpop.f32.mrb[0].mxu0
    %v3312 = vpop.f32.mrb[0].mxu0
    %3313 = vdwg.mxu0
    %v3316 = vrot.slane %v3308, 4
    %v3317 = vrot.slane %v3310, 4
    %v3320 = vadd.f32 %v2722, %v3316
    %v3321 = vadd.f32 %v2723, %v3317
    %v3322 = vxor.u32 %v3320, 2147483648
    %v3323 = vxor.u32 %v3321, 2147483648
    %v3324 = vmul.f32 %v3322, 1.442695
    %v3325 = vpow.pop %v3324
    %v3326 = vmul.f32 %v3323, 1.442695
    %v3327 = vpow.pop %v3326
    %v3328 = vadd.f32 %v3325, 1.0
    %v3329 = vadd.f32 %v3327, 1.0
    %v3330 = vrcp.pop %v3328
    %v3331 = vmul.f32 1.0, %v3330
    %v3332 = vrcp.pop %v3329
    %v3333 = vmul.f32 1.0, %v3332
    %v3334 = vtanh.pop %v3321
    %v3336 = vrot.slane %v3260, 6
    %v3338 = vmul.f32 %v3331, %v3336
    %3340 = vrot.lane.b32.xlu0 %v3334, 64
    %v3341 = vpop.permute.xlu0 %3340
    %v3343 = vmul.f32 %v3331, %v3341
    %3345 = vrot.lane.b32.xlu0 %v3343, 64
    %v3346 = vpop.permute.xlu0 %3345
    %v3348 = vadd.f32 %v3338, %v3346
    %v3349 = vtanh.pop %v3348
    %3351 = vrot.lane.b32.xlu0 %v3349, 64
    %v3352 = vpop.permute.xlu0 %3351
    %v3354 = vmul.f32 %v3333, %v3352
    %v3355 = vpack.c.bf16 %v3354, %v3354
    %v3357 = vrot.slane %v3355, 2
    %v3359 = vsel %vm173, %v3357, 0
    %3361 = vmatprep.subr.bf16.mxu0 %v2749
    %3362 = vmatpush1.bf16.msra.mxu0 %v2748
    %3363 = vmatprep.subr.bf16.mxu0 %v2751
    %3364 = vmatpush1.bf16.msra.mxu0 %v2750
    %3365 = vmatprep.subr.bf16.mxu0 %v2753
    %3366 = vmatpush1.bf16.msra.mxu0 %v2752
    %3367 = vmatprep.subr.bf16.mxu0 %v2755
    %3368 = vmatpush1.bf16.msra.mxu0 %v2754
    %3369 = vmatprep.subr.bf16.mxu0 0
    %3370 = vmatpush1.bf16.msra.mxu0 0
    %3371 = vmatprep.subr.bf16.mxu0 0
    %3372 = vmatpush1.bf16.msra.mxu0 0
    %3373 = vmatprep.subr.bf16.mxu0 0
    %3374 = vmatpush1.bf16.msra.mxu0 0
    %3375 = vmatprep.subr.bf16.mxu0 0
    %3376 = vmatpush1.bf16.msra.mxu0 0
    %3377 = vmatprep.subr.bf16.mxu0 0
    %3378 = vmatpush1.bf16.msra.mxu0 0
    %3379 = vmatprep.subr.bf16.mxu0 0
    %3380 = vmatpush1.bf16.msra.mxu0 0
    %3381 = vmatprep.subr.bf16.mxu0 0
    %3382 = vmatpush1.bf16.msra.mxu0 0
    %3383 = vmatprep.subr.bf16.mxu0 0
    %3384 = vmatpush1.bf16.msra.mxu0 0
    %3385 = vmatprep.subr.bf16.mxu0 0
    %3386 = vmatpush1.bf16.msra.mxu0 0
    %3387 = vmatprep.subr.bf16.mxu0 0
    %3388 = vmatpush1.bf16.msra.mxu0 0
    %3389 = vmatprep.subr.bf16.mxu0 0
    %3390 = vmatpush1.bf16.msra.mxu0 0
    %3391 = vmatprep.subr.bf16.mxu0 0
    %3392 = vmatpush1.bf16.msra.mxu0 0
    %3393 = vmatprep.mubr.bf16.mxu0 0
    %3394 = vmatmul.mubr.bf16.gmra.mrb[0].mxu0 %v3359
    %v3395 = vpop.f32.mrb[0].mxu0
    %v3396 = vadd.f32 0.0, %v3395
    %v3397 = vpop.f32.mrb[0].mxu0
    %v3398 = vadd.f32 0.0, %v3397
    %v3399 = vpop.f32.mrb[0].mxu0
    %v3400 = vpop.f32.mrb[0].mxu0
    %3401 = vdwg.mxu0
    %v3404 = vrot.slane %v3396, 2
    %v3405 = vrot.slane %v3398, 2
    %v3408 = vadd.f32 %v2722, %v3404
    %v3409 = vadd.f32 %v2723, %v3405
    %v3410 = vxor.u32 %v3408, 2147483648
    %v3411 = vxor.u32 %v3409, 2147483648
    %v3412 = vmul.f32 %v3410, 1.442695
    %v3413 = vpow.pop %v3412
    %v3414 = vmul.f32 %v3411, 1.442695
    %v3415 = vpow.pop %v3414
    %v3416 = vadd.f32 %v3413, 1.0
    %v3417 = vadd.f32 %v3415, 1.0
    %v3418 = vrcp.pop %v3416
    %v3419 = vmul.f32 1.0, %v3418
    %v3420 = vrcp.pop %v3417
    %v3421 = vmul.f32 1.0, %v3420
    %v3422 = vtanh.pop %v3409
    %v3424 = vrot.slane %v3348, 6
    %v3426 = vmul.f32 %v3419, %v3424
    %3428 = vrot.lane.b32.xlu0 %v3422, 64
    %v3429 = vpop.permute.xlu0 %3428
    %v3431 = vmul.f32 %v3419, %v3429
    %3433 = vrot.lane.b32.xlu0 %v3431, 64
    %v3434 = vpop.permute.xlu0 %3433
    %v3436 = vadd.f32 %v3426, %v3434
    %v3437 = vtanh.pop %v3436
    %3439 = vrot.lane.b32.xlu0 %v3437, 64
    %v3440 = vpop.permute.xlu0 %3439
    %v3442 = vmul.f32 %v3421, %v3440
    %v3443 = vsel %vm2429, %v2836, %v2922
    %v3444 = vsel %vm2431, %v3443, %v3010
    %v3445 = vsel %vm2433, %v3444, %v3098
    %v3446 = vsel %vm2429, %v3180, %v3266
    %v3447 = vsel %vm2431, %v3446, %v3354
    %v3448 = vsel %vm2433, %v3447, %v3442
    %v3449 = vmul.f32 %v1676, %v3445
    %v3450 = vmul.f32 %v1676, %v3448
    %3451 = vmatprep.subr.mxu0 0.0
    %3452 = vmatpush1.msra.mxu0 %v3445
    %3453 = vmatprep.subr.mxu0 0.0
    %3454 = vmatpush1.msra.mxu0 %v3448
    %3455 = vmatprep.subr.mxu0 0.0
    %3456 = vmatpush1.msra.mxu0 0.0
    %3457 = vmatprep.subr.mxu0 0.0
    %3458 = vmatpush1.msra.mxu0 0.0
    %3459 = vmatprep.subr.mxu0 0.0
    %3460 = vmatpush1.msra.mxu0 0.0
    %3461 = vmatprep.subr.mxu0 0.0
    %3462 = vmatpush1.msra.mxu0 0.0
    %3463 = vmatprep.subr.mxu0 0.0
    %3464 = vmatpush1.msra.mxu0 0.0
    %3465 = vmatprep.subr.mxu0 0.0
    %3466 = vmatpush1.msra.mxu0 0.0
    %3467 = vmatprep.subr.mxu0 0.0
    %3468 = vmatpush1.msra.mxu0 0.0
    %3469 = vmatprep.subr.mxu0 0.0
    %3470 = vmatpush1.msra.mxu0 0.0
    %3471 = vmatprep.subr.mxu0 0.0
    %3472 = vmatpush1.msra.mxu0 0.0
    %3473 = vmatprep.subr.mxu0 0.0
    %3474 = vmatpush1.msra.mxu0 0.0
    %3475 = vmatprep.subr.mxu0 0.0
    %3476 = vmatpush1.msra.mxu0 0.0
    %3477 = vmatprep.subr.mxu0 0.0
    %3478 = vmatpush1.msra.mxu0 0.0
    %3479 = vmatprep.subr.mxu0 0.0
    %3480 = vmatpush1.msra.mxu0 0.0
    %3481 = vmatprep.subr.mxu0 0.0
    %3482 = vmatpush1.msra.mxu0 0.0
    %3483 = vmatprep.subr.mxu0 0.0
    %3484 = vmatpush1.msra.mxu0 0.0
    %3485 = vmatprep.subr.mxu0 0.0
    %3486 = vmatpush1.msra.mxu0 0.0
    %3487 = vmatprep.subr.mxu0 0.0
    %3488 = vmatpush1.msra.mxu0 0.0
    %3489 = vmatprep.subr.mxu0 0.0
    %3490 = vmatpush1.msra.mxu0 0.0
    %3491 = vmatprep.subr.mxu0 0.0
    %3492 = vmatpush1.msra.mxu0 0.0
    %3493 = vmatprep.subr.mxu0 0.0
    %3494 = vmatpush1.msra.mxu0 0.0
    %3495 = vmatprep.subr.mxu0 0.0
    %3496 = vmatpush1.msra.mxu0 0.0
    %3497 = vmatprep.subr.mxu0 0.0
    %3498 = vmatpush1.msra.mxu0 0.0
    %3499 = vmatprep.subr.mxu0 0.0
    %3500 = vmatpush1.msra.mxu0 0.0
    %3501 = vmatprep.subr.mxu0 0.0
    %3502 = vmatpush1.msra.mxu0 0.0
    %3503 = vmatprep.subr.mxu0 0.0
    %3504 = vmatpush1.msra.mxu0 0.0
    %3505 = vmatprep.subr.mxu0 0.0
    %3506 = vmatpush1.msra.mxu0 0.0
    %3507 = vmatprep.subr.mxu0 0.0
    %3508 = vmatpush1.msra.mxu0 0.0
    %3509 = vmatprep.subr.mxu0 0.0
    %3510 = vmatpush1.msra.mxu0 0.0
    %3511 = vmatprep.subr.mxu0 0.0
    %3512 = vmatpush1.msra.mxu0 0.0
    %3513 = vmatprep.subr.mxu0 0.0
    %3514 = vmatpush1.msra.mxu0 0.0
    %3515 = vmatprep.mubr.f32.mxu0 0.0
    %3516 = vmatmul.mubr.f32.gmra.mrb[0].mxu0 %v1591
    %v3517 = vpop.f32.mrb[0].mxu0
    %v3518 = vadd.f32 0.0, %v3517
    %v3519 = vpop.f32.mrb[0].mxu0
    %3520 = vmatprep.mubr.f32.mxu0 0.0
    %3521 = vmatmul.mubr.f32.gmra.mrb[0].mxu0 %v1593
    %v3522 = vpop.f32.mrb[0].mxu0
    %v3523 = vadd.f32 0.0, %v3522
    %v3524 = vpop.f32.mrb[0].mxu0
    %3525 = vdwg.mxu0
    %v3526 = vmul.f32 %v1692, %v3518
    %v3527 = vmul.f32 %v1692, %v3523
    %v3528 = vadd.f32 %v3449, %v3526
    %v3529 = vadd.f32 %v3450, %v3527
    %v3530 = vld [vmem:[#allocation2 + $0x310] sm:$0xff]
    %v3531 = vld [vmem:[#allocation2 + $0x318] sm:$0xff]
    %v3532 = vld [vmem:[#allocation2 + $0x320] sm:$0xff]
    %v3533 = vld [vmem:[#allocation2 + $0x328] sm:$0xff]
    %v3534 = vld [vmem:[#allocation2 + $0x330] sm:$0xff]
    %v3535 = vld [vmem:[#allocation2 + $0x338] sm:$0xff]
    %v3536 = vld [vmem:[#allocation2 + $0x340] sm:$0xff]
    %v3537 = vld [vmem:[#allocation2 + $0x348] sm:$0xff]
    %v3538 = vld [vmem:[#allocation2 + $0x350] sm:$0xff]
    %v3539 = vld [vmem:[#allocation2 + $0x358] sm:$0xff]
    %v3540 = vld [vmem:[#allocation2 + $0x360] sm:$0xff]
    %v3541 = vld [vmem:[#allocation2 + $0x368] sm:$0xff]
    %v3542 = vld [vmem:[#allocation2 + $0x370] sm:$0xff]
    %v3543 = vld [vmem:[#allocation2 + $0x378] sm:$0xff]
    %v3544 = vld [vmem:[#allocation2 + $0x380] sm:$0xff]
    %v3545 = vld [vmem:[#allocation2 + $0x388] sm:$0xff]
    %v3546 = vpack.c.bf16 %v3529, %v3528
    %s3547 = scalar_lea.vmem [#allocation4], 66
    %v3548 = vld [vmem:[%s3547] ss:$8 sm:$0x3]
    %v3550 = vlaneseq
    %v3551 = vshrl.u32 %v3550, 7
    %v3552 = vsub.s32 0, %v3551
    %v3553 = vrot.slane %v3548, %v3552
    %v3554 = vlaneseq
    %v3555 = vshrl.u32 %v3554, 7
    %v3556 = vsub.s32 1, %v3555
    %v3557 = vrot.slane %v3548, %v3556
    %v3568 = vunpack.c.l.b16 %v3530
    %v3569 = vunpack.c.h.b16 %v3530
    %v3570 = vunpack.c.l.b16 %v3531
    %v3571 = vunpack.c.h.b16 %v3531
    %v3572 = vunpack.c.l.b16 %v3532
    %v3573 = vunpack.c.h.b16 %v3532
    %v3574 = vunpack.c.l.b16 %v3533
    %v3575 = vunpack.c.h.b16 %v3533
    %v3576 = vunpack.c.l.b16 %v3534
    %v3577 = vunpack.c.h.b16 %v3534
    %v3578 = vunpack.c.l.b16 %v3535
    %v3579 = vunpack.c.h.b16 %v3535
    %v3580 = vunpack.c.l.b16 %v3536
    %v3581 = vunpack.c.h.b16 %v3536
    %v3582 = vunpack.c.l.b16 %v3537
    %v3583 = vunpack.c.h.b16 %v3537
    %v3584 = vpack.c.b16 %v3570, %v3568
    %v3585 = vpack.c.b16 %v3571, %v3569
    %v3586 = vpack.c.b16 %v3574, %v3572
    %v3587 = vpack.c.b16 %v3575, %v3573
    %v3588 = vpack.c.b16 %v3578, %v3576
    %v3589 = vpack.c.b16 %v3579, %v3577
    %v3590 = vpack.c.b16 %v3582, %v3580
    %v3591 = vpack.c.b16 %v3583, %v3581
    %v3601 = vsel %vm173, %v3546, 0
    %3603 = vmatprep.subr.bf16.mxu0 %v3585
    %3604 = vmatpush1.bf16.msra.mxu0 %v3584
    %3605 = vmatprep.subr.bf16.mxu0 %v3587
    %3606 = vmatpush1.bf16.msra.mxu0 %v3586
    %3607 = vmatprep.subr.bf16.mxu0 %v3589
    %3608 = vmatpush1.bf16.msra.mxu0 %v3588
    %3609 = vmatprep.subr.bf16.mxu0 %v3591
    %3610 = vmatpush1.bf16.msra.mxu0 %v3590
    %3611 = vmatprep.subr.bf16.mxu0 0
    %3612 = vmatpush1.bf16.msra.mxu0 0
    %3613 = vmatprep.subr.bf16.mxu0 0
    %3614 = vmatpush1.bf16.msra.mxu0 0
    %3615 = vmatprep.subr.bf16.mxu0 0
    %3616 = vmatpush1.bf16.msra.mxu0 0
    %3617 = vmatprep.subr.bf16.mxu0 0
    %3618 = vmatpush1.bf16.msra.mxu0 0
    %3619 = vmatprep.subr.bf16.mxu0 0
    %3620 = vmatpush1.bf16.msra.mxu0 0
    %3621 = vmatprep.subr.bf16.mxu0 0
    %3622 = vmatpush1.bf16.msra.mxu0 0
    %3623 = vmatprep.subr.bf16.mxu0 0
    %3624 = vmatpush1.bf16.msra.mxu0 0
    %3625 = vmatprep.subr.bf16.mxu0 0
    %3626 = vmatpush1.bf16.msra.mxu0 0
    %3627 = vmatprep.subr.bf16.mxu0 0
    %3628 = vmatpush1.bf16.msra.mxu0 0
    %3629 = vmatprep.subr.bf16.mxu0 0
    %3630 = vmatpush1.bf16.msra.mxu0 0
    %3631 = vmatprep.subr.bf16.mxu0 0
    %3632 = vmatpush1.bf16.msra.mxu0 0
    %3633 = vmatprep.subr.bf16.mxu0 0
    %3634 = vmatpush1.bf16.msra.mxu0 0
    %3635 = vmatprep.mubr.bf16.mxu0 0
    %3636 = vmatmul.mubr.bf16.gmra.mrb[0].mxu0 %v3601
    %v3637 = vpop.f32.mrb[0].mxu0
    %v3638 = vadd.f32 %v3553, %v3637
    %v3639 = vpop.f32.mrb[0].mxu0
    %v3640 = vadd.f32 %v3557, %v3639
    %v3641 = vpop.f32.mrb[0].mxu0
    %v3642 = vadd.f32 %v3553, %v3641
    %v3643 = vpop.f32.mrb[0].mxu0
    %v3644 = vadd.f32 %v3557, %v3643
    %3645 = vdwg.mxu0
    %3646 = vmatprep.subr.mxu0 %v3640
    %3647 = vmatpush1.msra.mxu0 %v3638
    %3648 = vmatprep.subr.mxu0 %v3644
    %3649 = vmatpush1.msra.mxu0 %v3642
    %3650 = vmatprep.subr.mxu0 0.0
    %3651 = vmatpush1.msra.mxu0 0.0
    %3652 = vmatprep.subr.mxu0 0.0
    %3653 = vmatpush1.msra.mxu0 0.0
    %3654 = vmatprep.subr.mxu0 0.0
    %3655 = vmatpush1.msra.mxu0 0.0
    %3656 = vmatprep.subr.mxu0 0.0
    %3657 = vmatpush1.msra.mxu0 0.0
    %3658 = vmatprep.subr.mxu0 0.0
    %3659 = vmatpush1.msra.mxu0 0.0
    %3660 = vmatprep.subr.mxu0 0.0
    %3661 = vmatpush1.msra.mxu0 0.0
    %3662 = vmatprep.subr.mxu0 0.0
    %3663 = vmatpush1.msra.mxu0 0.0
    %3664 = vmatprep.subr.mxu0 0.0
    %3665 = vmatpush1.msra.mxu0 0.0
    %3666 = vmatprep.subr.mxu0 0.0
    %3667 = vmatpush1.msra.mxu0 0.0
    %3668 = vmatprep.subr.mxu0 0.0
    %3669 = vmatpush1.msra.mxu0 0.0
    %3670 = vmatprep.subr.mxu0 0.0
    %3671 = vmatpush1.msra.mxu0 0.0
    %3672 = vmatprep.subr.mxu0 0.0
    %3673 = vmatpush1.msra.mxu0 0.0
    %3674 = vmatprep.subr.mxu0 0.0
    %3675 = vmatpush1.msra.mxu0 0.0
    %3676 = vmatprep.subr.mxu0 0.0
    %3677 = vmatpush1.msra.mxu0 0.0
    %3678 = vmatprep.subr.mxu0 0.0
    %3679 = vmatpush1.msra.mxu0 0.0
    %3680 = vmatprep.subr.mxu0 0.0
    %3681 = vmatpush1.msra.mxu0 0.0
    %3682 = vmatprep.subr.mxu0 0.0
    %3683 = vmatpush1.msra.mxu0 0.0
    %3684 = vmatprep.subr.mxu0 0.0
    %3685 = vmatpush1.msra.mxu0 0.0
    %3686 = vmatprep.subr.mxu0 0.0
    %3687 = vmatpush1.msra.mxu0 0.0
    %3688 = vmatprep.subr.mxu0 0.0
    %3689 = vmatpush1.msra.mxu0 0.0
    %3690 = vmatprep.subr.mxu0 0.0
    %3691 = vmatpush1.msra.mxu0 0.0
    %3692 = vmatprep.subr.mxu0 0.0
    %3693 = vmatpush1.msra.mxu0 0.0
    %3694 = vmatprep.subr.mxu0 0.0
    %3695 = vmatpush1.msra.mxu0 0.0
    %3696 = vmatprep.subr.mxu0 0.0
    %3697 = vmatpush1.msra.mxu0 0.0
    %3698 = vmatprep.subr.mxu0 0.0
    %3699 = vmatpush1.msra.mxu0 0.0
    %3700 = vmatprep.subr.mxu0 0.0
    %3701 = vmatpush1.msra.mxu0 0.0
    %3702 = vmatprep.subr.mxu0 0.0
    %3703 = vmatpush1.msra.mxu0 0.0
    %3704 = vmatprep.subr.mxu0 0.0
    %3705 = vmatpush1.msra.mxu0 0.0
    %3706 = vmatprep.subr.mxu0 0.0
    %3707 = vmatpush1.msra.mxu0 0.0
    %3708 = vmatprep.subr.mxu0 0.0
    %3709 = vmatpush1.msra.mxu0 0.0
    %3710 = vmatprep.mubr.f32.mxu0 0.0
    %3711 = vmatmul.mubr.f32.gmra.mrb[0].mxu0 %v1591
    %v3712 = vpop.f32.mrb[0].mxu0
    %v3713 = vadd.f32 0.0, %v3712
    %v3714 = vpop.f32.mrb[0].mxu0
    %v3715 = vadd.f32 0.0, %v3714
    %3716 = vmatprep.mubr.f32.mxu0 0.0
    %3717 = vmatmul.mubr.f32.gmra.mrb[0].mxu0 %v1593
    %v3718 = vpop.f32.mrb[0].mxu0
    %v3719 = vadd.f32 0.0, %v3718
    %v3720 = vpop.f32.mrb[0].mxu0
    %v3721 = vadd.f32 0.0, %v3720
    %3722 = vdwg.mxu0
    %v3723 = vmul.f32 %v1676, %v3638
    %v3724 = vmul.f32 %v1680, %v3640
    %v3725 = vmul.f32 %v1676, %v3642
    %v3726 = vmul.f32 %v1680, %v3644
    %v3727 = vmul.f32 %v1692, %v3713
    %v3728 = vmul.f32 %v1696, %v3715
    %v3729 = vmul.f32 %v1692, %v3719
    %v3730 = vmul.f32 %v1696, %v3721
    %v3731 = vadd.f32 %v3723, %v3727
    %v3732 = vadd.f32 %v3724, %v3728
    %v3733 = vadd.f32 %v3725, %v3729
    %v3734 = vadd.f32 %v3726, %v3730
    %v3743 = vunpack.c.l.b16 %v3538
    %v3744 = vunpack.c.h.b16 %v3538
    %v3745 = vunpack.c.l.b16 %v3539
    %v3746 = vunpack.c.h.b16 %v3539
    %v3747 = vunpack.c.l.b16 %v3540
    %v3748 = vunpack.c.h.b16 %v3540
    %v3749 = vunpack.c.l.b16 %v3541
    %v3750 = vunpack.c.h.b16 %v3541
    %v3751 = vunpack.c.l.b16 %v3542
    %v3752 = vunpack.c.h.b16 %v3542
    %v3753 = vunpack.c.l.b16 %v3543
    %v3754 = vunpack.c.h.b16 %v3543
    %v3755 = vunpack.c.l.b16 %v3544
    %v3756 = vunpack.c.h.b16 %v3544
    %v3757 = vunpack.c.l.b16 %v3545
    %v3758 = vunpack.c.h.b16 %v3545
    %v3759 = vpack.c.b16 %v3745, %v3743
    %v3760 = vpack.c.b16 %v3746, %v3744
    %v3761 = vpack.c.b16 %v3749, %v3747
    %v3762 = vpack.c.b16 %v3750, %v3748
    %v3763 = vpack.c.b16 %v3753, %v3751
    %v3764 = vpack.c.b16 %v3754, %v3752
    %v3765 = vpack.c.b16 %v3757, %v3755
    %v3766 = vpack.c.b16 %v3758, %v3756
    %3775 = vmatprep.subr.bf16.mxu0 %v3760
    %3776 = vmatpush1.bf16.msra.mxu0 %v3759
    %3777 = vmatprep.subr.bf16.mxu0 %v3762
    %3778 = vmatpush1.bf16.msra.mxu0 %v3761
    %3779 = vmatprep.subr.bf16.mxu0 %v3764
    %3780 = vmatpush1.bf16.msra.mxu0 %v3763
    %3781 = vmatprep.subr.bf16.mxu0 %v3766
    %3782 = vmatpush1.bf16.msra.mxu0 %v3765
    %3783 = vmatprep.subr.bf16.mxu0 0
    %3784 = vmatpush1.bf16.msra.mxu0 0
    %3785 = vmatprep.subr.bf16.mxu0 0
    %3786 = vmatpush1.bf16.msra.mxu0 0
    %3787 = vmatprep.subr.bf16.mxu0 0
    %3788 = vmatpush1.bf16.msra.mxu0 0
    %3789 = vmatprep.subr.bf16.mxu0 0
    %3790 = vmatpush1.bf16.msra.mxu0 0
    %3791 = vmatprep.subr.bf16.mxu0 0
    %3792 = vmatpush1.bf16.msra.mxu0 0
    %3793 = vmatprep.subr.bf16.mxu0 0
    %3794 = vmatpush1.bf16.msra.mxu0 0
    %3795 = vmatprep.subr.bf16.mxu0 0
    %3796 = vmatpush1.bf16.msra.mxu0 0
    %3797 = vmatprep.subr.bf16.mxu0 0
    %3798 = vmatpush1.bf16.msra.mxu0 0
    %3799 = vmatprep.subr.bf16.mxu0 0
    %3800 = vmatpush1.bf16.msra.mxu0 0
    %3801 = vmatprep.subr.bf16.mxu0 0
    %3802 = vmatpush1.bf16.msra.mxu0 0
    %3803 = vmatprep.subr.bf16.mxu0 0
    %3804 = vmatpush1.bf16.msra.mxu0 0
    %3805 = vmatprep.subr.bf16.mxu0 0
    %3806 = vmatpush1.bf16.msra.mxu0 0
    %3807 = vmatprep.mubr.bf16.mxu0 0
    %3808 = vmatmul.mubr.bf16.gmra.mrb[0].mxu0 %v1748
    %v3809 = vpop.f32.mrb[0].mxu0
    %v3810 = vadd.f32 0.0, %v3809
    %v3811 = vpop.f32.mrb[0].mxu0
    %v3812 = vadd.f32 0.0, %v3811
    %v3813 = vpop.f32.mrb[0].mxu0
    %v3814 = vpop.f32.mrb[0].mxu0
    %3815 = vdwg.mxu0
    %v3816 = vadd.f32 %v3731, %v3810
    %v3817 = vadd.f32 %v3732, %v3812
    %v3818 = vxor.u32 %v3816, 2147483648
    %v3819 = vxor.u32 %v3817, 2147483648
    %v3820 = vmul.f32 %v3818, 1.442695
    %v3821 = vpow.pop %v3820
    %v3822 = vmul.f32 %v3819, 1.442695
    %v3823 = vpow.pop %v3822
    %v3824 = vadd.f32 %v3821, 1.0
    %v3825 = vadd.f32 %v3823, 1.0
    %v3826 = vrcp.pop %v3824
    %v3827 = vmul.f32 1.0, %v3826
    %v3828 = vrcp.pop %v3825
    %v3829 = vmul.f32 1.0, %v3828
    %v3830 = vtanh.pop %v3817
    %v3831 = vmul.f32 %v3827, 0.0
    %3833 = vrot.lane.b32.xlu0 %v3830, 64
    %v3834 = vpop.permute.xlu0 %3833
    %v3836 = vmul.f32 %v3827, %v3834
    %3838 = vrot.lane.b32.xlu0 %v3836, 64
    %v3839 = vpop.permute.xlu0 %3838
    %v3841 = vadd.f32 %v3831, %v3839
    %v3842 = vtanh.pop %v3841
    %3844 = vrot.lane.b32.xlu0 %v3842, 64
    %v3845 = vpop.permute.xlu0 %3844
    %v3847 = vmul.f32 %v3829, %v3845
    %v3848 = vpack.c.bf16 %v3847, %v3847
    %v3850 = vsel %vm173, %v3848, 0
    %3852 = vmatprep.subr.bf16.mxu0 %v3760
    %3853 = vmatpush1.bf16.msra.mxu0 %v3759
    %3854 = vmatprep.subr.bf16.mxu0 %v3762
    %3855 = vmatpush1.bf16.msra.mxu0 %v3761
    %3856 = vmatprep.subr.bf16.mxu0 %v3764
    %3857 = vmatpush1.bf16.msra.mxu0 %v3763
    %3858 = vmatprep.subr.bf16.mxu0 %v3766
    %3859 = vmatpush1.bf16.msra.mxu0 %v3765
    %3860 = vmatprep.subr.bf16.mxu0 0
    %3861 = vmatpush1.bf16.msra.mxu0 0
    %3862 = vmatprep.subr.bf16.mxu0 0
    %3863 = vmatpush1.bf16.msra.mxu0 0
    %3864 = vmatprep.subr.bf16.mxu0 0
    %3865 = vmatpush1.bf16.msra.mxu0 0
    %3866 = vmatprep.subr.bf16.mxu0 0
    %3867 = vmatpush1.bf16.msra.mxu0 0
    %3868 = vmatprep.subr.bf16.mxu0 0
    %3869 = vmatpush1.bf16.msra.mxu0 0
    %3870 = vmatprep.subr.bf16.mxu0 0
    %3871 = vmatpush1.bf16.msra.mxu0 0
    %3872 = vmatprep.subr.bf16.mxu0 0
    %3873 = vmatpush1.bf16.msra.mxu0 0
    %3874 = vmatprep.subr.bf16.mxu0 0
    %3875 = vmatpush1.bf16.msra.mxu0 0
    %3876 = vmatprep.subr.bf16.mxu0 0
    %3877 = vmatpush1.bf16.msra.mxu0 0
    %3878 = vmatprep.subr.bf16.mxu0 0
    %3879 = vmatpush1.bf16.msra.mxu0 0
    %3880 = vmatprep.subr.bf16.mxu0 0
    %3881 = vmatpush1.bf16.msra.mxu0 0
    %3882 = vmatprep.subr.bf16.mxu0 0
    %3883 = vmatpush1.bf16.msra.mxu0 0
    %3884 = vmatprep.mubr.bf16.mxu0 0
    %3885 = vmatmul.mubr.bf16.gmra.mrb[0].mxu0 %v3850
    %v3886 = vpop.f32.mrb[0].mxu0
    %v3887 = vadd.f32 0.0, %v3886
    %v3888 = vpop.f32.mrb[0].mxu0
    %v3889 = vadd.f32 0.0, %v3888
    %v3890 = vpop.f32.mrb[0].mxu0
    %v3891 = vpop.f32.mrb[0].mxu0
    %3892 = vdwg.mxu0
    %v3895 = vrot.slane %v3887, 6
    %v3896 = vrot.slane %v3889, 6
    %v3899 = vadd.f32 %v3731, %v3895
    %v3900 = vadd.f32 %v3732, %v3896
    %v3901 = vxor.u32 %v3899, 2147483648
    %v3902 = vxor.u32 %v3900, 2147483648
    %v3903 = vmul.f32 %v3901, 1.442695
    %v3904 = vpow.pop %v3903
    %v3905 = vmul.f32 %v3902, 1.442695
    %v3906 = vpow.pop %v3905
    %v3907 = vadd.f32 %v3904, 1.0
    %v3908 = vadd.f32 %v3906, 1.0
    %v3909 = vrcp.pop %v3907
    %v3910 = vmul.f32 1.0, %v3909
    %v3911 = vrcp.pop %v3908
    %v3912 = vmul.f32 1.0, %v3911
    %v3913 = vtanh.pop %v3900
    %v3915 = vrot.slane %v3841, 6
    %v3917 = vmul.f32 %v3910, %v3915
    %3919 = vrot.lane.b32.xlu0 %v3913, 64
    %v3920 = vpop.permute.xlu0 %3919
    %v3922 = vmul.f32 %v3910, %v3920
    %3924 = vrot.lane.b32.xlu0 %v3922, 64
    %v3925 = vpop.permute.xlu0 %3924
    %v3927 = vadd.f32 %v3917, %v3925
    %v3928 = vtanh.pop %v3927
    %3930 = vrot.lane.b32.xlu0 %v3928, 64
    %v3931 = vpop.permute.xlu0 %3930
    %v3933 = vmul.f32 %v3912, %v3931
    %v3934 = vpack.c.bf16 %v3933, %v3933
    %v3936 = vrot.slane %v3934, 1
    %v3938 = vsel %vm173, %v3936, 0
    %3940 = vmatprep.subr.bf16.mxu0 %v3760
    %3941 = vmatpush1.bf16.msra.mxu0 %v3759
    %3942 = vmatprep.subr.bf16.mxu0 %v3762
    %3943 = vmatpush1.bf16.msra.mxu0 %v3761
    %3944 = vmatprep.subr.bf16.mxu0 %v3764
    %3945 = vmatpush1.bf16.msra.mxu0 %v3763
    %3946 = vmatprep.subr.bf16.mxu0 %v3766
    %3947 = vmatpush1.bf16.msra.mxu0 %v3765
    %3948 = vmatprep.subr.bf16.mxu0 0
    %3949 = vmatpush1.bf16.msra.mxu0 0
    %3950 = vmatprep.subr.bf16.mxu0 0
    %3951 = vmatpush1.bf16.msra.mxu0 0
    %3952 = vmatprep.subr.bf16.mxu0 0
    %3953 = vmatpush1.bf16.msra.mxu0 0
    %3954 = vmatprep.subr.bf16.mxu0 0
    %3955 = vmatpush1.bf16.msra.mxu0 0
    %3956 = vmatprep.subr.bf16.mxu0 0
    %3957 = vmatpush1.bf16.msra.mxu0 0
    %3958 = vmatprep.subr.bf16.mxu0 0
    %3959 = vmatpush1.bf16.msra.mxu0 0
    %3960 = vmatprep.subr.bf16.mxu0 0
    %3961 = vmatpush1.bf16.msra.mxu0 0
    %3962 = vmatprep.subr.bf16.mxu0 0
    %3963 = vmatpush1.bf16.msra.mxu0 0
    %3964 = vmatprep.subr.bf16.mxu0 0
    %3965 = vmatpush1.bf16.msra.mxu0 0
    %3966 = vmatprep.subr.bf16.mxu0 0
    %3967 = vmatpush1.bf16.msra.mxu0 0
    %3968 = vmatprep.subr.bf16.mxu0 0
    %3969 = vmatpush1.bf16.msra.mxu0 0
    %3970 = vmatprep.subr.bf16.mxu0 0
    %3971 = vmatpush1.bf16.msra.mxu0 0
    %3972 = vmatprep.mubr.bf16.mxu0 0
    %3973 = vmatmul.mubr.bf16.gmra.mrb[0].mxu0 %v3938
    %v3974 = vpop.f32.mrb[0].mxu0
    %v3975 = vadd.f32 0.0, %v3974
    %v3976 = vpop.f32.mrb[0].mxu0
    %v3977 = vadd.f32 0.0, %v3976
    %v3978 = vpop.f32.mrb[0].mxu0
    %v3979 = vpop.f32.mrb[0].mxu0
    %3980 = vdwg.mxu0
    %v3983 = vrot.slane %v3975, 4
    %v3984 = vrot.slane %v3977, 4
    %v3987 = vadd.f32 %v3731, %v3983
    %v3988 = vadd.f32 %v3732, %v3984
    %v3989 = vxor.u32 %v3987, 2147483648
    %v3990 = vxor.u32 %v3988, 2147483648
    %v3991 = vmul.f32 %v3989, 1.442695
    %v3992 = vpow.pop %v3991
    %v3993 = vmul.f32 %v3990, 1.442695
    %v3994 = vpow.pop %v3993
    %v3995 = vadd.f32 %v3992, 1.0
    %v3996 = vadd.f32 %v3994, 1.0
    %v3997 = vrcp.pop %v3995
    %v3998 = vmul.f32 1.0, %v3997
    %v3999 = vrcp.pop %v3996
    %v4000 = vmul.f32 1.0, %v3999
    %v4001 = vtanh.pop %v3988
    %v4003 = vrot.slane %v3927, 6
    %v4005 = vmul.f32 %v3998, %v4003
    %4007 = vrot.lane.b32.xlu0 %v4001, 64
    %v4008 = vpop.permute.xlu0 %4007
    %v4010 = vmul.f32 %v3998, %v4008
    %4012 = vrot.lane.b32.xlu0 %v4010, 64
    %v4013 = vpop.permute.xlu0 %4012
    %v4015 = vadd.f32 %v4005, %v4013
    %v4016 = vtanh.pop %v4015
    %4018 = vrot.lane.b32.xlu0 %v4016, 64
    %v4019 = vpop.permute.xlu0 %4018
    %v4021 = vmul.f32 %v4000, %v4019
    %v4022 = vpack.c.bf16 %v4021, %v4021
    %v4024 = vrot.slane %v4022, 2
    %v4026 = vsel %vm173, %v4024, 0
    %4028 = vmatprep.subr.bf16.mxu0 %v3760
    %4029 = vmatpush1.bf16.msra.mxu0 %v3759
    %4030 = vmatprep.subr.bf16.mxu0 %v3762
    %4031 = vmatpush1.bf16.msra.mxu0 %v3761
    %4032 = vmatprep.subr.bf16.mxu0 %v3764
    %4033 = vmatpush1.bf16.msra.mxu0 %v3763
    %4034 = vmatprep.subr.bf16.mxu0 %v3766
    %4035 = vmatpush1.bf16.msra.mxu0 %v3765
    %4036 = vmatprep.subr.bf16.mxu0 0
    %4037 = vmatpush1.bf16.msra.mxu0 0
    %4038 = vmatprep.subr.bf16.mxu0 0
    %4039 = vmatpush1.bf16.msra.mxu0 0
    %4040 = vmatprep.subr.bf16.mxu0 0
    %4041 = vmatpush1.bf16.msra.mxu0 0
    %4042 = vmatprep.subr.bf16.mxu0 0
    %4043 = vmatpush1.bf16.msra.mxu0 0
    %4044 = vmatprep.subr.bf16.mxu0 0
    %4045 = vmatpush1.bf16.msra.mxu0 0
    %4046 = vmatprep.subr.bf16.mxu0 0
    %4047 = vmatpush1.bf16.msra.mxu0 0
    %4048 = vmatprep.subr.bf16.mxu0 0
    %4049 = vmatpush1.bf16.msra.mxu0 0
    %4050 = vmatprep.subr.bf16.mxu0 0
    %4051 = vmatpush1.bf16.msra.mxu0 0
    %4052 = vmatprep.subr.bf16.mxu0 0
    %4053 = vmatpush1.bf16.msra.mxu0 0
    %4054 = vmatprep.subr.bf16.mxu0 0
    %4055 = vmatpush1.bf16.msra.mxu0 0
    %4056 = vmatprep.subr.bf16.mxu0 0
    %4057 = vmatpush1.bf16.msra.mxu0 0
    %4058 = vmatprep.subr.bf16.mxu0 0
    %4059 = vmatpush1.bf16.msra.mxu0 0
    %4060 = vmatprep.mubr.bf16.mxu0 0
    %4061 = vmatmul.mubr.bf16.gmra.mrb[0].mxu0 %v4026
    %v4062 = vpop.f32.mrb[0].mxu0
    %v4063 = vadd.f32 0.0, %v4062
    %v4064 = vpop.f32.mrb[0].mxu0
    %v4065 = vadd.f32 0.0, %v4064
    %v4066 = vpop.f32.mrb[0].mxu0
    %v4067 = vpop.f32.mrb[0].mxu0
    %4068 = vdwg.mxu0
    %v4071 = vrot.slane %v4063, 2
    %v4072 = vrot.slane %v4065, 2
    %v4075 = vadd.f32 %v3731, %v4071
    %v4076 = vadd.f32 %v3732, %v4072
    %v4077 = vxor.u32 %v4075, 2147483648
    %v4078 = vxor.u32 %v4076, 2147483648
    %v4079 = vmul.f32 %v4077, 1.442695
    %v4080 = vpow.pop %v4079
    %v4081 = vmul.f32 %v4078, 1.442695
    %v4082 = vpow.pop %v4081
    %v4083 = vadd.f32 %v4080, 1.0
    %v4084 = vadd.f32 %v4082, 1.0
    %v4085 = vrcp.pop %v4083
    %v4086 = vmul.f32 1.0, %v4085
    %v4087 = vrcp.pop %v4084
    %v4088 = vmul.f32 1.0, %v4087
    %v4089 = vtanh.pop %v4076
    %v4091 = vrot.slane %v4015, 6
    %v4093 = vmul.f32 %v4086, %v4091
    %4095 = vrot.lane.b32.xlu0 %v4089, 64
    %v4096 = vpop.permute.xlu0 %4095
    %v4098 = vmul.f32 %v4086, %v4096
    %4100 = vrot.lane.b32.xlu0 %v4098, 64
    %v4101 = vpop.permute.xlu0 %4100
    %v4103 = vadd.f32 %v4093, %v4101
    %v4104 = vtanh.pop %v4103
    %4106 = vrot.lane.b32.xlu0 %v4104, 64
    %v4107 = vpop.permute.xlu0 %4106
    %v4109 = vmul.f32 %v4088, %v4107
    %v4110 = vpack.c.bf16 %v4109, %v4109
    %v4112 = vrot.slane %v4110, 3
    %v4114 = vsel %vm173, %v4112, 0
    %4116 = vmatprep.subr.bf16.mxu0 %v3760
    %4117 = vmatpush1.bf16.msra.mxu0 %v3759
    %4118 = vmatprep.subr.bf16.mxu0 %v3762
    %4119 = vmatpush1.bf16.msra.mxu0 %v3761
    %4120 = vmatprep.subr.bf16.mxu0 %v3764
    %4121 = vmatpush1.bf16.msra.mxu0 %v3763
    %4122 = vmatprep.subr.bf16.mxu0 %v3766
    %4123 = vmatpush1.bf16.msra.mxu0 %v3765
    %4124 = vmatprep.subr.bf16.mxu0 0
    %4125 = vmatpush1.bf16.msra.mxu0 0
    %4126 = vmatprep.subr.bf16.mxu0 0
    %4127 = vmatpush1.bf16.msra.mxu0 0
    %4128 = vmatprep.subr.bf16.mxu0 0
    %4129 = vmatpush1.bf16.msra.mxu0 0
    %4130 = vmatprep.subr.bf16.mxu0 0
    %4131 = vmatpush1.bf16.msra.mxu0 0
    %4132 = vmatprep.subr.bf16.mxu0 0
    %4133 = vmatpush1.bf16.msra.mxu0 0
    %4134 = vmatprep.subr.bf16.mxu0 0
    %4135 = vmatpush1.bf16.msra.mxu0 0
    %4136 = vmatprep.subr.bf16.mxu0 0
    %4137 = vmatpush1.bf16.msra.mxu0 0
    %4138 = vmatprep.subr.bf16.mxu0 0
    %4139 = vmatpush1.bf16.msra.mxu0 0
    %4140 = vmatprep.subr.bf16.mxu0 0
    %4141 = vmatpush1.bf16.msra.mxu0 0
    %4142 = vmatprep.subr.bf16.mxu0 0
    %4143 = vmatpush1.bf16.msra.mxu0 0
    %4144 = vmatprep.subr.bf16.mxu0 0
    %4145 = vmatpush1.bf16.msra.mxu0 0
    %4146 = vmatprep.subr.bf16.mxu0 0
    %4147 = vmatpush1.bf16.msra.mxu0 0
    %4148 = vmatprep.mubr.bf16.mxu0 0
    %4149 = vmatmul.mubr.bf16.gmra.mrb[0].mxu0 %v4114
    %v4150 = vpop.f32.mrb[0].mxu0
    %v4151 = vadd.f32 0.0, %v4150
    %v4152 = vpop.f32.mrb[0].mxu0
    %v4153 = vadd.f32 0.0, %v4152
    %v4154 = vpop.f32.mrb[0].mxu0
    %v4155 = vpop.f32.mrb[0].mxu0
    %4156 = vdwg.mxu0
    %v4157 = vadd.f32 %v3733, %v4151
    %v4158 = vadd.f32 %v3734, %v4153
    %v4159 = vxor.u32 %v4157, 2147483648
    %v4160 = vxor.u32 %v4158, 2147483648
    %v4161 = vmul.f32 %v4159, 1.442695
    %v4162 = vpow.pop %v4161
    %v4163 = vmul.f32 %v4160, 1.442695
    %v4164 = vpow.pop %v4163
    %v4165 = vadd.f32 %v4162, 1.0
    %v4166 = vadd.f32 %v4164, 1.0
    %v4167 = vrcp.pop %v4165
    %v4168 = vmul.f32 1.0, %v4167
    %v4169 = vrcp.pop %v4166
    %v4170 = vmul.f32 1.0, %v4169
    %v4171 = vtanh.pop %v4158
    %v4173 = vrot.slane %v4103, 6
    %v4175 = vmul.f32 %v4168, %v4173
    %4177 = vrot.lane.b32.xlu0 %v4171, 64
    %v4178 = vpop.permute.xlu0 %4177
    %v4180 = vmul.f32 %v4168, %v4178
    %4182 = vrot.lane.b32.xlu0 %v4180, 64
    %v4183 = vpop.permute.xlu0 %4182
    %v4185 = vadd.f32 %v4175, %v4183
    %v4186 = vtanh.pop %v4185
    %4188 = vrot.lane.b32.xlu0 %v4186, 64
    %v4189 = vpop.permute.xlu0 %4188
    %v4191 = vmul.f32 %v4170, %v4189
    %v4192 = vpack.c.bf16 %v4191, %v4191
    %v4194 = vsel %vm173, %v4192, 0
    %4196 = vmatprep.subr.bf16.mxu0 %v3760
    %4197 = vmatpush1.bf16.msra.mxu0 %v3759
    %4198 = vmatprep.subr.bf16.mxu0 %v3762
    %4199 = vmatpush1.bf16.msra.mxu0 %v3761
    %4200 = vmatprep.subr.bf16.mxu0 %v3764
    %4201 = vmatpush1.bf16.msra.mxu0 %v3763
    %4202 = vmatprep.subr.bf16.mxu0 %v3766
    %4203 = vmatpush1.bf16.msra.mxu0 %v3765
    %4204 = vmatprep.subr.bf16.mxu0 0
    %4205 = vmatpush1.bf16.msra.mxu0 0
    %4206 = vmatprep.subr.bf16.mxu0 0
    %4207 = vmatpush1.bf16.msra.mxu0 0
    %4208 = vmatprep.subr.bf16.mxu0 0
    %4209 = vmatpush1.bf16.msra.mxu0 0
    %4210 = vmatprep.subr.bf16.mxu0 0
    %4211 = vmatpush1.bf16.msra.mxu0 0
    %4212 = vmatprep.subr.bf16.mxu0 0
    %4213 = vmatpush1.bf16.msra.mxu0 0
    %4214 = vmatprep.subr.bf16.mxu0 0
    %4215 = vmatpush1.bf16.msra.mxu0 0
    %4216 = vmatprep.subr.bf16.mxu0 0
    %4217 = vmatpush1.bf16.msra.mxu0 0
    %4218 = vmatprep.subr.bf16.mxu0 0
    %4219 = vmatpush1.bf16.msra.mxu0 0
    %4220 = vmatprep.subr.bf16.mxu0 0
    %4221 = vmatpush1.bf16.msra.mxu0 0
    %4222 = vmatprep.subr.bf16.mxu0 0
    %4223 = vmatpush1.bf16.msra.mxu0 0
    %4224 = vmatprep.subr.bf16.mxu0 0
    %4225 = vmatpush1.bf16.msra.mxu0 0
    %4226 = vmatprep.subr.bf16.mxu0 0
    %4227 = vmatpush1.bf16.msra.mxu0 0
    %4228 = vmatprep.mubr.bf16.mxu0 0
    %4229 = vmatmul.mubr.bf16.gmra.mrb[0].mxu0 %v4194
    %v4230 = vpop.f32.mrb[0].mxu0
    %v4231 = vadd.f32 0.0, %v4230
    %v4232 = vpop.f32.mrb[0].mxu0
    %v4233 = vadd.f32 0.0, %v4232
    %v4234 = vpop.f32.mrb[0].mxu0
    %v4235 = vpop.f32.mrb[0].mxu0
    %4236 = vdwg.mxu0
    %v4239 = vrot.slane %v4231, 6
    %v4240 = vrot.slane %v4233, 6
    %v4243 = vadd.f32 %v3733, %v4239
    %v4244 = vadd.f32 %v3734, %v4240
    %v4245 = vxor.u32 %v4243, 2147483648
    %v4246 = vxor.u32 %v4244, 2147483648
    %v4247 = vmul.f32 %v4245, 1.442695
    %v4248 = vpow.pop %v4247
    %v4249 = vmul.f32 %v4246, 1.442695
    %v4250 = vpow.pop %v4249
    %v4251 = vadd.f32 %v4248, 1.0
    %v4252 = vadd.f32 %v4250, 1.0
    %v4253 = vrcp.pop %v4251
    %v4254 = vmul.f32 1.0, %v4253
    %v4255 = vrcp.pop %v4252
    %v4256 = vmul.f32 1.0, %v4255
    %v4257 = vtanh.pop %v4244
    %v4259 = vrot.slane %v4185, 6
    %v4261 = vmul.f32 %v4254, %v4259
    %4263 = vrot.lane.b32.xlu0 %v4257, 64
    %v4264 = vpop.permute.xlu0 %4263
    %v4266 = vmul.f32 %v4254, %v4264
    %4268 = vrot.lane.b32.xlu0 %v4266, 64
    %v4269 = vpop.permute.xlu0 %4268
    %v4271 = vadd.f32 %v4261, %v4269
    %v4272 = vtanh.pop %v4271
    %4274 = vrot.lane.b32.xlu0 %v4272, 64
    %v4275 = vpop.permute.xlu0 %4274
    %v4277 = vmul.f32 %v4256, %v4275
    %v4278 = vpack.c.bf16 %v4277, %v4277
    %v4280 = vrot.slane %v4278, 1
    %v4282 = vsel %vm173, %v4280, 0
    %4284 = vmatprep.subr.bf16.mxu0 %v3760
    %4285 = vmatpush1.bf16.msra.mxu0 %v3759
    %4286 = vmatprep.subr.bf16.mxu0 %v3762
    %4287 = vmatpush1.bf16.msra.mxu0 %v3761
    %4288 = vmatprep.subr.bf16.mxu0 %v3764
    %4289 = vmatpush1.bf16.msra.mxu0 %v3763
    %4290 = vmatprep.subr.bf16.mxu0 %v3766
    %4291 = vmatpush1.bf16.msra.mxu0 %v3765
    %4292 = vmatprep.subr.bf16.mxu0 0
    %4293 = vmatpush1.bf16.msra.mxu0 0
    %4294 = vmatprep.subr.bf16.mxu0 0
    %4295 = vmatpush1.bf16.msra.mxu0 0
    %4296 = vmatprep.subr.bf16.mxu0 0
    %4297 = vmatpush1.bf16.msra.mxu0 0
    %4298 = vmatprep.subr.bf16.mxu0 0
    %4299 = vmatpush1.bf16.msra.mxu0 0
    %4300 = vmatprep.subr.bf16.mxu0 0
    %4301 = vmatpush1.bf16.msra.mxu0 0
    %4302 = vmatprep.subr.bf16.mxu0 0
    %4303 = vmatpush1.bf16.msra.mxu0 0
    %4304 = vmatprep.subr.bf16.mxu0 0
    %4305 = vmatpush1.bf16.msra.mxu0 0
    %4306 = vmatprep.subr.bf16.mxu0 0
    %4307 = vmatpush1.bf16.msra.mxu0 0
    %4308 = vmatprep.subr.bf16.mxu0 0
    %4309 = vmatpush1.bf16.msra.mxu0 0
    %4310 = vmatprep.subr.bf16.mxu0 0
    %4311 = vmatpush1.bf16.msra.mxu0 0
    %4312 = vmatprep.subr.bf16.mxu0 0
    %4313 = vmatpush1.bf16.msra.mxu0 0
    %4314 = vmatprep.subr.bf16.mxu0 0
    %4315 = vmatpush1.bf16.msra.mxu0 0
    %4316 = vmatprep.mubr.bf16.mxu0 0
    %4317 = vmatmul.mubr.bf16.gmra.mrb[0].mxu0 %v4282
    %v4318 = vpop.f32.mrb[0].mxu0
    %v4319 = vadd.f32 0.0, %v4318
    %v4320 = vpop.f32.mrb[0].mxu0
    %v4321 = vadd.f32 0.0, %v4320
    %v4322 = vpop.f32.mrb[0].mxu0
    %v4323 = vpop.f32.mrb[0].mxu0
    %4324 = vdwg.mxu0
    %v4327 = vrot.slane %v4319, 4
    %v4328 = vrot.slane %v4321, 4
    %v4331 = vadd.f32 %v3733, %v4327
    %v4332 = vadd.f32 %v3734, %v4328
    %v4333 = vxor.u32 %v4331, 2147483648
    %v4334 = vxor.u32 %v4332, 2147483648
    %v4335 = vmul.f32 %v4333, 1.442695
    %v4336 = vpow.pop %v4335
    %v4337 = vmul.f32 %v4334, 1.442695
    %v4338 = vpow.pop %v4337
    %v4339 = vadd.f32 %v4336, 1.0
    %v4340 = vadd.f32 %v4338, 1.0
    %v4341 = vrcp.pop %v4339
    %v4342 = vmul.f32 1.0, %v4341
    %v4343 = vrcp.pop %v4340
    %v4344 = vmul.f32 1.0, %v4343
    %v4345 = vtanh.pop %v4332
    %v4347 = vrot.slane %v4271, 6
    %v4349 = vmul.f32 %v4342, %v4347
    %4351 = vrot.lane.b32.xlu0 %v4345, 64
    %v4352 = vpop.permute.xlu0 %4351
    %v4354 = vmul.f32 %v4342, %v4352
    %4356 = vrot.lane.b32.xlu0 %v4354, 64
    %v4357 = vpop.permute.xlu0 %4356
    %v4359 = vadd.f32 %v4349, %v4357
    %v4360 = vtanh.pop %v4359
    %4362 = vrot.lane.b32.xlu0 %v4360, 64
    %v4363 = vpop.permute.xlu0 %4362
    %v4365 = vmul.f32 %v4344, %v4363
    %v4366 = vpack.c.bf16 %v4365, %v4365
    %v4368 = vrot.slane %v4366, 2
    %v4370 = vsel %vm173, %v4368, 0
    %4372 = vmatprep.subr.bf16.mxu0 %v3760
    %4373 = vmatpush1.bf16.msra.mxu0 %v3759
    %4374 = vmatprep.subr.bf16.mxu0 %v3762
    %4375 = vmatpush1.bf16.msra.mxu0 %v3761
    %4376 = vmatprep.subr.bf16.mxu0 %v3764
    %4377 = vmatpush1.bf16.msra.mxu0 %v3763
    %4378 = vmatprep.subr.bf16.mxu0 %v3766
    %4379 = vmatpush1.bf16.msra.mxu0 %v3765
    %4380 = vmatprep.subr.bf16.mxu0 0
    %4381 = vmatpush1.bf16.msra.mxu0 0
    %4382 = vmatprep.subr.bf16.mxu0 0
    %4383 = vmatpush1.bf16.msra.mxu0 0
    %4384 = vmatprep.subr.bf16.mxu0 0
    %4385 = vmatpush1.bf16.msra.mxu0 0
    %4386 = vmatprep.subr.bf16.mxu0 0
    %4387 = vmatpush1.bf16.msra.mxu0 0
    %4388 = vmatprep.subr.bf16.mxu0 0
    %4389 = vmatpush1.bf16.msra.mxu0 0
    %4390 = vmatprep.subr.bf16.mxu0 0
    %4391 = vmatpush1.bf16.msra.mxu0 0
    %4392 = vmatprep.subr.bf16.mxu0 0
    %4393 = vmatpush1.bf16.msra.mxu0 0
    %4394 = vmatprep.subr.bf16.mxu0 0
    %4395 = vmatpush1.bf16.msra.mxu0 0
    %4396 = vmatprep.subr.bf16.mxu0 0
    %4397 = vmatpush1.bf16.msra.mxu0 0
    %4398 = vmatprep.subr.bf16.mxu0 0
    %4399 = vmatpush1.bf16.msra.mxu0 0
    %4400 = vmatprep.subr.bf16.mxu0 0
    %4401 = vmatpush1.bf16.msra.mxu0 0
    %4402 = vmatprep.subr.bf16.mxu0 0
    %4403 = vmatpush1.bf16.msra.mxu0 0
    %4404 = vmatprep.mubr.bf16.mxu0 0
    %4405 = vmatmul.mubr.bf16.gmra.mrb[0].mxu0 %v4370
    %v4406 = vpop.f32.mrb[0].mxu0
    %v4407 = vadd.f32 0.0, %v4406
    %v4408 = vpop.f32.mrb[0].mxu0
    %v4409 = vadd.f32 0.0, %v4408
    %v4410 = vpop.f32.mrb[0].mxu0
    %v4411 = vpop.f32.mrb[0].mxu0
    %4412 = vdwg.mxu0
    %v4415 = vrot.slane %v4407, 2
    %v4416 = vrot.slane %v4409, 2
    %v4419 = vadd.f32 %v3733, %v4415
    %v4420 = vadd.f32 %v3734, %v4416
    %v4421 = vxor.u32 %v4419, 2147483648
    %v4422 = vxor.u32 %v4420, 2147483648
    %v4423 = vmul.f32 %v4421, 1.442695
    %v4424 = vpow.pop %v4423
    %v4425 = vmul.f32 %v4422, 1.442695
    %v4426 = vpow.pop %v4425
    %v4427 = vadd.f32 %v4424, 1.0
    %v4428 = vadd.f32 %v4426, 1.0
    %v4429 = vrcp.pop %v4427
    %v4430 = vmul.f32 1.0, %v4429
    %v4431 = vrcp.pop %v4428
    %v4432 = vmul.f32 1.0, %v4431
    %v4433 = vtanh.pop %v4420
    %v4435 = vrot.slane %v4359, 6
    %v4437 = vmul.f32 %v4430, %v4435
    %4439 = vrot.lane.b32.xlu0 %v4433, 64
    %v4440 = vpop.permute.xlu0 %4439
    %v4442 = vmul.f32 %v4430, %v4440
    %4444 = vrot.lane.b32.xlu0 %v4442, 64
    %v4445 = vpop.permute.xlu0 %4444
    %v4447 = vadd.f32 %v4437, %v4445
    %v4448 = vtanh.pop %v4447
    %4450 = vrot.lane.b32.xlu0 %v4448, 64
    %v4451 = vpop.permute.xlu0 %4450
    %v4453 = vmul.f32 %v4432, %v4451
    %v4454 = vsel %vm2429, %v3847, %v3933
    %v4455 = vsel %vm2431, %v4454, %v4021
    %v4456 = vsel %vm2433, %v4455, %v4109
    %v4457 = vsel %vm2429, %v4191, %v4277
    %v4458 = vsel %vm2431, %v4457, %v4365
    %v4459 = vsel %vm2433, %v4458, %v4453
    %v4460 = vmul.f32 %v1676, %v4459
    %4461 = vmatprep.subr.mxu0 0.0
    %4462 = vmatpush1.msra.mxu0 %v4456
    %4463 = vmatprep.subr.mxu0 0.0
    %4464 = vmatpush1.msra.mxu0 %v4459
    %4465 = vmatprep.subr.mxu0 0.0
    %4466 = vmatpush1.msra.mxu0 0.0
    %4467 = vmatprep.subr.mxu0 0.0
    %4468 = vmatpush1.msra.mxu0 0.0
    %4469 = vmatprep.subr.mxu0 0.0
    %4470 = vmatpush1.msra.mxu0 0.0
    %4471 = vmatprep.subr.mxu0 0.0
    %4472 = vmatpush1.msra.mxu0 0.0
    %4473 = vmatprep.subr.mxu0 0.0
    %4474 = vmatpush1.msra.mxu0 0.0
    %4475 = vmatprep.subr.mxu0 0.0
    %4476 = vmatpush1.msra.mxu0 0.0
    %4477 = vmatprep.subr.mxu0 0.0
    %4478 = vmatpush1.msra.mxu0 0.0
    %4479 = vmatprep.subr.mxu0 0.0
    %4480 = vmatpush1.msra.mxu0 0.0
    %4481 = vmatprep.subr.mxu0 0.0
    %4482 = vmatpush1.msra.mxu0 0.0
    %4483 = vmatprep.subr.mxu0 0.0
    %4484 = vmatpush1.msra.mxu0 0.0
    %4485 = vmatprep.subr.mxu0 0.0
    %4486 = vmatpush1.msra.mxu0 0.0
    %4487 = vmatprep.subr.mxu0 0.0
    %4488 = vmatpush1.msra.mxu0 0.0
    %4489 = vmatprep.subr.mxu0 0.0
    %4490 = vmatpush1.msra.mxu0 0.0
    %4491 = vmatprep.subr.mxu0 0.0
    %4492 = vmatpush1.msra.mxu0 0.0
    %4493 = vmatprep.subr.mxu0 0.0
    %4494 = vmatpush1.msra.mxu0 0.0
    %4495 = vmatprep.subr.mxu0 0.0
    %4496 = vmatpush1.msra.mxu0 0.0
    %4497 = vmatprep.subr.mxu0 0.0
    %4498 = vmatpush1.msra.mxu0 0.0
    %4499 = vmatprep.subr.mxu0 0.0
    %4500 = vmatpush1.msra.mxu0 0.0
    %4501 = vmatprep.subr.mxu0 0.0
    %4502 = vmatpush1.msra.mxu0 0.0
    %4503 = vmatprep.subr.mxu0 0.0
    %4504 = vmatpush1.msra.mxu0 0.0
    %4505 = vmatprep.subr.mxu0 0.0
    %4506 = vmatpush1.msra.mxu0 0.0
    %4507 = vmatprep.subr.mxu0 0.0
    %4508 = vmatpush1.msra.mxu0 0.0
    %4509 = vmatprep.subr.mxu0 0.0
    %4510 = vmatpush1.msra.mxu0 0.0
    %4511 = vmatprep.subr.mxu0 0.0
    %4512 = vmatpush1.msra.mxu0 0.0
    %4513 = vmatprep.subr.mxu0 0.0
    %4514 = vmatpush1.msra.mxu0 0.0
    %4515 = vmatprep.subr.mxu0 0.0
    %4516 = vmatpush1.msra.mxu0 0.0
    %4517 = vmatprep.subr.mxu0 0.0
    %4518 = vmatpush1.msra.mxu0 0.0
    %4519 = vmatprep.subr.mxu0 0.0
    %4520 = vmatpush1.msra.mxu0 0.0
    %4521 = vmatprep.subr.mxu0 0.0
    %4522 = vmatpush1.msra.mxu0 0.0
    %4523 = vmatprep.subr.mxu0 0.0
    %4524 = vmatpush1.msra.mxu0 0.0
    %4525 = vmatprep.mubr.f32.mxu0 0.0
    %4526 = vmatmul.mubr.f32.gmra.mrb[0].mxu0 %v1591
    %v4527 = vpop.f32.mrb[0].mxu0
    %v4528 = vpop.f32.mrb[0].mxu0
    %4529 = vmatprep.mubr.f32.mxu0 0.0
    %4530 = vmatmul.mubr.f32.gmra.mrb[0].mxu0 %v1593
    %v4531 = vpop.f32.mrb[0].mxu0
    %v4532 = vadd.f32 0.0, %v4531
    %v4533 = vpop.f32.mrb[0].mxu0
    %4534 = vdwg.mxu0
    %v4535 = vmul.f32 %v1692, %v4532
    %v4536 = vadd.f32 %v4460, %v4535
    %v4537 = vld [vmem:[#allocation2 + $0x390] sm:$0xf]
    %v4538 = vld [vmem:[#allocation2 + $0x398] sm:$0xf]
    %v4539 = vpack.c.bf16 %v45, %v45
    %v4540 = vld [vmem:[#allocation2 + $0x3a0] sm:$0xf]
    %v4541 = vld [vmem:[#allocation2 + $0x3a8] sm:$0xf]
    %v4542 = vld [vmem:[#allocation2 + $0x3b0] sm:$0xf]
    %v4543 = vld [vmem:[#allocation2 + $0x3b8] sm:$0xf]
    %v4544 = vld [vmem:[#allocation2 + $0x3c0] sm:$0xf]
    %v4545 = vld [vmem:[#allocation2 + $0x3c8] sm:$0xf]
    %v4546 = vld [vmem:[#allocation2 + $0x3d0] sm:$0xf]
    %v4547 = vld [vmem:[#allocation2 + $0x3d8] sm:$0xf]
    %v4548 = vpack.c.bf16 %v4536, %v4536
    %v4550 = vrot.slane %v4548, 3
    %v4559 = vunpack.c.l.b16 %v4540
    %v4560 = vunpack.c.l.b16 %v4541
    %v4561 = vunpack.c.l.b16 %v4542
    %v4562 = vunpack.c.l.b16 %v4543
    %v4563 = vunpack.c.l.b16 %v4544
    %v4564 = vunpack.c.l.b16 %v4545
    %v4565 = vunpack.c.l.b16 %v4546
    %v4566 = vunpack.c.l.b16 %v4547
    %v4567 = vpack.c.b16 %v4560, %v4559
    %v4568 = vpack.c.b16 %v4562, %v4561
    %v4569 = vpack.c.b16 %v4564, %v4563
    %v4570 = vpack.c.b16 %v4566, %v4565
    %v4576 = vsel %vm173, %v4550, 0
    %4578 = vmatprep.subr.bf16.mxu0 0
    %4579 = vmatpush1.bf16.msra.mxu0 %v4567
    %4580 = vmatprep.subr.bf16.mxu0 0
    %4581 = vmatpush1.bf16.msra.mxu0 %v4568
    %4582 = vmatprep.subr.bf16.mxu0 0
    %4583 = vmatpush1.bf16.msra.mxu0 %v4569
    %4584 = vmatprep.subr.bf16.mxu0 0
    %4585 = vmatpush1.bf16.msra.mxu0 %v4570
    %4586 = vmatprep.subr.bf16.mxu0 0
    %4587 = vmatpush1.bf16.msra.mxu0 0
    %4588 = vmatprep.subr.bf16.mxu0 0
    %4589 = vmatpush1.bf16.msra.mxu0 0
    %4590 = vmatprep.subr.bf16.mxu0 0
    %4591 = vmatpush1.bf16.msra.mxu0 0
    %4592 = vmatprep.subr.bf16.mxu0 0
    %4593 = vmatpush1.bf16.msra.mxu0 0
    %4594 = vmatprep.subr.bf16.mxu0 0
    %4595 = vmatpush1.bf16.msra.mxu0 0
    %4596 = vmatprep.subr.bf16.mxu0 0
    %4597 = vmatpush1.bf16.msra.mxu0 0
    %4598 = vmatprep.subr.bf16.mxu0 0
    %4599 = vmatpush1.bf16.msra.mxu0 0
    %4600 = vmatprep.subr.bf16.mxu0 0
    %4601 = vmatpush1.bf16.msra.mxu0 0
    %4602 = vmatprep.subr.bf16.mxu0 0
    %4603 = vmatpush1.bf16.msra.mxu0 0
    %4604 = vmatprep.subr.bf16.mxu0 0
    %4605 = vmatpush1.bf16.msra.mxu0 0
    %4606 = vmatprep.subr.bf16.mxu0 0
    %4607 = vmatpush1.bf16.msra.mxu0 0
    %4608 = vmatprep.subr.bf16.mxu0 0
    %4609 = vmatpush1.bf16.msra.mxu0 0
    %4610 = vmatprep.mubr.bf16.mxu0 0
    %4611 = vmatmul.mubr.bf16.gmra.mrb[0].mxu0 %v4576
    %v4612 = vpop.f32.mrb[0].mxu0
    %v4613 = vadd.f32 0.0, %v4612
    %v4614 = vpop.f32.mrb[0].mxu0
    %v4615 = vpop.f32.mrb[0].mxu0
    %v4616 = vpop.f32.mrb[0].mxu0
    %4617 = vdwg.mxu0
    %v4620 = vunpack.c.l.b16 %v4537
    %v4621 = vunpack.c.l.b16 %v4538
    %v4622 = vpack.c.b16 %v4621, %v4620
    %v4625 = vsel %vm57, %v4539, 0
    %4627 = vmatprep.subr.bf16.mxu0 0
    %4628 = vmatpush1.bf16.msra.mxu0 %v4622
    %4629 = vmatprep.subr.bf16.mxu0 0
    %4630 = vmatpush1.bf16.msra.mxu0 0
    %4631 = vmatprep.subr.bf16.mxu0 0
    %4632 = vmatpush1.bf16.msra.mxu0 0
    %4633 = vmatprep.subr.bf16.mxu0 0
    %4634 = vmatpush1.bf16.msra.mxu0 0
    %4635 = vmatprep.subr.bf16.mxu0 0
    %4636 = vmatpush1.bf16.msra.mxu0 0
    %4637 = vmatprep.subr.bf16.mxu0 0
    %4638 = vmatpush1.bf16.msra.mxu0 0
    %4639 = vmatprep.subr.bf16.mxu0 0
    %4640 = vmatpush1.bf16.msra.mxu0 0
    %4641 = vmatprep.subr.bf16.mxu0 0
    %4642 = vmatpush1.bf16.msra.mxu0 0
    %4643 = vmatprep.subr.bf16.mxu0 0
    %4644 = vmatpush1.bf16.msra.mxu0 0
    %4645 = vmatprep.subr.bf16.mxu0 0
    %4646 = vmatpush1.bf16.msra.mxu0 0
    %4647 = vmatprep.subr.bf16.mxu0 0
    %4648 = vmatpush1.bf16.msra.mxu0 0
    %4649 = vmatprep.subr.bf16.mxu0 0
    %4650 = vmatpush1.bf16.msra.mxu0 0
    %4651 = vmatprep.subr.bf16.mxu0 0
    %4652 = vmatpush1.bf16.msra.mxu0 0
    %4653 = vmatprep.subr.bf16.mxu0 0
    %4654 = vmatpush1.bf16.msra.mxu0 0
    %4655 = vmatprep.subr.bf16.mxu0 0
    %4656 = vmatpush1.bf16.msra.mxu0 0
    %4657 = vmatprep.subr.bf16.mxu0 0
    %4658 = vmatpush1.bf16.msra.mxu0 0
    %4659 = vmatprep.mubr.bf16.mxu0 0
    %4660 = vmatmul.mubr.bf16.gmra.mrb[0].mxu0 %v4625
    %v4661 = vpop.f32.mrb[0].mxu0
    %v4662 = vadd.f32 %v4613, %v4661
    %v4663 = vpop.f32.mrb[0].mxu0
    %v4664 = vpop.f32.mrb[0].mxu0
    %v4665 = vpop.f32.mrb[0].mxu0
    %4666 = vdwg.mxu0
    %v4667 = vld [vmem:[#allocation4 + $0x44] ss:$0 sm:$0xff]
    %v4668 = vadd.f32 %v4662, %v4667
    %v4669 = vld [vmem:[#allocation4 + $0x45] ss:$0 sm:$0xff]
    %v4670 = vmul.f32 %v4668, %v4669
    %vm4671 = vcmask 517120
    %v4672 = vsel %vm4671, %v4670, 0.0
    %4673 = vadd.xlane.f32.xlu0 %v4672
    %v4674 = vpop.xlane.xlu0 %4673
    %v4675 = vld [vmem:[#allocation4 + $0x46] ss:$0 sm:$0xff]
    %v4676 = vadd.f32 %v4674, %v4675
    %vm4677 = vcmask 1024
    %4678 = vst.msk [vmem:[%s3] sm:$0x3] %vm4677, %v4676
    // Predicated region
    $region22: #{forward_pallas.1} parent=1 // pred_check
      _
    $region23: #{forward_pallas.1} parent=1 // pred_check_branch
      %4680 = sbr.rel (0) target = $region25
    $region24: #{forward_pallas.1} parent=1 // pred_region
      _
    $region25: #{forward_pallas.1} parent=1 // pred_fallthru
      _
    // Predicated region
    $region26: #{forward_pallas.1} parent=1 // pred_check
      _
    $region27: #{forward_pallas.1} parent=1 // pred_check_branch
      %4682 = sbr.rel (0) target = $region29
    $region28: #{forward_pallas.1} parent=1 // pred_region
      _
    $region29: #{forward_pallas.1} parent=1 // pred_fallthru
      _
    %4683 = vsyncpa [#allocation3], 1
    %4684 = vsyncpa [#allocation5], 1

</llo_original>
